<compile_context>
chip_gen: v7x
topology: tpu7x:2x2x1
jax: 0.10.0
libtpu: 0.0.40
codegen_flags: <defaults>
</compile_context>

<pallas_src>
import math
import functools

import jax
import jax.numpy as jnp
from jax.experimental import pallas as pl
from jax.experimental.pallas import tpu as pltpu

EPS = float(jnp.finfo(jnp.float32).eps)  # nn.RMSNorm default eps for f32


def _rmsnorm(v, w):
    ms = jnp.mean(v * v, axis=-1, keepdims=True)
    return v * jax.lax.rsqrt(ms + EPS) * w


def _mish(x):
    # softplus with PyTorch's threshold=20 for numerical parity
    sp = jnp.where(x > 20.0, x, jnp.log1p(jnp.exp(jnp.minimum(x, 20.0))))
    return x * jnp.tanh(sp)


def _pick_tile(n, pref):
    """Largest tile <= pref (multiple of 8) dividing n, else the full axis."""
    if n <= pref:
        return n
    for t in range(pref, 7, -8):
        if n % t == 0:
            return t
    return n


@functools.lru_cache(maxsize=1)
def _hw_defaults():
    """(vmem_limit_bytes, q_tile_pref, kv_tile_pref) derived from the actual TPU generation."""
    try:
        cap = int(pltpu.get_tpu_info().vmem_capacity_bytes)
    except Exception:
        cap = None
    try:
        kind = jax.devices()[0].device_kind.lower()
    except Exception:
        kind = ""
    if cap is None:
        # conservative fallback: only assume 128 MiB when we can tell it's v5e/v6e
        cap = 128 * 1024 * 1024 if ("v5" in kind or "v6" in kind) else 64 * 1024 * 1024
    vmem_limit = int(cap * 3 // 4)  # leave headroom for compiler-internal scratch
    if "v5" in kind:
        tq_pref, tk_pref = 256, 256      # bound (TQ,TK) f32 score tiles (64-vreg / 1 vst slot)
    elif cap <= 64 * 1024 * 1024:
        tq_pref, tk_pref = 256, 256      # v7x: 64 MiB VMEM per TensorCore
    else:
        tq_pref, tk_pref = 256, 512      # v6e: larger kv stream for HBM roofline
    return vmem_limit, tq_pref, tk_pref


# --------------------------------------------------------------------------------------
# Kernel 1: QKV projection.  grid = (batch, seq tile).
#   RMSNorm(x) -> Q (pre-scaled by 1/sqrt(Dh)), K, V   (bf16 outputs, f32 accumulation)
# --------------------------------------------------------------------------------------
def qkv_proj_kernel(x_ref, rms1_ref, wq_ref, bq_ref, wk_ref, bk_ref, wv_ref, bv_ref,
                    q_ref, k_ref, v_ref, *, scale, compute_dtype):
    xv = x_ref[0].astype(jnp.float32)                            # (TP, E)
    nx = _rmsnorm(xv, rms1_ref[0]).astype(compute_dtype)
    q = jnp.dot(nx, wq_ref[...], preferred_element_type=jnp.float32) + bq_ref[0]
    k = jnp.dot(nx, wk_ref[...], preferred_element_type=jnp.float32) + bk_ref[0]
    v = jnp.dot(nx, wv_ref[...], preferred_element_type=jnp.float32) + bv_ref[0]
    q_ref[0] = (q * scale).astype(q_ref.dtype)                   # scale folded in once
    k_ref[0] = k.astype(k_ref.dtype)
    v_ref[0] = v.astype(v_ref.dtype)


# --------------------------------------------------------------------------------------
# Kernel 2: flash attention + output projection + residual.  grid = (batch, q tile, kv tile).
#   ki == 0     : reset online-softmax state.
#   every ki    : per-head flash update from precomputed bf16 K/V tiles.
#   ki == last  : per-head output projection (accumulated, no lane concat), +bias, +residual.
# --------------------------------------------------------------------------------------
def _flash_head_update(qh, kh, vh, m_prev, l_prev, acc_prev, compute_dtype):
    s = jax.lax.dot_general(qh, kh, (((1,), (1,)), ((), ())),
                            preferred_element_type=jnp.float32)          # (TQ, TK)
    m_new = jnp.maximum(m_prev, jnp.max(s, axis=-1, keepdims=True))
    alpha = jnp.exp(m_prev - m_new)
    # TODO(synk): bf16 exp here on v6e/v7x if EUP becomes the binding slot (not on v5e).
    p = jnp.exp(s - m_new)
    l_new = alpha * l_prev + jnp.sum(p, axis=-1, keepdims=True)
    acc_new = alpha * acc_prev + jnp.dot(p.astype(compute_dtype), vh,
                                         preferred_element_type=jnp.float32)
    return m_new, l_new, acc_new


def flash_attn_kernel(x_ref, q_ref, k_ref, v_ref, wo_ref, bo_ref, o_ref,
                      m_scr, l_scr, acc_scr, *, num_heads, head_dim, compute_dtype):
    ki = pl.program_id(2)
    aligned = (head_dim % 128 == 0) and (num_heads > 1)

    @pl.when(ki == 0)
    def _init():
        m_scr[...] = jnp.full_like(m_scr, -jnp.inf)
        l_scr[...] = jnp.zeros_like(l_scr)
        acc_scr[...] = jnp.zeros_like(acc_scr)

    if aligned:
        # Production path: fori_loop bounds vreg live ranges per head; 128-aligned lane slices.
        def body(h, carry):
            off = pl.multiple_of(h * head_dim, 128)
            sl = pl.ds(off, head_dim)
            m_new, l_new, acc_new = _flash_head_update(
                q_ref[0, :, sl], k_ref[0, :, sl], v_ref[0, :, sl],
                m_scr[h], l_scr[h], acc_scr[h], compute_dtype)
            m_scr[h] = m_new
            l_scr[h] = l_new
            acc_scr[h] = acc_new
            return carry
        jax.lax.fori_loop(0, num_heads, body, 0)
    else:
        # Small / unaligned head_dim (toy demo): static slices, unrolled.
        for h in range(num_heads):
            lo = h * head_dim
            sl = slice(lo, lo + head_dim)
            m_new, l_new, acc_new = _flash_head_update(
                q_ref[0, :, sl], k_ref[0, :, sl], v_ref[0, :, sl],
                m_scr[h], l_scr[h], acc_scr[h], compute_dtype)
            m_scr[h] = m_new
            l_scr[h] = l_new
            acc_scr[h] = acc_new

    @pl.when(ki == pl.num_programs(2) - 1)
    def _finalize():
        tq = o_ref.shape[1]
        e = o_ref.shape[2]
        # Output projection accumulated per head: no concatenate along the lane axis.
        if aligned:
            def out_body(h, attn):
                ctx = acc_scr[h] * pl.reciprocal(l_scr[h], approx=True)   # (TQ, Dh) f32
                return attn + jnp.dot(ctx.astype(compute_dtype), wo_ref[h],
                                      preferred_element_type=jnp.float32)
            attn = jax.lax.fori_loop(0, num_heads, out_body,
                                     jnp.zeros((tq, e), jnp.float32))
        else:
            attn = jnp.zeros((tq, e), jnp.float32)
            for h in range(num_heads):
                ctx = acc_scr[h] * pl.reciprocal(l_scr[h], approx=True)
                attn = attn + jnp.dot(ctx.astype(compute_dtype), wo_ref[h],
                                      preferred_element_type=jnp.float32)
        x1 = x_ref[0].astype(jnp.float32) + attn + bo_ref[0]              # residual 1
        o_ref[0] = x1.astype(o_ref.dtype)


# --------------------------------------------------------------------------------------
# Kernel 3: RMSNorm -> MishGLU -> residual.  grid = (batch, seq tile).
# --------------------------------------------------------------------------------------
def mlp_glu_kernel(x_ref, rms2_ref, w1a_ref, b1a_ref, w1b_ref, b1b_ref, w2_ref, b2_ref,
                   o_ref, *, compute_dtype):
    xv = x_ref[0].astype(jnp.float32)                              # (TM, E)
    nx = _rmsnorm(xv, rms2_ref[0]).astype(compute_dtype)
    g1 = jnp.dot(nx, w1a_ref[...], preferred_element_type=jnp.float32) + b1a_ref[0]
    g2 = jnp.dot(nx, w1b_ref[...], preferred_element_type=jnp.float32) + b1b_ref[0]
    a = (_mish(g1) * g2).astype(compute_dtype)
    mlp = jnp.dot(a, w2_ref[...], preferred_element_type=jnp.float32) + b2_ref[0]
    o_ref[0] = (xv + mlp).astype(o_ref.dtype)                     # residual 2


# --------------------------------------------------------------------------------------
# One block = 3 pallas_calls (QKV projection, flash attention, MishGLU MLP).
# --------------------------------------------------------------------------------------
def transformer_block(x, pp, *, head_dim, q_tile=None, kv_tile=None, proj_tile=None,
                      compute_dtype=jnp.bfloat16):
    B, L, E = x.shape
    NH = E // head_dim
    vmem_limit, tq_pref, tk_pref = _hw_defaults()

    TQ = q_tile or _pick_tile(L, tq_pref)
    TK = kv_tile or _pick_tile(L, tk_pref)
    TP = proj_tile or _pick_tile(L, 256)
    # v7x megacore balance: keep >= 2 units of parallel (batch x q-tile) work.
    if B * (L // TQ) < 2 and TQ % 2 == 0 and TQ // 2 >= 8 and L % (TQ // 2) == 0:
        TQ = TQ // 2
    # TODO(synk): add in-kernel masking for L not divisible by the tile sizes.
    assert L % TQ == 0 and L % TK == 0 and L % TP == 0, \
        "sequence length must be divisible by tile sizes"

    scale = 1.0 / math.sqrt(head_dim)

    # ---- 1. QKV projection (RMSNorm + in_proj), bf16 outputs -------------------------
    qkv_kern = functools.partial(qkv_proj_kernel, scale=scale, compute_dtype=compute_dtype)
    q, k, v = pl.pallas_call(
        qkv_kern,
        out_shape=(jax.ShapeDtypeStruct((B, L, E), compute_dtype),) * 3,
        grid=(B, L // TP),
        in_specs=[
            pl.BlockSpec((1, TP, E), lambda b, i: (b, i, 0)),
            pl.BlockSpec(pp['rms1_w'].shape, lambda b, i: (0, 0)),
            pl.BlockSpec(pp['wq'].shape, lambda b, i: (0, 0)),
            pl.BlockSpec(pp['bq'].shape, lambda b, i: (0, 0)),
            pl.BlockSpec(pp['wk'].shape, lambda b, i: (0, 0)),
            pl.BlockSpec(pp['bk'].shape, lambda b, i: (0, 0)),
            pl.BlockSpec(pp['wv'].shape, lambda b, i: (0, 0)),
            pl.BlockSpec(pp['bv'].shape, lambda b, i: (0, 0)),
        ],
        out_specs=(pl.BlockSpec((1, TP, E), lambda b, i: (b, i, 0)),) * 3,
        compiler_params=pltpu.CompilerParams(
            dimension_semantics=("parallel", "parallel"),
            vmem_limit_bytes=vmem_limit),
    )(x, pp['rms1_w'], pp['wq'], pp['bq'], pp['wk'], pp['bk'], pp['wv'], pp['bv'])

    # ---- 2. Flash attention over precomputed K/V + out projection + residual --------
    flash_kern = functools.partial(flash_attn_kernel, num_heads=NH, head_dim=head_dim,
                                   compute_dtype=compute_dtype)
    x1 = pl.pallas_call(
        flash_kern,
        out_shape=jax.ShapeDtypeStruct((B, L, E), x.dtype),
        grid=(B, L // TQ, L // TK),
        in_specs=[
            pl.BlockSpec((1, TQ, E), lambda b, qi, ki: (b, qi, 0)),   # x  (residual)
            pl.BlockSpec((1, TQ, E), lambda b, qi, ki: (b, qi, 0)),   # q  (pre-scaled bf16)
            pl.BlockSpec((1, TK, E), lambda b, qi, ki: (b, ki, 0)),   # k  (bf16 stream)
            pl.BlockSpec((1, TK, E), lambda b, qi, ki: (b, ki, 0)),   # v  (bf16 stream)
            pl.BlockSpec(pp['wo'].shape, lambda b, qi, ki: (0, 0, 0)),
            pl.BlockSpec(pp['bo'].shape, lambda b, qi, ki: (0, 0)),
        ],
        out_specs=pl.BlockSpec((1, TQ, E), lambda b, qi, ki: (b, qi, 0)),
        scratch_shapes=[
            pltpu.VMEM((NH, TQ, 1), jnp.float32),          # running max  (per head)
            pltpu.VMEM((NH, TQ, 1), jnp.float32),          # running sum  (per head)
            pltpu.VMEM((NH, TQ, head_dim), jnp.float32),   # running context (per head)
        ],
        compiler_params=pltpu.CompilerParams(
            dimension_semantics=("parallel", "parallel", "arbitrary"),
            vmem_limit_bytes=vmem_limit),
    )(x, q, k, v, pp['wo'], pp['bo'])

    # ---- 3. RMSNorm + MishGLU + residual (own pallas_call -> own weight residency) ---
    mlp_kern = functools.partial(mlp_glu_kernel, compute_dtype=compute_dtype)
    TM = _pick_tile(L, 256)
    out = pl.pallas_call(
        mlp_kern,
        out_shape=jax.ShapeDtypeStruct((B, L, E), x.dtype),
        grid=(B, L // TM),
        in_specs=[
            pl.BlockSpec((1, TM, E), lambda b, i: (b, i, 0)),
            pl.BlockSpec(pp['rms2_w'].shape, lambda b, i: (0, 0)),
            pl.BlockSpec(pp['w1a'].shape, lambda b, i: (0, 0)),
            pl.BlockSpec(pp['b1a'].shape, lambda b, i: (0, 0)),
            pl.BlockSpec(pp['w1b'].shape, lambda b, i: (0, 0)),
            pl.BlockSpec(pp['b1b'].shape, lambda b, i: (0, 0)),
            pl.BlockSpec(pp['w2'].shape, lambda b, i: (0, 0)),
            pl.BlockSpec(pp['b2'].shape, lambda b, i: (0, 0)),
        ],
        out_specs=pl.BlockSpec((1, TM, E), lambda b, i: (b, i, 0)),
        compiler_params=pltpu.CompilerParams(
            dimension_semantics=("parallel", "parallel"),
            vmem_limit_bytes=vmem_limit),
    )(x1, pp['rms2_w'], pp['w1a'], pp['b1a'], pp['w1b'], pp['b1b'], pp['w2'], pp['b2'])
    return out


def transformer_layer(x, prepared_params, *, head_dim, act_dtype=jnp.bfloat16):
    # TODO(synk): amortize per-layer launch + weight DMA via cross-call semaphore/VMEM
    # weight prefetch (P10) or a stacked-weights layer grid axis.
    orig_dtype = x.dtype
    y = x.astype(act_dtype)                 # bf16 inter-layer activation stream
    for pp in prepared_params:
        y = transformer_block(y, pp, head_dim=head_dim)
    return y.astype(orig_dtype)


# --------------------------------------------------------------------------------------
# Parameter preparation (done ONCE, outside the jitted forward): transpose, split per
# projection / GLU half, reshape W_out per head, cast matmul weights to bf16.
# --------------------------------------------------------------------------------------
def prepare_params(p, *, head_dim, compute_dtype=jnp.bfloat16):
    E = p['rms1_w'].shape[-1]
    NH = E // head_dim
    hc = 2 * E                      # MishGLU hidden = in_c * 2
    f32 = jnp.float32
    return dict(
        rms1_w=p['rms1_w'].astype(f32),                                        # (1, E)
        wq=p['in_w'][0:E].T.astype(compute_dtype),                             # (E, E)
        bq=p['in_b'][0:E][None, :].astype(f32),                                # (1, E)
        wk=p['in_w'][E:2 * E].T.astype(compute_dtype),
        bk=p['in_b'][E:2 * E][None, :].astype(f32),
        wv=p['in_w'][2 * E:3 * E].T.astype(compute_dtype),
        bv=p['in_b'][2 * E:3 * E][None, :].astype(f32),
        wo=p['out_w'].T.reshape(NH, head_dim, E).astype(compute_dtype),        # (NH, Dh, E)
        bo=p['out_b'][None, :].astype(f32),                                    # (1, E)
        rms2_w=p['rms2_w'].astype(f32),
        w1a=p['l1_w'][0:hc].T.astype(compute_dtype),                           # (E, 2E)
        b1a=p['l1_b'][0:hc][None, :].astype(f32),
        w1b=p['l1_w'][hc:2 * hc].T.astype(compute_dtype),                      # (E, 2E)
        b1b=p['l1_b'][hc:2 * hc][None, :].astype(f32),
        w2=p['l2_w'].T.astype(compute_dtype),                                  # (2E, E)
        b2=p['l2_b'][None, :].astype(f32),
    )


def init_params(key, in_c, repeats):
    """Deterministic synthetic init matching nn module shapes (not a checkpoint)."""
    params = []
    h_c = in_c * 2
    for r in range(repeats):
        ks = jax.random.split(jax.random.fold_in(key, r), 8)
        s = 0.05
        params.append(dict(
            rms1_w=jnp.ones((1, in_c), jnp.float32),
            in_w=jax.random.normal(ks[0], (3 * in_c, in_c), jnp.float32) * s,
            in_b=jax.random.normal(ks[1], (3 * in_c,), jnp.float32) * s,
            out_w=jax.random.normal(ks[2], (in_c, in_c), jnp.float32) * s,
            out_b=jax.random.normal(ks[3], (in_c,), jnp.float32) * s,
            rms2_w=jnp.ones((1, in_c), jnp.float32),
            l1_w=jax.random.normal(ks[4], (2 * h_c, in_c), jnp.float32) * s,
            l1_b=jax.random.normal(ks[5], (2 * h_c,), jnp.float32) * s,
            l2_w=jax.random.normal(ks[6], (in_c, h_c), jnp.float32) * s,
            l2_b=jax.random.normal(ks[7], (in_c,), jnp.float32) * s,
        ))
    return params


# ---------------- pure-JAX reference (mirrors the kernels' bf16 casts) ----------------
def reference_block(y, pp, *, head_dim, compute_dtype=jnp.bfloat16):
    B, L, E = y.shape
    NH = E // head_dim
    scale = 1.0 / math.sqrt(head_dim)
    xf = y.astype(jnp.float32)

    nx = _rmsnorm(xf, pp['rms1_w'][0]).astype(compute_dtype)
    q = ((jnp.einsum('ble,ef->blf', nx, pp['wq'], preferred_element_type=jnp.float32)
          + pp['bq'][0]) * scale).astype(compute_dtype)
    k = (jnp.einsum('ble,ef->blf', nx, pp['wk'], preferred_element_type=jnp.float32)
         + pp['bk'][0]).astype(compute_dtype)
    v = (jnp.einsum('ble,ef->blf', nx, pp['wv'], preferred_element_type=jnp.float32)
         + pp['bv'][0]).astype(compute_dtype)
    qh = q.reshape(B, L, NH, head_dim)
    kh = k.reshape(B, L, NH, head_dim)
    vh = v.reshape(B, L, NH, head_dim)
    s = jnp.einsum('bqhd,bkhd->bhqk', qh, kh, preferred_element_type=jnp.float32)
    a = jax.nn.softmax(s, axis=-1)
    ctx = jnp.einsum('bhqk,bkhd->bqhd', a.astype(compute_dtype), vh,
                     preferred_element_type=jnp.float32)
    attn = jnp.einsum('bqhd,hde->bqe', ctx.astype(compute_dtype), pp['wo'],
                      preferred_element_type=jnp.float32) + pp['bo'][0]
    x1 = (xf + attn).astype(y.dtype)          # stored bf16 between the two kernels

    x1f = x1.astype(jnp.float32)
    nx2 = _rmsnorm(x1f, pp['rms2_w'][0]).astype(compute_dtype)
    g1 = jnp.einsum('ble,eh->blh', nx2, pp['w1a'], preferred_element_type=jnp.float32) + pp['b1a'][0]
    g2 = jnp.einsum('ble,eh->blh', nx2, pp['w1b'], preferred_element_type=jnp.float32) + pp['b1b'][0]
    m = (_mish(g1) * g2).astype(compute_dtype)
    mlp = jnp.einsum('blh,he->ble', m, pp['w2'], preferred_element_type=jnp.float32) + pp['b2'][0]
    return (x1f + mlp).astype(y.dtype)


def reference_layer(x, prepared_params, *, head_dim, act_dtype=jnp.bfloat16):
    y = x.astype(act_dtype)
    for pp in prepared_params:
        y = reference_block(y, pp, head_dim=head_dim)
    return y.astype(x.dtype)


if __name__ == "__main__":
    B, L, E = 2, 8, 32        # batch, seq, embed (toy; E=32 < 128 lanes -- correctness demo only)
    head_dim = 8              # -> 4 heads
    repeats = 2

    key = jax.random.PRNGKey(0)
    kx, kp = jax.random.split(key)
    x = jax.random.normal(kx, (B, L, E), jnp.float32)

    raw_params = init_params(kp, E, repeats)
    prepared = [prepare_params(p, head_dim=head_dim) for p in raw_params]

    run = jax.jit(functools.partial(transformer_layer, head_dim=head_dim))
    out = jax.block_until_ready(run(x, prepared))

    ref = reference_layer(x, prepared, head_dim=head_dim)

    assert out.shape == (B, L, E)
    max_err = float(jnp.max(jnp.abs(out - ref)))
    assert jnp.allclose(out, ref, atol=2e-2, rtol=2e-2), \
        f"mismatch vs reference (max abs err {max_err})"

    print("KERNEL_OK")
</pallas_src>

<mosaic_0001>
module attributes {stable_mosaic.version = 11 : i64} {
  func.func @qkv_proj_kernel(%arg0: i32, %arg1: i32, %arg2: memref<1x8x32xbf16, #tpu.memory_space<vmem>>, %arg3: memref<1x32xf32, #tpu.memory_space<vmem>>, %arg4: memref<32x32xbf16, #tpu.memory_space<vmem>>, %arg5: memref<1x32xf32, #tpu.memory_space<vmem>>, %arg6: memref<32x32xbf16, #tpu.memory_space<vmem>>, %arg7: memref<1x32xf32, #tpu.memory_space<vmem>>, %arg8: memref<32x32xbf16, #tpu.memory_space<vmem>>, %arg9: memref<1x32xf32, #tpu.memory_space<vmem>>, %arg10: memref<1x8x32xbf16, #tpu.memory_space<vmem>>, %arg11: memref<1x8x32xbf16, #tpu.memory_space<vmem>>, %arg12: memref<1x8x32xbf16, #tpu.memory_space<vmem>>) attributes {dimension_semantics = [#tpu.dimension_semantics<parallel>, #tpu.dimension_semantics<parallel>], iteration_bounds = array<i64: 2, 1>, scalar_prefetch = 0 : i64, scratch_operands = 0 : i64, tpu.core_type = #tpu.core_type<tc>, window_params = [{transform_indices = @transform_0, window_bounds = array<i64: 1, 8, 32>}, {pipeline_mode = #tpu.pipeline_mode<synchronous>, transform_indices = @transform_1, window_bounds = array<i64: 1, 32>}, {pipeline_mode = #tpu.pipeline_mode<synchronous>, transform_indices = @transform_2, window_bounds = array<i64: 32, 32>}, {pipeline_mode = #tpu.pipeline_mode<synchronous>, transform_indices = @transform_3, window_bounds = array<i64: 1, 32>}, {pipeline_mode = #tpu.pipeline_mode<synchronous>, transform_indices = @transform_4, window_bounds = array<i64: 32, 32>}, {pipeline_mode = #tpu.pipeline_mode<synchronous>, transform_indices = @transform_5, window_bounds = array<i64: 1, 32>}, {pipeline_mode = #tpu.pipeline_mode<synchronous>, transform_indices = @transform_6, window_bounds = array<i64: 32, 32>}, {pipeline_mode = #tpu.pipeline_mode<synchronous>, transform_indices = @transform_7, window_bounds = array<i64: 1, 32>}, {transform_indices = @transform_8, window_bounds = array<i64: 1, 8, 32>}, {transform_indices = @transform_9, window_bounds = array<i64: 1, 8, 32>}, {transform_indices = @transform_10, window_bounds = array<i64: 1, 8, 32>}]} {
    %c0 = arith.constant 0 : index
    %c0_0 = arith.constant 0 : index
    %c0_1 = arith.constant 0 : index
    %0 = vector.load %arg2[%c0, %c0_0, %c0_1] : memref<1x8x32xbf16, #tpu.memory_space<vmem>>, vector<1x8x32xbf16>
    %1 = vector.shape_cast %0 : vector<1x8x32xbf16> to vector<8x32xbf16>
    %2 = arith.extf %1 : vector<8x32xbf16> to vector<8x32xf32>
    %c0_2 = arith.constant 0 : index
    %c0_3 = arith.constant 0 : index
    %3 = vector.load %arg3[%c0_2, %c0_3] : memref<1x32xf32, #tpu.memory_space<vmem>>, vector<1x32xf32>
    %4 = vector.shape_cast %3 : vector<1x32xf32> to vector<32xf32>
    %5 = arith.mulf %2, %2 : vector<8x32xf32>
    %cst = arith.constant dense<0.000000e+00> : vector<8xf32>
    %6 = vector.multi_reduction <add>, %5, %cst [1] : vector<8x32xf32> to vector<8xf32>
    %7 = vector.shape_cast %6 : vector<8xf32> to vector<8x1xf32>
    %cst_4 = arith.constant 3.200000e+01 : f32
    %8 = vector.broadcast %cst_4 : f32 to vector<8x1xf32>
    %9 = arith.divf %7, %8 : vector<8x1xf32>
    %cst_5 = arith.constant 1.1920929E-7 : f32
    %10 = vector.broadcast %cst_5 : f32 to vector<8x1xf32>
    %11 = arith.addf %9, %10 : vector<8x1xf32>
    %12 = math.rsqrt %11 : vector<8x1xf32>
    %13 = vector.broadcast %12 : vector<8x1xf32> to vector<8x32xf32>
    %14 = arith.mulf %2, %13 : vector<8x32xf32>
    %15 = vector.shape_cast %4 : vector<32xf32> to vector<1x32xf32>
    %16 = vector.broadcast %15 : vector<1x32xf32> to vector<8x32xf32>
    %17 = arith.mulf %14, %16 : vector<8x32xf32>
    %18 = arith.truncf %17 : vector<8x32xf32> to vector<8x32xbf16>
    %c0_6 = arith.constant 0 : index
    %c0_7 = arith.constant 0 : index
    %19 = vector.load %arg4[%c0_6, %c0_7] : memref<32x32xbf16, #tpu.memory_space<vmem>>, vector<32x32xbf16>
    %cst_8 = arith.constant dense<0.000000e+00> : vector<8x32xf32>
    %20 = tpu.matmul %18, %19, %cst_8 {dimension_numbers = #tpu.dot_dimension_numbers<[1], [0], [0], [1], [0, 0, 1, 1], [], []>} : vector<8x32xbf16>, vector<32x32xbf16>, vector<8x32xf32> -> vector<8x32xf32>
    %c0_9 = arith.constant 0 : index
    %c0_10 = arith.constant 0 : index
    %21 = vector.load %arg5[%c0_9, %c0_10] : memref<1x32xf32, #tpu.memory_space<vmem>>, vector<1x32xf32>
    %22 = vector.shape_cast %21 : vector<1x32xf32> to vector<32xf32>
    %23 = vector.shape_cast %22 : vector<32xf32> to vector<1x32xf32>
    %24 = vector.broadcast %23 : vector<1x32xf32> to vector<8x32xf32>
    %25 = arith.addf %20, %24 : vector<8x32xf32>
    %c0_11 = arith.constant 0 : index
    %c0_12 = arith.constant 0 : index
    %26 = vector.load %arg6[%c0_11, %c0_12] : memref<32x32xbf16, #tpu.memory_space<vmem>>, vector<32x32xbf16>
    %cst_13 = arith.constant dense<0.000000e+00> : vector<8x32xf32>
    %27 = tpu.matmul %18, %26, %cst_13 {dimension_numbers = #tpu.dot_dimension_numbers<[1], [0], [0], [1], [0, 0, 1, 1], [], []>} : vector<8x32xbf16>, vector<32x32xbf16>, vector<8x32xf32> -> vector<8x32xf32>
    %c0_14 = arith.constant 0 : index
    %c0_15 = arith.constant 0 : index
    %28 = vector.load %arg7[%c0_14, %c0_15] : memref<1x32xf32, #tpu.memory_space<vmem>>, vector<1x32xf32>
    %29 = vector.shape_cast %28 : vector<1x32xf32> to vector<32xf32>
    %30 = vector.shape_cast %29 : vector<32xf32> to vector<1x32xf32>
    %31 = vector.broadcast %30 : vector<1x32xf32> to vector<8x32xf32>
    %32 = arith.addf %27, %31 : vector<8x32xf32>
    %c0_16 = arith.constant 0 : index
    %c0_17 = arith.constant 0 : index
    %33 = vector.load %arg8[%c0_16, %c0_17] : memref<32x32xbf16, #tpu.memory_space<vmem>>, vector<32x32xbf16>
    %cst_18 = arith.constant dense<0.000000e+00> : vector<8x32xf32>
    %34 = tpu.matmul %18, %33, %cst_18 {dimension_numbers = #tpu.dot_dimension_numbers<[1], [0], [0], [1], [0, 0, 1, 1], [], []>} : vector<8x32xbf16>, vector<32x32xbf16>, vector<8x32xf32> -> vector<8x32xf32>
    %c0_19 = arith.constant 0 : index
    %c0_20 = arith.constant 0 : index
    %35 = vector.load %arg9[%c0_19, %c0_20] : memref<1x32xf32, #tpu.memory_space<vmem>>, vector<1x32xf32>
    %36 = vector.shape_cast %35 : vector<1x32xf32> to vector<32xf32>
    %37 = vector.shape_cast %36 : vector<32xf32> to vector<1x32xf32>
    %38 = vector.broadcast %37 : vector<1x32xf32> to vector<8x32xf32>
    %39 = arith.addf %34, %38 : vector<8x32xf32>
    %cst_21 = arith.constant 0.353553385 : f32
    %40 = vector.broadcast %cst_21 : f32 to vector<8x32xf32>
    %41 = arith.mulf %25, %40 : vector<8x32xf32>
    %42 = arith.truncf %41 : vector<8x32xf32> to vector<8x32xbf16>
    %c0_22 = arith.constant 0 : index
    %c0_23 = arith.constant 0 : index
    %c0_24 = arith.constant 0 : index
    %43 = vector.load %arg10[%c0_22, %c0_23, %c0_24] : memref<1x8x32xbf16, #tpu.memory_space<vmem>>, vector<1x8x32xbf16>
    %44 = vector.shape_cast %43 : vector<1x8x32xbf16> to vector<8x32xbf16>
    %45 = vector.shape_cast %42 : vector<8x32xbf16> to vector<1x8x32xbf16>
    tpu.vector_store %arg10[%c0_22, %c0_23, %c0_24], %45 {strides = array<i32>} : memref<1x8x32xbf16, #tpu.memory_space<vmem>>, vector<1x8x32xbf16>,
    %46 = arith.truncf %32 : vector<8x32xf32> to vector<8x32xbf16>
    %c0_25 = arith.constant 0 : index
    %c0_26 = arith.constant 0 : index
    %c0_27 = arith.constant 0 : index
    %47 = vector.load %arg11[%c0_25, %c0_26, %c0_27] : memref<1x8x32xbf16, #tpu.memory_space<vmem>>, vector<1x8x32xbf16>
    %48 = vector.shape_cast %47 : vector<1x8x32xbf16> to vector<8x32xbf16>
    %49 = vector.shape_cast %46 : vector<8x32xbf16> to vector<1x8x32xbf16>
    tpu.vector_store %arg11[%c0_25, %c0_26, %c0_27], %49 {strides = array<i32>} : memref<1x8x32xbf16, #tpu.memory_space<vmem>>, vector<1x8x32xbf16>,
    %50 = arith.truncf %39 : vector<8x32xf32> to vector<8x32xbf16>
    %c0_28 = arith.constant 0 : index
    %c0_29 = arith.constant 0 : index
    %c0_30 = arith.constant 0 : index
    %51 = vector.load %arg12[%c0_28, %c0_29, %c0_30] : memref<1x8x32xbf16, #tpu.memory_space<vmem>>, vector<1x8x32xbf16>
    %52 = vector.shape_cast %51 : vector<1x8x32xbf16> to vector<8x32xbf16>
    %53 = vector.shape_cast %50 : vector<8x32xbf16> to vector<1x8x32xbf16>
    tpu.vector_store %arg12[%c0_28, %c0_29, %c0_30], %53 {strides = array<i32>} : memref<1x8x32xbf16, #tpu.memory_space<vmem>>, vector<1x8x32xbf16>,
    return
  }
  func.func @transform_0(%arg0: i32, %arg1: i32) -> (i32, i32, i32) {
    %c0_i32 = arith.constant 0 : i32
    %c0_i32_0 = arith.constant 0 : i32
    return %arg0, %arg1, %c0_i32 : i32, i32, i32
  }
  func.func @transform_1(%arg0: i32, %arg1: i32) -> (i32, i32) {
    %c0_i32 = arith.constant 0 : i32
    %c0_i32_0 = arith.constant 0 : i32
    %c0_i32_1 = arith.constant 0 : i32
    return %c0_i32, %c0_i32_0 : i32, i32
  }
  func.func @transform_2(%arg0: i32, %arg1: i32) -> (i32, i32) {
    %c0_i32 = arith.constant 0 : i32
    %c0_i32_0 = arith.constant 0 : i32
    %c0_i32_1 = arith.constant 0 : i32
    return %c0_i32, %c0_i32_0 : i32, i32
  }
  func.func @transform_3(%arg0: i32, %arg1: i32) -> (i32, i32) {
    %c0_i32 = arith.constant 0 : i32
    %c0_i32_0 = arith.constant 0 : i32
    %c0_i32_1 = arith.constant 0 : i32
    return %c0_i32, %c0_i32_0 : i32, i32
  }
  func.func @transform_4(%arg0: i32, %arg1: i32) -> (i32, i32) {
    %c0_i32 = arith.constant 0 : i32
    %c0_i32_0 = arith.constant 0 : i32
    %c0_i32_1 = arith.constant 0 : i32
    return %c0_i32, %c0_i32_0 : i32, i32
  }
  func.func @transform_5(%arg0: i32, %arg1: i32) -> (i32, i32) {
    %c0_i32 = arith.constant 0 : i32
    %c0_i32_0 = arith.constant 0 : i32
    %c0_i32_1 = arith.constant 0 : i32
    return %c0_i32, %c0_i32_0 : i32, i32
  }
  func.func @transform_6(%arg0: i32, %arg1: i32) -> (i32, i32) {
    %c0_i32 = arith.constant 0 : i32
    %c0_i32_0 = arith.constant 0 : i32
    %c0_i32_1 = arith.constant 0 : i32
    return %c0_i32, %c0_i32_0 : i32, i32
  }
  func.func @transform_7(%arg0: i32, %arg1: i32) -> (i32, i32) {
    %c0_i32 = arith.constant 0 : i32
    %c0_i32_0 = arith.constant 0 : i32
    %c0_i32_1 = arith.constant 0 : i32
    return %c0_i32, %c0_i32_0 : i32, i32
  }
  func.func @transform_8(%arg0: i32, %arg1: i32) -> (i32, i32, i32) {
    %c0_i32 = arith.constant 0 : i32
    %c0_i32_0 = arith.constant 0 : i32
    return %arg0, %arg1, %c0_i32 : i32, i32, i32
  }
  func.func @transform_9(%arg0: i32, %arg1: i32) -> (i32, i32, i32) {
    %c0_i32 = arith.constant 0 : i32
    %c0_i32_0 = arith.constant 0 : i32
    return %arg0, %arg1, %c0_i32 : i32, i32, i32
  }
  func.func @transform_10(%arg0: i32, %arg1: i32) -> (i32, i32, i32) {
    %c0_i32 = arith.constant 0 : i32
    %c0_i32_0 = arith.constant 0 : i32
    return %arg0, %arg1, %c0_i32 : i32, i32, i32
  }
}

module attributes {stable_mosaic.version = 11 : i64} {
  func.func @flash_attn_kernel(%arg0: i32, %arg1: i32, %arg2: i32, %arg3: memref<1x8x32xbf16, #tpu.memory_space<vmem>>, %arg4: memref<1x8x32xbf16, #tpu.memory_space<vmem>>, %arg5: memref<1x8x32xbf16, #tpu.memory_space<vmem>>, %arg6: memref<1x8x32xbf16, #tpu.memory_space<vmem>>, %arg7: memref<4x8x32xbf16, #tpu.memory_space<vmem>>, %arg8: memref<1x32xf32, #tpu.memory_space<vmem>>, %arg9: memref<1x8x32xbf16, #tpu.memory_space<vmem>>, %arg10: memref<4x8x1xf32, #tpu.memory_space<vmem>>, %arg11: memref<4x8x1xf32, #tpu.memory_space<vmem>>, %arg12: memref<4x8x8xf32, #tpu.memory_space<vmem>>) attributes {dimension_semantics = [#tpu.dimension_semantics<parallel>, #tpu.dimension_semantics<parallel>, #tpu.dimension_semantics<arbitrary>], iteration_bounds = array<i64: 2, 1, 1>, scalar_prefetch = 0 : i64, scratch_operands = 3 : i64, tpu.core_type = #tpu.core_type<tc>, window_params = [{transform_indices = @transform_0, window_bounds = array<i64: 1, 8, 32>}, {transform_indices = @transform_1, window_bounds = array<i64: 1, 8, 32>}, {transform_indices = @transform_2, window_bounds = array<i64: 1, 8, 32>}, {transform_indices = @transform_3, window_bounds = array<i64: 1, 8, 32>}, {pipeline_mode = #tpu.pipeline_mode<synchronous>, transform_indices = @transform_4, window_bounds = array<i64: 4, 8, 32>}, {pipeline_mode = #tpu.pipeline_mode<synchronous>, transform_indices = @transform_5, window_bounds = array<i64: 1, 32>}, {transform_indices = @transform_6, window_bounds = array<i64: 1, 8, 32>}]} {
    %c0_i32 = arith.constant 0 : i32
    %0 = arith.cmpi eq, %arg2, %c0_i32 : i32
    %1 = arith.extui %0 : i1 to i32
    %c0_i32_0 = arith.constant 0 : i32
    %2 = arith.cmpi ne, %1, %c0_i32_0 : i32
    scf.if %2 {
      %cst_119 = arith.constant 0xFF800000 : f32
      %162 = vector.broadcast %cst_119 : f32 to vector<4x8x1xf32>
      %c0_120 = arith.constant 0 : index
      %c0_121 = arith.constant 0 : index
      %c0_122 = arith.constant 0 : index
      %163 = vector.load %arg10[%c0_120, %c0_121, %c0_122] : memref<4x8x1xf32, #tpu.memory_space<vmem>>, vector<4x8x1xf32>
      tpu.vector_store %arg10[%c0_120, %c0_121, %c0_122], %162 {strides = array<i32>} : memref<4x8x1xf32, #tpu.memory_space<vmem>>, vector<4x8x1xf32>,
      %cst_123 = arith.constant 0.000000e+00 : f32
      %164 = vector.broadcast %cst_123 : f32 to vector<4x8x1xf32>
      %c0_124 = arith.constant 0 : index
      %c0_125 = arith.constant 0 : index
      %c0_126 = arith.constant 0 : index
      %165 = vector.load %arg11[%c0_124, %c0_125, %c0_126] : memref<4x8x1xf32, #tpu.memory_space<vmem>>, vector<4x8x1xf32>
      tpu.vector_store %arg11[%c0_124, %c0_125, %c0_126], %164 {strides = array<i32>} : memref<4x8x1xf32, #tpu.memory_space<vmem>>, vector<4x8x1xf32>,
      %cst_127 = arith.constant 0.000000e+00 : f32
      %166 = vector.broadcast %cst_127 : f32 to vector<4x8x8xf32>
      %c0_128 = arith.constant 0 : index
      %c0_129 = arith.constant 0 : index
      %c0_130 = arith.constant 0 : index
      %167 = vector.load %arg12[%c0_128, %c0_129, %c0_130] : memref<4x8x8xf32, #tpu.memory_space<vmem>>, vector<4x8x8xf32>
      tpu.vector_store %arg12[%c0_128, %c0_129, %c0_130], %166 {strides = array<i32>} : memref<4x8x8xf32, #tpu.memory_space<vmem>>, vector<4x8x8xf32>,
    } else {
    }
    %c0 = arith.constant 0 : index
    %c0_1 = arith.constant 0 : index
    %c0_2 = arith.constant 0 : index
    %3 = vector.load %arg4[%c0, %c0_1, %c0_2] : memref<1x8x32xbf16, #tpu.memory_space<vmem>>, vector<1x8x8xbf16>
    %4 = vector.shape_cast %3 : vector<1x8x8xbf16> to vector<8x8xbf16>
    %c0_3 = arith.constant 0 : index
    %c0_4 = arith.constant 0 : index
    %c0_5 = arith.constant 0 : index
    %5 = vector.load %arg5[%c0_3, %c0_4, %c0_5] : memref<1x8x32xbf16, #tpu.memory_space<vmem>>, vector<1x8x8xbf16>
    %6 = vector.shape_cast %5 : vector<1x8x8xbf16> to vector<8x8xbf16>
    %c0_6 = arith.constant 0 : index
    %c0_7 = arith.constant 0 : index
    %c0_8 = arith.constant 0 : index
    %7 = vector.load %arg6[%c0_6, %c0_7, %c0_8] : memref<1x8x32xbf16, #tpu.memory_space<vmem>>, vector<1x8x8xbf16>
    %8 = vector.shape_cast %7 : vector<1x8x8xbf16> to vector<8x8xbf16>
    %c0_9 = arith.constant 0 : index
    %c0_10 = arith.constant 0 : index
    %c0_11 = arith.constant 0 : index
    %9 = vector.load %arg10[%c0_9, %c0_10, %c0_11] : memref<4x8x1xf32, #tpu.memory_space<vmem>>, vector<1x8x1xf32>
    %10 = vector.shape_cast %9 : vector<1x8x1xf32> to vector<8x1xf32>
    %c0_12 = arith.constant 0 : index
    %c0_13 = arith.constant 0 : index
    %c0_14 = arith.constant 0 : index
    %11 = vector.load %arg11[%c0_12, %c0_13, %c0_14] : memref<4x8x1xf32, #tpu.memory_space<vmem>>, vector<1x8x1xf32>
    %12 = vector.shape_cast %11 : vector<1x8x1xf32> to vector<8x1xf32>
    %c0_15 = arith.constant 0 : index
    %c0_16 = arith.constant 0 : index
    %c0_17 = arith.constant 0 : index
    %13 = vector.load %arg12[%c0_15, %c0_16, %c0_17] : memref<4x8x8xf32, #tpu.memory_space<vmem>>, vector<1x8x8xf32>
    %14 = vector.shape_cast %13 : vector<1x8x8xf32> to vector<8x8xf32>
    %cst = arith.constant dense<0.000000e+00> : vector<8x8xf32>
    %15 = tpu.matmul %4, %6, %cst {dimension_numbers = #tpu.dot_dimension_numbers<[1], [1], [0], [0], [0, 0, 1, 0], [], []>} : vector<8x8xbf16>, vector<8x8xbf16>, vector<8x8xf32> -> vector<8x8xf32>
    %cst_18 = arith.constant dense<0xFF800000> : vector<8xf32>
    %16 = vector.multi_reduction <maximumf>, %15, %cst_18 [1] : vector<8x8xf32> to vector<8xf32>
    %17 = vector.shape_cast %16 : vector<8xf32> to vector<8x1xf32>
    %18 = arith.maximumf %10, %17 : vector<8x1xf32>
    %19 = arith.subf %10, %18 : vector<8x1xf32>
    %20 = math.exp %19 : vector<8x1xf32>
    %21 = vector.broadcast %18 : vector<8x1xf32> to vector<8x8xf32>
    %22 = arith.subf %15, %21 : vector<8x8xf32>
    %23 = math.exp %22 : vector<8x8xf32>
    %24 = arith.mulf %20, %12 : vector<8x1xf32>
    %cst_19 = arith.constant dense<0.000000e+00> : vector<8xf32>
    %25 = vector.multi_reduction <add>, %23, %cst_19 [1] : vector<8x8xf32> to vector<8xf32>
    %26 = vector.shape_cast %25 : vector<8xf32> to vector<8x1xf32>
    %27 = arith.addf %24, %26 : vector<8x1xf32>
    %28 = vector.broadcast %20 : vector<8x1xf32> to vector<8x8xf32>
    %29 = arith.mulf %28, %14 : vector<8x8xf32>
    %30 = arith.truncf %23 : vector<8x8xf32> to vector<8x8xbf16>
    %cst_20 = arith.constant dense<0.000000e+00> : vector<8x8xf32>
    %31 = tpu.matmul %30, %8, %cst_20 {dimension_numbers = #tpu.dot_dimension_numbers<[1], [0], [0], [1], [0, 0, 1, 1], [], []>} : vector<8x8xbf16>, vector<8x8xbf16>, vector<8x8xf32> -> vector<8x8xf32>
    %32 = arith.addf %29, %31 : vector<8x8xf32>
    %c0_21 = arith.constant 0 : index
    %c0_22 = arith.constant 0 : index
    %c0_23 = arith.constant 0 : index
    %33 = vector.load %arg10[%c0_21, %c0_22, %c0_23] : memref<4x8x1xf32, #tpu.memory_space<vmem>>, vector<1x8x1xf32>
    %34 = vector.shape_cast %33 : vector<1x8x1xf32> to vector<8x1xf32>
    %35 = vector.shape_cast %18 : vector<8x1xf32> to vector<1x8x1xf32>
    tpu.vector_store %arg10[%c0_21, %c0_22, %c0_23], %35 {strides = array<i32>} : memref<4x8x1xf32, #tpu.memory_space<vmem>>, vector<1x8x1xf32>,
    %c0_24 = arith.constant 0 : index
    %c0_25 = arith.constant 0 : index
    %c0_26 = arith.constant 0 : index
    %36 = vector.load %arg11[%c0_24, %c0_25, %c0_26] : memref<4x8x1xf32, #tpu.memory_space<vmem>>, vector<1x8x1xf32>
    %37 = vector.shape_cast %36 : vector<1x8x1xf32> to vector<8x1xf32>
    %38 = vector.shape_cast %27 : vector<8x1xf32> to vector<1x8x1xf32>
    tpu.vector_store %arg11[%c0_24, %c0_25, %c0_26], %38 {strides = array<i32>} : memref<4x8x1xf32, #tpu.memory_space<vmem>>, vector<1x8x1xf32>,
    %c0_27 = arith.constant 0 : index
    %c0_28 = arith.constant 0 : index
    %c0_29 = arith.constant 0 : index
    %39 = vector.load %arg12[%c0_27, %c0_28, %c0_29] : memref<4x8x8xf32, #tpu.memory_space<vmem>>, vector<1x8x8xf32>
    %40 = vector.shape_cast %39 : vector<1x8x8xf32> to vector<8x8xf32>
    %41 = vector.shape_cast %32 : vector<8x8xf32> to vector<1x8x8xf32>
    tpu.vector_store %arg12[%c0_27, %c0_28, %c0_29], %41 {strides = array<i32>} : memref<4x8x8xf32, #tpu.memory_space<vmem>>, vector<1x8x8xf32>,
    %c0_30 = arith.constant 0 : index
    %c0_31 = arith.constant 0 : index
    %c8 = arith.constant 8 : index
    %42 = vector.load %arg4[%c0_30, %c0_31, %c8] : memref<1x8x32xbf16, #tpu.memory_space<vmem>>, vector<1x8x8xbf16>
    %43 = vector.shape_cast %42 : vector<1x8x8xbf16> to vector<8x8xbf16>
    %c0_32 = arith.constant 0 : index
    %c0_33 = arith.constant 0 : index
    %c8_34 = arith.constant 8 : index
    %44 = vector.load %arg5[%c0_32, %c0_33, %c8_34] : memref<1x8x32xbf16, #tpu.memory_space<vmem>>, vector<1x8x8xbf16>
    %45 = vector.shape_cast %44 : vector<1x8x8xbf16> to vector<8x8xbf16>
    %c0_35 = arith.constant 0 : index
    %c0_36 = arith.constant 0 : index
    %c8_37 = arith.constant 8 : index
    %46 = vector.load %arg6[%c0_35, %c0_36, %c8_37] : memref<1x8x32xbf16, #tpu.memory_space<vmem>>, vector<1x8x8xbf16>
    %47 = vector.shape_cast %46 : vector<1x8x8xbf16> to vector<8x8xbf16>
    %c1 = arith.constant 1 : index
    %c0_38 = arith.constant 0 : index
    %c0_39 = arith.constant 0 : index
    %48 = vector.load %arg10[%c1, %c0_38, %c0_39] : memref<4x8x1xf32, #tpu.memory_space<vmem>>, vector<1x8x1xf32>
    %49 = vector.shape_cast %48 : vector<1x8x1xf32> to vector<8x1xf32>
    %c1_40 = arith.constant 1 : index
    %c0_41 = arith.constant 0 : index
    %c0_42 = arith.constant 0 : index
    %50 = vector.load %arg11[%c1_40, %c0_41, %c0_42] : memref<4x8x1xf32, #tpu.memory_space<vmem>>, vector<1x8x1xf32>
    %51 = vector.shape_cast %50 : vector<1x8x1xf32> to vector<8x1xf32>
    %c1_43 = arith.constant 1 : index
    %c0_44 = arith.constant 0 : index
    %c0_45 = arith.constant 0 : index
    %52 = vector.load %arg12[%c1_43, %c0_44, %c0_45] : memref<4x8x8xf32, #tpu.memory_space<vmem>>, vector<1x8x8xf32>
    %53 = vector.shape_cast %52 : vector<1x8x8xf32> to vector<8x8xf32>
    %cst_46 = arith.constant dense<0.000000e+00> : vector<8x8xf32>
    %54 = tpu.matmul %43, %45, %cst_46 {dimension_numbers = #tpu.dot_dimension_numbers<[1], [1], [0], [0], [0, 0, 1, 0], [], []>} : vector<8x8xbf16>, vector<8x8xbf16>, vector<8x8xf32> -> vector<8x8xf32>
    %cst_47 = arith.constant dense<0xFF800000> : vector<8xf32>
    %55 = vector.multi_reduction <maximumf>, %54, %cst_47 [1] : vector<8x8xf32> to vector<8xf32>
    %56 = vector.shape_cast %55 : vector<8xf32> to vector<8x1xf32>
    %57 = arith.maximumf %49, %56 : vector<8x1xf32>
    %58 = arith.subf %49, %57 : vector<8x1xf32>
    %59 = math.exp %58 : vector<8x1xf32>
    %60 = vector.broadcast %57 : vector<8x1xf32> to vector<8x8xf32>
    %61 = arith.subf %54, %60 : vector<8x8xf32>
    %62 = math.exp %61 : vector<8x8xf32>
    %63 = arith.mulf %59, %51 : vector<8x1xf32>
    %cst_48 = arith.constant dense<0.000000e+00> : vector<8xf32>
    %64 = vector.multi_reduction <add>, %62, %cst_48 [1] : vector<8x8xf32> to vector<8xf32>
    %65 = vector.shape_cast %64 : vector<8xf32> to vector<8x1xf32>
    %66 = arith.addf %63, %65 : vector<8x1xf32>
    %67 = vector.broadcast %59 : vector<8x1xf32> to vector<8x8xf32>
    %68 = arith.mulf %67, %53 : vector<8x8xf32>
    %69 = arith.truncf %62 : vector<8x8xf32> to vector<8x8xbf16>
    %cst_49 = arith.constant dense<0.000000e+00> : vector<8x8xf32>
    %70 = tpu.matmul %69, %47, %cst_49 {dimension_numbers = #tpu.dot_dimension_numbers<[1], [0], [0], [1], [0, 0, 1, 1], [], []>} : vector<8x8xbf16>, vector<8x8xbf16>, vector<8x8xf32> -> vector<8x8xf32>
    %71 = arith.addf %68, %70 : vector<8x8xf32>
    %c1_50 = arith.constant 1 : index
    %c0_51 = arith.constant 0 : index
    %c0_52 = arith.constant 0 : index
    %72 = vector.load %arg10[%c1_50, %c0_51, %c0_52] : memref<4x8x1xf32, #tpu.memory_space<vmem>>, vector<1x8x1xf32>
    %73 = vector.shape_cast %72 : vector<1x8x1xf32> to vector<8x1xf32>
    %74 = vector.shape_cast %57 : vector<8x1xf32> to vector<1x8x1xf32>
    tpu.vector_store %arg10[%c1_50, %c0_51, %c0_52], %74 {strides = array<i32>} : memref<4x8x1xf32, #tpu.memory_space<vmem>>, vector<1x8x1xf32>,
    %c1_53 = arith.constant 1 : index
    %c0_54 = arith.constant 0 : index
    %c0_55 = arith.constant 0 : index
    %75 = vector.load %arg11[%c1_53, %c0_54, %c0_55] : memref<4x8x1xf32, #tpu.memory_space<vmem>>, vector<1x8x1xf32>
    %76 = vector.shape_cast %75 : vector<1x8x1xf32> to vector<8x1xf32>
    %77 = vector.shape_cast %66 : vector<8x1xf32> to vector<1x8x1xf32>
    tpu.vector_store %arg11[%c1_53, %c0_54, %c0_55], %77 {strides = array<i32>} : memref<4x8x1xf32, #tpu.memory_space<vmem>>, vector<1x8x1xf32>,
    %c1_56 = arith.constant 1 : index
    %c0_57 = arith.constant 0 : index
    %c0_58 = arith.constant 0 : index
    %78 = vector.load %arg12[%c1_56, %c0_57, %c0_58] : memref<4x8x8xf32, #tpu.memory_space<vmem>>, vector<1x8x8xf32>
    %79 = vector.shape_cast %78 : vector<1x8x8xf32> to vector<8x8xf32>
    %80 = vector.shape_cast %71 : vector<8x8xf32> to vector<1x8x8xf32>
    tpu.vector_store %arg12[%c1_56, %c0_57, %c0_58], %80 {strides = array<i32>} : memref<4x8x8xf32, #tpu.memory_space<vmem>>, vector<1x8x8xf32>,
    %c0_59 = arith.constant 0 : index
    %c0_60 = arith.constant 0 : index
    %c16 = arith.constant 16 : index
    %81 = vector.load %arg4[%c0_59, %c0_60, %c16] : memref<1x8x32xbf16, #tpu.memory_space<vmem>>, vector<1x8x8xbf16>
    %82 = vector.shape_cast %81 : vector<1x8x8xbf16> to vector<8x8xbf16>
    %c0_61 = arith.constant 0 : index
    %c0_62 = arith.constant 0 : index
    %c16_63 = arith.constant 16 : index
    %83 = vector.load %arg5[%c0_61, %c0_62, %c16_63] : memref<1x8x32xbf16, #tpu.memory_space<vmem>>, vector<1x8x8xbf16>
    %84 = vector.shape_cast %83 : vector<1x8x8xbf16> to vector<8x8xbf16>
    %c0_64 = arith.constant 0 : index
    %c0_65 = arith.constant 0 : index
    %c16_66 = arith.constant 16 : index
    %85 = vector.load %arg6[%c0_64, %c0_65, %c16_66] : memref<1x8x32xbf16, #tpu.memory_space<vmem>>, vector<1x8x8xbf16>
    %86 = vector.shape_cast %85 : vector<1x8x8xbf16> to vector<8x8xbf16>
    %c2 = arith.constant 2 : index
    %c0_67 = arith.constant 0 : index
    %c0_68 = arith.constant 0 : index
    %87 = vector.load %arg10[%c2, %c0_67, %c0_68] : memref<4x8x1xf32, #tpu.memory_space<vmem>>, vector<1x8x1xf32>
    %88 = vector.shape_cast %87 : vector<1x8x1xf32> to vector<8x1xf32>
    %c2_69 = arith.constant 2 : index
    %c0_70 = arith.constant 0 : index
    %c0_71 = arith.constant 0 : index
    %89 = vector.load %arg11[%c2_69, %c0_70, %c0_71] : memref<4x8x1xf32, #tpu.memory_space<vmem>>, vector<1x8x1xf32>
    %90 = vector.shape_cast %89 : vector<1x8x1xf32> to vector<8x1xf32>
    %c2_72 = arith.constant 2 : index
    %c0_73 = arith.constant 0 : index
    %c0_74 = arith.constant 0 : index
    %91 = vector.load %arg12[%c2_72, %c0_73, %c0_74] : memref<4x8x8xf32, #tpu.memory_space<vmem>>, vector<1x8x8xf32>
    %92 = vector.shape_cast %91 : vector<1x8x8xf32> to vector<8x8xf32>
    %cst_75 = arith.constant dense<0.000000e+00> : vector<8x8xf32>
    %93 = tpu.matmul %82, %84, %cst_75 {dimension_numbers = #tpu.dot_dimension_numbers<[1], [1], [0], [0], [0, 0, 1, 0], [], []>} : vector<8x8xbf16>, vector<8x8xbf16>, vector<8x8xf32> -> vector<8x8xf32>
    %cst_76 = arith.constant dense<0xFF800000> : vector<8xf32>
    %94 = vector.multi_reduction <maximumf>, %93, %cst_76 [1] : vector<8x8xf32> to vector<8xf32>
    %95 = vector.shape_cast %94 : vector<8xf32> to vector<8x1xf32>
    %96 = arith.maximumf %88, %95 : vector<8x1xf32>
    %97 = arith.subf %88, %96 : vector<8x1xf32>
    %98 = math.exp %97 : vector<8x1xf32>
    %99 = vector.broadcast %96 : vector<8x1xf32> to vector<8x8xf32>
    %100 = arith.subf %93, %99 : vector<8x8xf32>
    %101 = math.exp %100 : vector<8x8xf32>
    %102 = arith.mulf %98, %90 : vector<8x1xf32>
    %cst_77 = arith.constant dense<0.000000e+00> : vector<8xf32>
    %103 = vector.multi_reduction <add>, %101, %cst_77 [1] : vector<8x8xf32> to vector<8xf32>
    %104 = vector.shape_cast %103 : vector<8xf32> to vector<8x1xf32>
    %105 = arith.addf %102, %104 : vector<8x1xf32>
    %106 = vector.broadcast %98 : vector<8x1xf32> to vector<8x8xf32>
    %107 = arith.mulf %106, %92 : vector<8x8xf32>
    %108 = arith.truncf %101 : vector<8x8xf32> to vector<8x8xbf16>
    %cst_78 = arith.constant dense<0.000000e+00> : vector<8x8xf32>
    %109 = tpu.matmul %108, %86, %cst_78 {dimension_numbers = #tpu.dot_dimension_numbers<[1], [0], [0], [1], [0, 0, 1, 1], [], []>} : vector<8x8xbf16>, vector<8x8xbf16>, vector<8x8xf32> -> vector<8x8xf32>
    %110 = arith.addf %107, %109 : vector<8x8xf32>
    %c2_79 = arith.constant 2 : index
    %c0_80 = arith.constant 0 : index
    %c0_81 = arith.constant 0 : index
    %111 = vector.load %arg10[%c2_79, %c0_80, %c0_81] : memref<4x8x1xf32, #tpu.memory_space<vmem>>, vector<1x8x1xf32>
    %112 = vector.shape_cast %111 : vector<1x8x1xf32> to vector<8x1xf32>
    %113 = vector.shape_cast %96 : vector<8x1xf32> to vector<1x8x1xf32>
    tpu.vector_store %arg10[%c2_79, %c0_80, %c0_81], %113 {strides = array<i32>} : memref<4x8x1xf32, #tpu.memory_space<vmem>>, vector<1x8x1xf32>,
    %c2_82 = arith.constant 2 : index
    %c0_83 = arith.constant 0 : index
    %c0_84 = arith.constant 0 : index
    %114 = vector.load %arg11[%c2_82, %c0_83, %c0_84] : memref<4x8x1xf32, #tpu.memory_space<vmem>>, vector<1x8x1xf32>
    %115 = vector.shape_cast %114 : vector<1x8x1xf32> to vector<8x1xf32>
    %116 = vector.shape_cast %105 : vector<8x1xf32> to vector<1x8x1xf32>
    tpu.vector_store %arg11[%c2_82, %c0_83, %c0_84], %116 {strides = array<i32>} : memref<4x8x1xf32, #tpu.memory_space<vmem>>, vector<1x8x1xf32>,
    %c2_85 = arith.constant 2 : index
    %c0_86 = arith.constant 0 : index
    %c0_87 = arith.constant 0 : index
    %117 = vector.load %arg12[%c2_85, %c0_86, %c0_87] : memref<4x8x8xf32, #tpu.memory_space<vmem>>, vector<1x8x8xf32>
    %118 = vector.shape_cast %117 : vector<1x8x8xf32> to vector<8x8xf32>
    %119 = vector.shape_cast %110 : vector<8x8xf32> to vector<1x8x8xf32>
    tpu.vector_store %arg12[%c2_85, %c0_86, %c0_87], %119 {strides = array<i32>} : memref<4x8x8xf32, #tpu.memory_space<vmem>>, vector<1x8x8xf32>,
    %c0_88 = arith.constant 0 : index
    %c0_89 = arith.constant 0 : index
    %c24 = arith.constant 24 : index
    %120 = vector.load %arg4[%c0_88, %c0_89, %c24] : memref<1x8x32xbf16, #tpu.memory_space<vmem>>, vector<1x8x8xbf16>
    %121 = vector.shape_cast %120 : vector<1x8x8xbf16> to vector<8x8xbf16>
    %c0_90 = arith.constant 0 : index
    %c0_91 = arith.constant 0 : index
    %c24_92 = arith.constant 24 : index
    %122 = vector.load %arg5[%c0_90, %c0_91, %c24_92] : memref<1x8x32xbf16, #tpu.memory_space<vmem>>, vector<1x8x8xbf16>
    %123 = vector.shape_cast %122 : vector<1x8x8xbf16> to vector<8x8xbf16>
    %c0_93 = arith.constant 0 : index
    %c0_94 = arith.constant 0 : index
    %c24_95 = arith.constant 24 : index
    %124 = vector.load %arg6[%c0_93, %c0_94, %c24_95] : memref<1x8x32xbf16, #tpu.memory_space<vmem>>, vector<1x8x8xbf16>
    %125 = vector.shape_cast %124 : vector<1x8x8xbf16> to vector<8x8xbf16>
    %c3 = arith.constant 3 : index
    %c0_96 = arith.constant 0 : index
    %c0_97 = arith.constant 0 : index
    %126 = vector.load %arg10[%c3, %c0_96, %c0_97] : memref<4x8x1xf32, #tpu.memory_space<vmem>>, vector<1x8x1xf32>
    %127 = vector.shape_cast %126 : vector<1x8x1xf32> to vector<8x1xf32>
    %c3_98 = arith.constant 3 : index
    %c0_99 = arith.constant 0 : index
    %c0_100 = arith.constant 0 : index
    %128 = vector.load %arg11[%c3_98, %c0_99, %c0_100] : memref<4x8x1xf32, #tpu.memory_space<vmem>>, vector<1x8x1xf32>
    %129 = vector.shape_cast %128 : vector<1x8x1xf32> to vector<8x1xf32>
    %c3_101 = arith.constant 3 : index
    %c0_102 = arith.constant 0 : index
    %c0_103 = arith.constant 0 : index
    %130 = vector.load %arg12[%c3_101, %c0_102, %c0_103] : memref<4x8x8xf32, #tpu.memory_space<vmem>>, vector<1x8x8xf32>
    %131 = vector.shape_cast %130 : vector<1x8x8xf32> to vector<8x8xf32>
    %cst_104 = arith.constant dense<0.000000e+00> : vector<8x8xf32>
    %132 = tpu.matmul %121, %123, %cst_104 {dimension_numbers = #tpu.dot_dimension_numbers<[1], [1], [0], [0], [0, 0, 1, 0], [], []>} : vector<8x8xbf16>, vector<8x8xbf16>, vector<8x8xf32> -> vector<8x8xf32>
    %cst_105 = arith.constant dense<0xFF800000> : vector<8xf32>
    %133 = vector.multi_reduction <maximumf>, %132, %cst_105 [1] : vector<8x8xf32> to vector<8xf32>
    %134 = vector.shape_cast %133 : vector<8xf32> to vector<8x1xf32>
    %135 = arith.maximumf %127, %134 : vector<8x1xf32>
    %136 = arith.subf %127, %135 : vector<8x1xf32>
    %137 = math.exp %136 : vector<8x1xf32>
    %138 = vector.broadcast %135 : vector<8x1xf32> to vector<8x8xf32>
    %139 = arith.subf %132, %138 : vector<8x8xf32>
    %140 = math.exp %139 : vector<8x8xf32>
    %141 = arith.mulf %137, %129 : vector<8x1xf32>
    %cst_106 = arith.constant dense<0.000000e+00> : vector<8xf32>
    %142 = vector.multi_reduction <add>, %140, %cst_106 [1] : vector<8x8xf32> to vector<8xf32>
    %143 = vector.shape_cast %142 : vector<8xf32> to vector<8x1xf32>
    %144 = arith.addf %141, %143 : vector<8x1xf32>
    %145 = vector.broadcast %137 : vector<8x1xf32> to vector<8x8xf32>
    %146 = arith.mulf %145, %131 : vector<8x8xf32>
    %147 = arith.truncf %140 : vector<8x8xf32> to vector<8x8xbf16>
    %cst_107 = arith.constant dense<0.000000e+00> : vector<8x8xf32>
    %148 = tpu.matmul %147, %125, %cst_107 {dimension_numbers = #tpu.dot_dimension_numbers<[1], [0], [0], [1], [0, 0, 1, 1], [], []>} : vector<8x8xbf16>, vector<8x8xbf16>, vector<8x8xf32> -> vector<8x8xf32>
    %149 = arith.addf %146, %148 : vector<8x8xf32>
    %c3_108 = arith.constant 3 : index
    %c0_109 = arith.constant 0 : index
    %c0_110 = arith.constant 0 : index
    %150 = vector.load %arg10[%c3_108, %c0_109, %c0_110] : memref<4x8x1xf32, #tpu.memory_space<vmem>>, vector<1x8x1xf32>
    %151 = vector.shape_cast %150 : vector<1x8x1xf32> to vector<8x1xf32>
    %152 = vector.shape_cast %135 : vector<8x1xf32> to vector<1x8x1xf32>
    tpu.vector_store %arg10[%c3_108, %c0_109, %c0_110], %152 {strides = array<i32>} : memref<4x8x1xf32, #tpu.memory_space<vmem>>, vector<1x8x1xf32>,
    %c3_111 = arith.constant 3 : index
    %c0_112 = arith.constant 0 : index
    %c0_113 = arith.constant 0 : index
    %153 = vector.load %arg11[%c3_111, %c0_112, %c0_113] : memref<4x8x1xf32, #tpu.memory_space<vmem>>, vector<1x8x1xf32>
    %154 = vector.shape_cast %153 : vector<1x8x1xf32> to vector<8x1xf32>
    %155 = vector.shape_cast %144 : vector<8x1xf32> to vector<1x8x1xf32>
    tpu.vector_store %arg11[%c3_111, %c0_112, %c0_113], %155 {strides = array<i32>} : memref<4x8x1xf32, #tpu.memory_space<vmem>>, vector<1x8x1xf32>,
    %c3_114 = arith.constant 3 : index
    %c0_115 = arith.constant 0 : index
    %c0_116 = arith.constant 0 : index
    %156 = vector.load %arg12[%c3_114, %c0_115, %c0_116] : memref<4x8x8xf32, #tpu.memory_space<vmem>>, vector<1x8x8xf32>
    %157 = vector.shape_cast %156 : vector<1x8x8xf32> to vector<8x8xf32>
    %158 = vector.shape_cast %149 : vector<8x8xf32> to vector<1x8x8xf32>
    tpu.vector_store %arg12[%c3_114, %c0_115, %c0_116], %158 {strides = array<i32>} : memref<4x8x8xf32, #tpu.memory_space<vmem>>, vector<1x8x8xf32>,
    %c0_i32_117 = arith.constant 0 : i32
    %159 = arith.cmpi eq, %arg2, %c0_i32_117 : i32
    %160 = arith.extui %159 : i1 to i32
    %c0_i32_118 = arith.constant 0 : i32
    %161 = arith.cmpi ne, %160, %c0_i32_118 : i32
    scf.if %161 {
      %cst_119 = arith.constant 0.000000e+00 : f32
      %162 = vector.broadcast %cst_119 : f32 to vector<8x32xf32>
      %c0_120 = arith.constant 0 : index
      %c0_121 = arith.constant 0 : index
      %c0_122 = arith.constant 0 : index
      %163 = vector.load %arg12[%c0_120, %c0_121, %c0_122] : memref<4x8x8xf32, #tpu.memory_space<vmem>>, vector<1x8x8xf32>
      %164 = vector.shape_cast %163 : vector<1x8x8xf32> to vector<8x8xf32>
      %c0_123 = arith.constant 0 : index
      %c0_124 = arith.constant 0 : index
      %c0_125 = arith.constant 0 : index
      %165 = vector.load %arg11[%c0_123, %c0_124, %c0_125] : memref<4x8x1xf32, #tpu.memory_space<vmem>>, vector<1x8x1xf32>
      %166 = vector.shape_cast %165 : vector<1x8x1xf32> to vector<8x1xf32>
      %167 = tpu.reciprocal %166 {approx = true} : vector<8x1xf32> -> vector<8x1xf32>
      %168 = vector.broadcast %167 : vector<8x1xf32> to vector<8x8xf32>
      %169 = arith.mulf %164, %168 : vector<8x8xf32>
      %170 = arith.truncf %169 : vector<8x8xf32> to vector<8x8xbf16>
      %c0_126 = arith.constant 0 : index
      %c0_127 = arith.constant 0 : index
      %c0_128 = arith.constant 0 : index
      %171 = vector.load %arg7[%c0_126, %c0_127, %c0_128] : memref<4x8x32xbf16, #tpu.memory_space<vmem>>, vector<1x8x32xbf16>
      %172 = vector.shape_cast %171 : vector<1x8x32xbf16> to vector<8x32xbf16>
      %cst_129 = arith.constant dense<0.000000e+00> : vector<8x32xf32>
      %173 = tpu.matmul %170, %172, %cst_129 {dimension_numbers = #tpu.dot_dimension_numbers<[1], [0], [0], [1], [0, 0, 1, 1], [], []>} : vector<8x8xbf16>, vector<8x32xbf16>, vector<8x32xf32> -> vector<8x32xf32>
      %174 = arith.addf %162, %173 : vector<8x32xf32>
      %c1_130 = arith.constant 1 : index
      %c0_131 = arith.constant 0 : index
      %c0_132 = arith.constant 0 : index
      %175 = vector.load %arg12[%c1_130, %c0_131, %c0_132] : memref<4x8x8xf32, #tpu.memory_space<vmem>>, vector<1x8x8xf32>
      %176 = vector.shape_cast %175 : vector<1x8x8xf32> to vector<8x8xf32>
      %c1_133 = arith.constant 1 : index
      %c0_134 = arith.constant 0 : index
      %c0_135 = arith.constant 0 : index
      %177 = vector.load %arg11[%c1_133, %c0_134, %c0_135] : memref<4x8x1xf32, #tpu.memory_space<vmem>>, vector<1x8x1xf32>
      %178 = vector.shape_cast %177 : vector<1x8x1xf32> to vector<8x1xf32>
      %179 = tpu.reciprocal %178 {approx = true} : vector<8x1xf32> -> vector<8x1xf32>
      %180 = vector.broadcast %179 : vector<8x1xf32> to vector<8x8xf32>
      %181 = arith.mulf %176, %180 : vector<8x8xf32>
      %182 = arith.truncf %181 : vector<8x8xf32> to vector<8x8xbf16>
      %c1_136 = arith.constant 1 : index
      %c0_137 = arith.constant 0 : index
      %c0_138 = arith.constant 0 : index
      %183 = vector.load %arg7[%c1_136, %c0_137, %c0_138] : memref<4x8x32xbf16, #tpu.memory_space<vmem>>, vector<1x8x32xbf16>
      %184 = vector.shape_cast %183 : vector<1x8x32xbf16> to vector<8x32xbf16>
      %cst_139 = arith.constant dense<0.000000e+00> : vector<8x32xf32>
      %185 = tpu.matmul %182, %184, %cst_139 {dimension_numbers = #tpu.dot_dimension_numbers<[1], [0], [0], [1], [0, 0, 1, 1], [], []>} : vector<8x8xbf16>, vector<8x32xbf16>, vector<8x32xf32> -> vector<8x32xf32>
      %186 = arith.addf %174, %185 : vector<8x32xf32>
      %c2_140 = arith.constant 2 : index
      %c0_141 = arith.constant 0 : index
      %c0_142 = arith.constant 0 : index
      %187 = vector.load %arg12[%c2_140, %c0_141, %c0_142] : memref<4x8x8xf32, #tpu.memory_space<vmem>>, vector<1x8x8xf32>
      %188 = vector.shape_cast %187 : vector<1x8x8xf32> to vector<8x8xf32>
      %c2_143 = arith.constant 2 : index
      %c0_144 = arith.constant 0 : index
      %c0_145 = arith.constant 0 : index
      %189 = vector.load %arg11[%c2_143, %c0_144, %c0_145] : memref<4x8x1xf32, #tpu.memory_space<vmem>>, vector<1x8x1xf32>
      %190 = vector.shape_cast %189 : vector<1x8x1xf32> to vector<8x1xf32>
      %191 = tpu.reciprocal %190 {approx = true} : vector<8x1xf32> -> vector<8x1xf32>
      %192 = vector.broadcast %191 : vector<8x1xf32> to vector<8x8xf32>
      %193 = arith.mulf %188, %192 : vector<8x8xf32>
      %194 = arith.truncf %193 : vector<8x8xf32> to vector<8x8xbf16>
      %c2_146 = arith.constant 2 : index
      %c0_147 = arith.constant 0 : index
      %c0_148 = arith.constant 0 : index
      %195 = vector.load %arg7[%c2_146, %c0_147, %c0_148] : memref<4x8x32xbf16, #tpu.memory_space<vmem>>, vector<1x8x32xbf16>
      %196 = vector.shape_cast %195 : vector<1x8x32xbf16> to vector<8x32xbf16>
      %cst_149 = arith.constant dense<0.000000e+00> : vector<8x32xf32>
      %197 = tpu.matmul %194, %196, %cst_149 {dimension_numbers = #tpu.dot_dimension_numbers<[1], [0], [0], [1], [0, 0, 1, 1], [], []>} : vector<8x8xbf16>, vector<8x32xbf16>, vector<8x32xf32> -> vector<8x32xf32>
      %198 = arith.addf %186, %197 : vector<8x32xf32>
      %c3_150 = arith.constant 3 : index
      %c0_151 = arith.constant 0 : index
      %c0_152 = arith.constant 0 : index
      %199 = vector.load %arg12[%c3_150, %c0_151, %c0_152] : memref<4x8x8xf32, #tpu.memory_space<vmem>>, vector<1x8x8xf32>
      %200 = vector.shape_cast %199 : vector<1x8x8xf32> to vector<8x8xf32>
      %c3_153 = arith.constant 3 : index
      %c0_154 = arith.constant 0 : index
      %c0_155 = arith.constant 0 : index
      %201 = vector.load %arg11[%c3_153, %c0_154, %c0_155] : memref<4x8x1xf32, #tpu.memory_space<vmem>>, vector<1x8x1xf32>
      %202 = vector.shape_cast %201 : vector<1x8x1xf32> to vector<8x1xf32>
      %203 = tpu.reciprocal %202 {approx = true} : vector<8x1xf32> -> vector<8x1xf32>
      %204 = vector.broadcast %203 : vector<8x1xf32> to vector<8x8xf32>
      %205 = arith.mulf %200, %204 : vector<8x8xf32>
      %206 = arith.truncf %205 : vector<8x8xf32> to vector<8x8xbf16>
      %c3_156 = arith.constant 3 : index
      %c0_157 = arith.constant 0 : index
      %c0_158 = arith.constant 0 : index
      %207 = vector.load %arg7[%c3_156, %c0_157, %c0_158] : memref<4x8x32xbf16, #tpu.memory_space<vmem>>, vector<1x8x32xbf16>
      %208 = vector.shape_cast %207 : vector<1x8x32xbf16> to vector<8x32xbf16>
      %cst_159 = arith.constant dense<0.000000e+00> : vector<8x32xf32>
      %209 = tpu.matmul %206, %208, %cst_159 {dimension_numbers = #tpu.dot_dimension_numbers<[1], [0], [0], [1], [0, 0, 1, 1], [], []>} : vector<8x8xbf16>, vector<8x32xbf16>, vector<8x32xf32> -> vector<8x32xf32>
      %210 = arith.addf %198, %209 : vector<8x32xf32>
      %c0_160 = arith.constant 0 : index
      %c0_161 = arith.constant 0 : index
      %c0_162 = arith.constant 0 : index
      %211 = vector.load %arg3[%c0_160, %c0_161, %c0_162] : memref<1x8x32xbf16, #tpu.memory_space<vmem>>, vector<1x8x32xbf16>
      %212 = vector.shape_cast %211 : vector<1x8x32xbf16> to vector<8x32xbf16>
      %213 = arith.extf %212 : vector<8x32xbf16> to vector<8x32xf32>
      %214 = arith.addf %213, %210 : vector<8x32xf32>
      %c0_163 = arith.constant 0 : index
      %c0_164 = arith.constant 0 : index
      %215 = vector.load %arg8[%c0_163, %c0_164] : memref<1x32xf32, #tpu.memory_space<vmem>>, vector<1x32xf32>
      %216 = vector.shape_cast %215 : vector<1x32xf32> to vector<32xf32>
      %217 = vector.shape_cast %216 : vector<32xf32> to vector<1x32xf32>
      %218 = vector.broadcast %217 : vector<1x32xf32> to vector<8x32xf32>
      %219 = arith.addf %214, %218 : vector<8x32xf32>
      %220 = arith.truncf %219 : vector<8x32xf32> to vector<8x32xbf16>
      %c0_165 = arith.constant 0 : index
      %c0_166 = arith.constant 0 : index
      %c0_167 = arith.constant 0 : index
      %221 = vector.load %arg9[%c0_165, %c0_166, %c0_167] : memref<1x8x32xbf16, #tpu.memory_space<vmem>>, vector<1x8x32xbf16>
      %222 = vector.shape_cast %221 : vector<1x8x32xbf16> to vector<8x32xbf16>
      %223 = vector.shape_cast %220 : vector<8x32xbf16> to vector<1x8x32xbf16>
      tpu.vector_store %arg9[%c0_165, %c0_166, %c0_167], %223 {strides = array<i32>} : memref<1x8x32xbf16, #tpu.memory_space<vmem>>, vector<1x8x32xbf16>,
    } else {
    }
    return
  }
  func.func @transform_0(%arg0: i32, %arg1: i32, %arg2: i32) -> (i32, i32, i32) {
    %c0_i32 = arith.constant 0 : i32
    %c0_i32_0 = arith.constant 0 : i32
    return %arg0, %arg1, %c0_i32 : i32, i32, i32
  }
  func.func @transform_1(%arg0: i32, %arg1: i32, %arg2: i32) -> (i32, i32, i32) {
    %c0_i32 = arith.constant 0 : i32
    %c0_i32_0 = arith.constant 0 : i32
    return %arg0, %arg1, %c0_i32 : i32, i32, i32
  }
  func.func @transform_2(%arg0: i32, %arg1: i32, %arg2: i32) -> (i32, i32, i32) {
    %c0_i32 = arith.constant 0 : i32
    %c0_i32_0 = arith.constant 0 : i32
    return %arg0, %arg2, %c0_i32 : i32, i32, i32
  }
  func.func @transform_3(%arg0: i32, %arg1: i32, %arg2: i32) -> (i32, i32, i32) {
    %c0_i32 = arith.constant 0 : i32
    %c0_i32_0 = arith.constant 0 : i32
    return %arg0, %arg2, %c0_i32 : i32, i32, i32
  }
  func.func @transform_4(%arg0: i32, %arg1: i32, %arg2: i32) -> (i32, i32, i32) {
    %c0_i32 = arith.constant 0 : i32
    %c0_i32_0 = arith.constant 0 : i32
    %c0_i32_1 = arith.constant 0 : i32
    %c0_i32_2 = arith.constant 0 : i32
    return %c0_i32, %c0_i32_0, %c0_i32_1 : i32, i32, i32
  }
  func.func @transform_5(%arg0: i32, %arg1: i32, %arg2: i32) -> (i32, i32) {
    %c0_i32 = arith.constant 0 : i32
    %c0_i32_0 = arith.constant 0 : i32
    %c0_i32_1 = arith.constant 0 : i32
    return %c0_i32, %c0_i32_0 : i32, i32
  }
  func.func @transform_6(%arg0: i32, %arg1: i32, %arg2: i32) -> (i32, i32, i32) {
    %c0_i32 = arith.constant 0 : i32
    %c0_i32_0 = arith.constant 0 : i32
    return %arg0, %arg1, %c0_i32 : i32, i32, i32
  }
}

module attributes {stable_mosaic.version = 11 : i64} {
  func.func @qkv_proj_kernel(%arg0: i32, %arg1: i32, %arg2: memref<1x8x32xbf16, #tpu.memory_space<vmem>>, %arg3: memref<1x32xf32, #tpu.memory_space<vmem>>, %arg4: memref<32x32xbf16, #tpu.memory_space<vmem>>, %arg5: memref<1x32xf32, #tpu.memory_space<vmem>>, %arg6: memref<32x32xbf16, #tpu.memory_space<vmem>>, %arg7: memref<1x32xf32, #tpu.memory_space<vmem>>, %arg8: memref<32x32xbf16, #tpu.memory_space<vmem>>, %arg9: memref<1x32xf32, #tpu.memory_space<vmem>>, %arg10: memref<1x8x32xbf16, #tpu.memory_space<vmem>>, %arg11: memref<1x8x32xbf16, #tpu.memory_space<vmem>>, %arg12: memref<1x8x32xbf16, #tpu.memory_space<vmem>>) attributes {dimension_semantics = [#tpu.dimension_semantics<parallel>, #tpu.dimension_semantics<parallel>], iteration_bounds = array<i64: 2, 1>, scalar_prefetch = 0 : i64, scratch_operands = 0 : i64, tpu.core_type = #tpu.core_type<tc>, window_params = [{transform_indices = @transform_0, window_bounds = array<i64: 1, 8, 32>}, {pipeline_mode = #tpu.pipeline_mode<synchronous>, transform_indices = @transform_1, window_bounds = array<i64: 1, 32>}, {pipeline_mode = #tpu.pipeline_mode<synchronous>, transform_indices = @transform_2, window_bounds = array<i64: 32, 32>}, {pipeline_mode = #tpu.pipeline_mode<synchronous>, transform_indices = @transform_3, window_bounds = array<i64: 1, 32>}, {pipeline_mode = #tpu.pipeline_mode<synchronous>, transform_indices = @transform_4, window_bounds = array<i64: 32, 32>}, {pipeline_mode = #tpu.pipeline_mode<synchronous>, transform_indices = @transform_5, window_bounds = array<i64: 1, 32>}, {pipeline_mode = #tpu.pipeline_mode<synchronous>, transform_indices = @transform_6, window_bounds = array<i64: 32, 32>}, {pipeline_mode = #tpu.pipeline_mode<synchronous>, transform_indices = @transform_7, window_bounds = array<i64: 1, 32>}, {transform_indices = @transform_8, window_bounds = array<i64: 1, 8, 32>}, {transform_indices = @transform_9, window_bounds = array<i64: 1, 8, 32>}, {transform_indices = @transform_10, window_bounds = array<i64: 1, 8, 32>}]} {
    %c0 = arith.constant 0 : index
    %c0_0 = arith.constant 0 : index
    %c0_1 = arith.constant 0 : index
    %0 = vector.load %arg2[%c0, %c0_0, %c0_1] : memref<1x8x32xbf16, #tpu.memory_space<vmem>>, vector<1x8x32xbf16>
    %1 = vector.shape_cast %0 : vector<1x8x32xbf16> to vector<8x32xbf16>
    %2 = arith.extf %1 : vector<8x32xbf16> to vector<8x32xf32>
    %c0_2 = arith.constant 0 : index
    %c0_3 = arith.constant 0 : index
    %3 = vector.load %arg3[%c0_2, %c0_3] : memref<1x32xf32, #tpu.memory_space<vmem>>, vector<1x32xf32>
    %4 = vector.shape_cast %3 : vector<1x32xf32> to vector<32xf32>
    %5 = arith.mulf %2, %2 : vector<8x32xf32>
    %cst = arith.constant dense<0.000000e+00> : vector<8xf32>
    %6 = vector.multi_reduction <add>, %5, %cst [1] : vector<8x32xf32> to vector<8xf32>
    %7 = vector.shape_cast %6 : vector<8xf32> to vector<8x1xf32>
    %cst_4 = arith.constant 3.200000e+01 : f32
    %8 = vector.broadcast %cst_4 : f32 to vector<8x1xf32>
    %9 = arith.divf %7, %8 : vector<8x1xf32>
    %cst_5 = arith.constant 1.1920929E-7 : f32
    %10 = vector.broadcast %cst_5 : f32 to vector<8x1xf32>
    %11 = arith.addf %9, %10 : vector<8x1xf32>
    %12 = math.rsqrt %11 : vector<8x1xf32>
    %13 = vector.broadcast %12 : vector<8x1xf32> to vector<8x32xf32>
    %14 = arith.mulf %2, %13 : vector<8x32xf32>
    %15 = vector.shape_cast %4 : vector<32xf32> to vector<1x32xf32>
    %16 = vector.broadcast %15 : vector<1x32xf32> to vector<8x32xf32>
    %17 = arith.mulf %14, %16 : vector<8x32xf32>
    %18 = arith.truncf %17 : vector<8x32xf32> to vector<8x32xbf16>
    %c0_6 = arith.constant 0 : index
    %c0_7 = arith.constant 0 : index
    %19 = vector.load %arg4[%c0_6, %c0_7] : memref<32x32xbf16, #tpu.memory_space<vmem>>, vector<32x32xbf16>
    %cst_8 = arith.constant dense<0.000000e+00> : vector<8x32xf32>
    %20 = tpu.matmul %18, %19, %cst_8 {dimension_numbers = #tpu.dot_dimension_numbers<[1], [0], [0], [1], [0, 0, 1, 1], [], []>} : vector<8x32xbf16>, vector<32x32xbf16>, vector<8x32xf32> -> vector<8x32xf32>
    %c0_9 = arith.constant 0 : index
    %c0_10 = arith.constant 0 : index
    %21 = vector.load %arg5[%c0_9, %c0_10] : memref<1x32xf32, #tpu.memory_space<vmem>>, vector<1x32xf32>
    %22 = vector.shape_cast %21 : vector<1x32xf32> to vector<32xf32>
    %23 = vector.shape_cast %22 : vector<32xf32> to vector<1x32xf32>
    %24 = vector.broadcast %23 : vector<1x32xf32> to vector<8x32xf32>
    %25 = arith.addf %20, %24 : vector<8x32xf32>
    %c0_11 = arith.constant 0 : index
    %c0_12 = arith.constant 0 : index
    %26 = vector.load %arg6[%c0_11, %c0_12] : memref<32x32xbf16, #tpu.memory_space<vmem>>, vector<32x32xbf16>
    %cst_13 = arith.constant dense<0.000000e+00> : vector<8x32xf32>
    %27 = tpu.matmul %18, %26, %cst_13 {dimension_numbers = #tpu.dot_dimension_numbers<[1], [0], [0], [1], [0, 0, 1, 1], [], []>} : vector<8x32xbf16>, vector<32x32xbf16>, vector<8x32xf32> -> vector<8x32xf32>
    %c0_14 = arith.constant 0 : index
    %c0_15 = arith.constant 0 : index
    %28 = vector.load %arg7[%c0_14, %c0_15] : memref<1x32xf32, #tpu.memory_space<vmem>>, vector<1x32xf32>
    %29 = vector.shape_cast %28 : vector<1x32xf32> to vector<32xf32>
    %30 = vector.shape_cast %29 : vector<32xf32> to vector<1x32xf32>
    %31 = vector.broadcast %30 : vector<1x32xf32> to vector<8x32xf32>
    %32 = arith.addf %27, %31 : vector<8x32xf32>
    %c0_16 = arith.constant 0 : index
    %c0_17 = arith.constant 0 : index
    %33 = vector.load %arg8[%c0_16, %c0_17] : memref<32x32xbf16, #tpu.memory_space<vmem>>, vector<32x32xbf16>
    %cst_18 = arith.constant dense<0.000000e+00> : vector<8x32xf32>
    %34 = tpu.matmul %18, %33, %cst_18 {dimension_numbers = #tpu.dot_dimension_numbers<[1], [0], [0], [1], [0, 0, 1, 1], [], []>} : vector<8x32xbf16>, vector<32x32xbf16>, vector<8x32xf32> -> vector<8x32xf32>
    %c0_19 = arith.constant 0 : index
    %c0_20 = arith.constant 0 : index
    %35 = vector.load %arg9[%c0_19, %c0_20] : memref<1x32xf32, #tpu.memory_space<vmem>>, vector<1x32xf32>
    %36 = vector.shape_cast %35 : vector<1x32xf32> to vector<32xf32>
    %37 = vector.shape_cast %36 : vector<32xf32> to vector<1x32xf32>
    %38 = vector.broadcast %37 : vector<1x32xf32> to vector<8x32xf32>
    %39 = arith.addf %34, %38 : vector<8x32xf32>
    %cst_21 = arith.constant 0.353553385 : f32
    %40 = vector.broadcast %cst_21 : f32 to vector<8x32xf32>
    %41 = arith.mulf %25, %40 : vector<8x32xf32>
    %42 = arith.truncf %41 : vector<8x32xf32> to vector<8x32xbf16>
    %c0_22 = arith.constant 0 : index
    %c0_23 = arith.constant 0 : index
    %c0_24 = arith.constant 0 : index
    %43 = vector.load %arg10[%c0_22, %c0_23, %c0_24] : memref<1x8x32xbf16, #tpu.memory_space<vmem>>, vector<1x8x32xbf16>
    %44 = vector.shape_cast %43 : vector<1x8x32xbf16> to vector<8x32xbf16>
    %45 = vector.shape_cast %42 : vector<8x32xbf16> to vector<1x8x32xbf16>
    tpu.vector_store %arg10[%c0_22, %c0_23, %c0_24], %45 {strides = array<i32>} : memref<1x8x32xbf16, #tpu.memory_space<vmem>>, vector<1x8x32xbf16>,
    %46 = arith.truncf %32 : vector<8x32xf32> to vector<8x32xbf16>
    %c0_25 = arith.constant 0 : index
    %c0_26 = arith.constant 0 : index
    %c0_27 = arith.constant 0 : index
    %47 = vector.load %arg11[%c0_25, %c0_26, %c0_27] : memref<1x8x32xbf16, #tpu.memory_space<vmem>>, vector<1x8x32xbf16>
    %48 = vector.shape_cast %47 : vector<1x8x32xbf16> to vector<8x32xbf16>
    %49 = vector.shape_cast %46 : vector<8x32xbf16> to vector<1x8x32xbf16>
    tpu.vector_store %arg11[%c0_25, %c0_26, %c0_27], %49 {strides = array<i32>} : memref<1x8x32xbf16, #tpu.memory_space<vmem>>, vector<1x8x32xbf16>,
    %50 = arith.truncf %39 : vector<8x32xf32> to vector<8x32xbf16>
    %c0_28 = arith.constant 0 : index
    %c0_29 = arith.constant 0 : index
    %c0_30 = arith.constant 0 : index
    %51 = vector.load %arg12[%c0_28, %c0_29, %c0_30] : memref<1x8x32xbf16, #tpu.memory_space<vmem>>, vector<1x8x32xbf16>
    %52 = vector.shape_cast %51 : vector<1x8x32xbf16> to vector<8x32xbf16>
    %53 = vector.shape_cast %50 : vector<8x32xbf16> to vector<1x8x32xbf16>
    tpu.vector_store %arg12[%c0_28, %c0_29, %c0_30], %53 {strides = array<i32>} : memref<1x8x32xbf16, #tpu.memory_space<vmem>>, vector<1x8x32xbf16>,
    return
  }
  func.func @transform_0(%arg0: i32, %arg1: i32) -> (i32, i32, i32) {
    %c0_i32 = arith.constant 0 : i32
    %c0_i32_0 = arith.constant 0 : i32
    return %arg0, %arg1, %c0_i32 : i32, i32, i32
  }
  func.func @transform_1(%arg0: i32, %arg1: i32) -> (i32, i32) {
    %c0_i32 = arith.constant 0 : i32
    %c0_i32_0 = arith.constant 0 : i32
    %c0_i32_1 = arith.constant 0 : i32
    return %c0_i32, %c0_i32_0 : i32, i32
  }
  func.func @transform_2(%arg0: i32, %arg1: i32) -> (i32, i32) {
    %c0_i32 = arith.constant 0 : i32
    %c0_i32_0 = arith.constant 0 : i32
    %c0_i32_1 = arith.constant 0 : i32
    return %c0_i32, %c0_i32_0 : i32, i32
  }
  func.func @transform_3(%arg0: i32, %arg1: i32) -> (i32, i32) {
    %c0_i32 = arith.constant 0 : i32
    %c0_i32_0 = arith.constant 0 : i32
    %c0_i32_1 = arith.constant 0 : i32
    return %c0_i32, %c0_i32_0 : i32, i32
  }
  func.func @transform_4(%arg0: i32, %arg1: i32) -> (i32, i32) {
    %c0_i32 = arith.constant 0 : i32
    %c0_i32_0 = arith.constant 0 : i32
    %c0_i32_1 = arith.constant 0 : i32
    return %c0_i32, %c0_i32_0 : i32, i32
  }
  func.func @transform_5(%arg0: i32, %arg1: i32) -> (i32, i32) {
    %c0_i32 = arith.constant 0 : i32
    %c0_i32_0 = arith.constant 0 : i32
    %c0_i32_1 = arith.constant 0 : i32
    return %c0_i32, %c0_i32_0 : i32, i32
  }
  func.func @transform_6(%arg0: i32, %arg1: i32) -> (i32, i32) {
    %c0_i32 = arith.constant 0 : i32
    %c0_i32_0 = arith.constant 0 : i32
    %c0_i32_1 = arith.constant 0 : i32
    return %c0_i32, %c0_i32_0 : i32, i32
  }
  func.func @transform_7(%arg0: i32, %arg1: i32) -> (i32, i32) {
    %c0_i32 = arith.constant 0 : i32
    %c0_i32_0 = arith.constant 0 : i32
    %c0_i32_1 = arith.constant 0 : i32
    return %c0_i32, %c0_i32_0 : i32, i32
  }
  func.func @transform_8(%arg0: i32, %arg1: i32) -> (i32, i32, i32) {
    %c0_i32 = arith.constant 0 : i32
    %c0_i32_0 = arith.constant 0 : i32
    return %arg0, %arg1, %c0_i32 : i32, i32, i32
  }
  func.func @transform_9(%arg0: i32, %arg1: i32) -> (i32, i32, i32) {
    %c0_i32 = arith.constant 0 : i32
    %c0_i32_0 = arith.constant 0 : i32
    return %arg0, %arg1, %c0_i32 : i32, i32, i32
  }
  func.func @transform_10(%arg0: i32, %arg1: i32) -> (i32, i32, i32) {
    %c0_i32 = arith.constant 0 : i32
    %c0_i32_0 = arith.constant 0 : i32
    return %arg0, %arg1, %c0_i32 : i32, i32, i32
  }
}

module attributes {stable_mosaic.version = 11 : i64} {
  func.func @mlp_glu_kernel(%arg0: i32, %arg1: i32, %arg2: memref<1x8x32xbf16, #tpu.memory_space<vmem>>, %arg3: memref<1x32xf32, #tpu.memory_space<vmem>>, %arg4: memref<32x64xbf16, #tpu.memory_space<vmem>>, %arg5: memref<1x64xf32, #tpu.memory_space<vmem>>, %arg6: memref<32x64xbf16, #tpu.memory_space<vmem>>, %arg7: memref<1x64xf32, #tpu.memory_space<vmem>>, %arg8: memref<64x32xbf16, #tpu.memory_space<vmem>>, %arg9: memref<1x32xf32, #tpu.memory_space<vmem>>, %arg10: memref<1x8x32xbf16, #tpu.memory_space<vmem>>) attributes {dimension_semantics = [#tpu.dimension_semantics<parallel>, #tpu.dimension_semantics<parallel>], iteration_bounds = array<i64: 2, 1>, scalar_prefetch = 0 : i64, scratch_operands = 0 : i64, tpu.core_type = #tpu.core_type<tc>, window_params = [{transform_indices = @transform_0, window_bounds = array<i64: 1, 8, 32>}, {pipeline_mode = #tpu.pipeline_mode<synchronous>, transform_indices = @transform_1, window_bounds = array<i64: 1, 32>}, {pipeline_mode = #tpu.pipeline_mode<synchronous>, transform_indices = @transform_2, window_bounds = array<i64: 32, 64>}, {pipeline_mode = #tpu.pipeline_mode<synchronous>, transform_indices = @transform_3, window_bounds = array<i64: 1, 64>}, {pipeline_mode = #tpu.pipeline_mode<synchronous>, transform_indices = @transform_4, window_bounds = array<i64: 32, 64>}, {pipeline_mode = #tpu.pipeline_mode<synchronous>, transform_indices = @transform_5, window_bounds = array<i64: 1, 64>}, {pipeline_mode = #tpu.pipeline_mode<synchronous>, transform_indices = @transform_6, window_bounds = array<i64: 64, 32>}, {pipeline_mode = #tpu.pipeline_mode<synchronous>, transform_indices = @transform_7, window_bounds = array<i64: 1, 32>}, {transform_indices = @transform_8, window_bounds = array<i64: 1, 8, 32>}]} {
    %c0 = arith.constant 0 : index
    %c0_0 = arith.constant 0 : index
    %c0_1 = arith.constant 0 : index
    %0 = vector.load %arg2[%c0, %c0_0, %c0_1] : memref<1x8x32xbf16, #tpu.memory_space<vmem>>, vector<1x8x32xbf16>
    %1 = vector.shape_cast %0 : vector<1x8x32xbf16> to vector<8x32xbf16>
    %2 = arith.extf %1 : vector<8x32xbf16> to vector<8x32xf32>
    %c0_2 = arith.constant 0 : index
    %c0_3 = arith.constant 0 : index
    %3 = vector.load %arg3[%c0_2, %c0_3] : memref<1x32xf32, #tpu.memory_space<vmem>>, vector<1x32xf32>
    %4 = vector.shape_cast %3 : vector<1x32xf32> to vector<32xf32>
    %5 = arith.mulf %2, %2 : vector<8x32xf32>
    %cst = arith.constant dense<0.000000e+00> : vector<8xf32>
    %6 = vector.multi_reduction <add>, %5, %cst [1] : vector<8x32xf32> to vector<8xf32>
    %7 = vector.shape_cast %6 : vector<8xf32> to vector<8x1xf32>
    %cst_4 = arith.constant 3.200000e+01 : f32
    %8 = vector.broadcast %cst_4 : f32 to vector<8x1xf32>
    %9 = arith.divf %7, %8 : vector<8x1xf32>
    %cst_5 = arith.constant 1.1920929E-7 : f32
    %10 = vector.broadcast %cst_5 : f32 to vector<8x1xf32>
    %11 = arith.addf %9, %10 : vector<8x1xf32>
    %12 = math.rsqrt %11 : vector<8x1xf32>
    %13 = vector.broadcast %12 : vector<8x1xf32> to vector<8x32xf32>
    %14 = arith.mulf %2, %13 : vector<8x32xf32>
    %15 = vector.shape_cast %4 : vector<32xf32> to vector<1x32xf32>
    %16 = vector.broadcast %15 : vector<1x32xf32> to vector<8x32xf32>
    %17 = arith.mulf %14, %16 : vector<8x32xf32>
    %18 = arith.truncf %17 : vector<8x32xf32> to vector<8x32xbf16>
    %c0_6 = arith.constant 0 : index
    %c0_7 = arith.constant 0 : index
    %19 = vector.load %arg4[%c0_6, %c0_7] : memref<32x64xbf16, #tpu.memory_space<vmem>>, vector<32x64xbf16>
    %cst_8 = arith.constant dense<0.000000e+00> : vector<8x64xf32>
    %20 = tpu.matmul %18, %19, %cst_8 {dimension_numbers = #tpu.dot_dimension_numbers<[1], [0], [0], [1], [0, 0, 1, 1], [], []>} : vector<8x32xbf16>, vector<32x64xbf16>, vector<8x64xf32> -> vector<8x64xf32>
    %c0_9 = arith.constant 0 : index
    %c0_10 = arith.constant 0 : index
    %21 = vector.load %arg5[%c0_9, %c0_10] : memref<1x64xf32, #tpu.memory_space<vmem>>, vector<1x64xf32>
    %22 = vector.shape_cast %21 : vector<1x64xf32> to vector<64xf32>
    %23 = vector.shape_cast %22 : vector<64xf32> to vector<1x64xf32>
    %24 = vector.broadcast %23 : vector<1x64xf32> to vector<8x64xf32>
    %25 = arith.addf %20, %24 : vector<8x64xf32>
    %c0_11 = arith.constant 0 : index
    %c0_12 = arith.constant 0 : index
    %26 = vector.load %arg6[%c0_11, %c0_12] : memref<32x64xbf16, #tpu.memory_space<vmem>>, vector<32x64xbf16>
    %cst_13 = arith.constant dense<0.000000e+00> : vector<8x64xf32>
    %27 = tpu.matmul %18, %26, %cst_13 {dimension_numbers = #tpu.dot_dimension_numbers<[1], [0], [0], [1], [0, 0, 1, 1], [], []>} : vector<8x32xbf16>, vector<32x64xbf16>, vector<8x64xf32> -> vector<8x64xf32>
    %c0_14 = arith.constant 0 : index
    %c0_15 = arith.constant 0 : index
    %28 = vector.load %arg7[%c0_14, %c0_15] : memref<1x64xf32, #tpu.memory_space<vmem>>, vector<1x64xf32>
    %29 = vector.shape_cast %28 : vector<1x64xf32> to vector<64xf32>
    %30 = vector.shape_cast %29 : vector<64xf32> to vector<1x64xf32>
    %31 = vector.broadcast %30 : vector<1x64xf32> to vector<8x64xf32>
    %32 = arith.addf %27, %31 : vector<8x64xf32>
    %cst_16 = arith.constant 2.000000e+01 : f32
    %33 = vector.broadcast %cst_16 : f32 to vector<8x64xf32>
    %34 = arith.cmpf ogt, %25, %33 : vector<8x64xf32>
    %cst_17 = arith.constant 2.000000e+01 : f32
    %35 = vector.broadcast %cst_17 : f32 to vector<8x64xf32>
    %36 = arith.minimumf %25, %35 : vector<8x64xf32>
    %37 = math.exp %36 : vector<8x64xf32>
    %38 = math.log1p %37 : vector<8x64xf32>
    %39 = arith.select %34, %25, %38 : vector<8x64xi1>, vector<8x64xf32>
    %40 = math.tanh %39 : vector<8x64xf32>
    %41 = arith.mulf %25, %40 : vector<8x64xf32>
    %42 = arith.mulf %41, %32 : vector<8x64xf32>
    %43 = arith.truncf %42 : vector<8x64xf32> to vector<8x64xbf16>
    %c0_18 = arith.constant 0 : index
    %c0_19 = arith.constant 0 : index
    %44 = vector.load %arg8[%c0_18, %c0_19] : memref<64x32xbf16, #tpu.memory_space<vmem>>, vector<64x32xbf16>
    %cst_20 = arith.constant dense<0.000000e+00> : vector<8x32xf32>
    %45 = tpu.matmul %43, %44, %cst_20 {dimension_numbers = #tpu.dot_dimension_numbers<[1], [0], [0], [1], [0, 0, 1, 1], [], []>} : vector<8x64xbf16>, vector<64x32xbf16>, vector<8x32xf32> -> vector<8x32xf32>
    %c0_21 = arith.constant 0 : index
    %c0_22 = arith.constant 0 : index
    %46 = vector.load %arg9[%c0_21, %c0_22] : memref<1x32xf32, #tpu.memory_space<vmem>>, vector<1x32xf32>
    %47 = vector.shape_cast %46 : vector<1x32xf32> to vector<32xf32>
    %48 = vector.shape_cast %47 : vector<32xf32> to vector<1x32xf32>
    %49 = vector.broadcast %48 : vector<1x32xf32> to vector<8x32xf32>
    %50 = arith.addf %45, %49 : vector<8x32xf32>
    %51 = arith.addf %2, %50 : vector<8x32xf32>
    %52 = arith.truncf %51 : vector<8x32xf32> to vector<8x32xbf16>
    %c0_23 = arith.constant 0 : index
    %c0_24 = arith.constant 0 : index
    %c0_25 = arith.constant 0 : index
    %53 = vector.load %arg10[%c0_23, %c0_24, %c0_25] : memref<1x8x32xbf16, #tpu.memory_space<vmem>>, vector<1x8x32xbf16>
    %54 = vector.shape_cast %53 : vector<1x8x32xbf16> to vector<8x32xbf16>
    %55 = vector.shape_cast %52 : vector<8x32xbf16> to vector<1x8x32xbf16>
    tpu.vector_store %arg10[%c0_23, %c0_24, %c0_25], %55 {strides = array<i32>} : memref<1x8x32xbf16, #tpu.memory_space<vmem>>, vector<1x8x32xbf16>,
    return
  }
  func.func @transform_0(%arg0: i32, %arg1: i32) -> (i32, i32, i32) {
    %c0_i32 = arith.constant 0 : i32
    %c0_i32_0 = arith.constant 0 : i32
    return %arg0, %arg1, %c0_i32 : i32, i32, i32
  }
  func.func @transform_1(%arg0: i32, %arg1: i32) -> (i32, i32) {
    %c0_i32 = arith.constant 0 : i32
    %c0_i32_0 = arith.constant 0 : i32
    %c0_i32_1 = arith.constant 0 : i32
    return %c0_i32, %c0_i32_0 : i32, i32
  }
  func.func @transform_2(%arg0: i32, %arg1: i32) -> (i32, i32) {
    %c0_i32 = arith.constant 0 : i32
    %c0_i32_0 = arith.constant 0 : i32
    %c0_i32_1 = arith.constant 0 : i32
    return %c0_i32, %c0_i32_0 : i32, i32
  }
  func.func @transform_3(%arg0: i32, %arg1: i32) -> (i32, i32) {
    %c0_i32 = arith.constant 0 : i32
    %c0_i32_0 = arith.constant 0 : i32
    %c0_i32_1 = arith.constant 0 : i32
    return %c0_i32, %c0_i32_0 : i32, i32
  }
  func.func @transform_4(%arg0: i32, %arg1: i32) -> (i32, i32) {
    %c0_i32 = arith.constant 0 : i32
    %c0_i32_0 = arith.constant 0 : i32
    %c0_i32_1 = arith.constant 0 : i32
    return %c0_i32, %c0_i32_0 : i32, i32
  }
  func.func @transform_5(%arg0: i32, %arg1: i32) -> (i32, i32) {
    %c0_i32 = arith.constant 0 : i32
    %c0_i32_0 = arith.constant 0 : i32
    %c0_i32_1 = arith.constant 0 : i32
    return %c0_i32, %c0_i32_0 : i32, i32
  }
  func.func @transform_6(%arg0: i32, %arg1: i32) -> (i32, i32) {
    %c0_i32 = arith.constant 0 : i32
    %c0_i32_0 = arith.constant 0 : i32
    %c0_i32_1 = arith.constant 0 : i32
    return %c0_i32, %c0_i32_0 : i32, i32
  }
  func.func @transform_7(%arg0: i32, %arg1: i32) -> (i32, i32) {
    %c0_i32 = arith.constant 0 : i32
    %c0_i32_0 = arith.constant 0 : i32
    %c0_i32_1 = arith.constant 0 : i32
    return %c0_i32, %c0_i32_0 : i32, i32
  }
  func.func @transform_8(%arg0: i32, %arg1: i32) -> (i32, i32, i32) {
    %c0_i32 = arith.constant 0 : i32
    %c0_i32_0 = arith.constant 0 : i32
    return %arg0, %arg1, %c0_i32 : i32, i32, i32
  }
}

</mosaic_0001>

<llo_original>
// kernel: transformer_layer.6
$region0: #{transformer_layer.6}
  #allocation0 [shape = 'u32[]', space=smem, size = 0x4, offset = 0x4, fixed_abs, tag = 'smem constant byte address 0x4 - core index']
  #allocation1 [shape = 'u32[144,128]{1,0:T(1,128)}', space=vmem, size = 0x12000, scoped, tag = 'internal scratch']
  %s0 = inlined_call_operand.vmem [shape: bf16[2,8,32], index: 0, kind: input, shape index: {}]
  %s1 = inlined_call_operand.vmem [shape: f32[1,32], index: 1, kind: input, shape index: {}]
  %s2 = inlined_call_operand.vmem [shape: bf16[32,32], index: 2, kind: input, shape index: {}]
  %s3 = inlined_call_operand.vmem [shape: f32[1,32], index: 3, kind: input, shape index: {}]
  %s4 = inlined_call_operand.vmem [shape: bf16[32,32], index: 4, kind: input, shape index: {}]
  %s5 = inlined_call_operand.hbm [shape: f32[1,32], index: 5, kind: input, shape index: {}]
  %s6 = inlined_call_operand.vmem [shape: bf16[32,32], index: 6, kind: input, shape index: {}]
  %s7 = inlined_call_operand.hbm [shape: f32[1,32], index: 7, kind: input, shape index: {}]
  %s8 = inlined_call_operand.vmem [shape: bf16[2,8,32], index: 8, kind: output, shape index: {0}]
  %s9 = inlined_call_operand.vmem [shape: bf16[2,8,32], index: 9, kind: output, shape index: {1}]
  %s10 = inlined_call_operand.vmem [shape: bf16[2,8,32], index: 10, kind: output, shape index: {2}]
  %11 = xla_tuple %s8, %s9, %s10
  %s12 = sld [smem:[#allocation0]]
  $region89: #{transformer_layer.6} parent=0
    _
  %s14 = ssub.s32 1, %s12
  %s15 = scalar_select 0, %s14, %s12
  $region1: #{transformer_layer.6} parent=0
    #allocation2 [shape = 'u8[512]{0}', space=vmem, size = 0x400, scoped, tag = 'input window, operand 5, single buffered']
    #allocation3 [shape = 's32[2]{0}', space=sflag, size = 0x8, scoped, tag = 'scoped memory for transformer_layer.6']
    #allocation4 [shape = 'u8[512]{0}', space=vmem, size = 0x400, scoped, tag = 'input window, operand 7, single buffered']
    #allocation5 [shape = 's32[1]{0}', space=sflag, size = 0x4, scoped, tag = 'scoped memory for transformer_layer.6']
    %16 = vsyncpa [#allocation3], 0
    %17 = vsyncpa [#allocation5], 0
    loop: start=0, step=1, limit=4
    $region2: #{transformer_layer.6} parent=1 // loop_pre_header
      _
    $region3: #{transformer_layer.6} parent=1 // loop_header
      %s19 = sphi 0, %s23
      %p20 = scmp.ge.s32.totalorder %s19, 4
      %s26 = sphi 0, %s38
      %s27 = sphi 0, %s34
      %s28 = sphi 0, %s26
      %s29 = sphi 0, %s27
      %s30 = sphi 0, %s28
      %s31 = sphi 0, %s29
      %s43 = sphi 0, %s45
      %s46 = sphi 0, %s43
      %s47 = sphi 0, %s46
      %s63 = sphi 0, %s47
      %s67 = sphi 0, %s67
      %s69 = sphi 0, %s67
      %s70 = sphi 0, %s69
      %s84 = sphi 0, %s70
      %s88 = sphi 0, %s88
      %s90 = sphi 0, %s88
      %s91 = sphi 0, %s90
      %s105 = sphi 0, %s91
      %s109 = sphi 0, %s109
      %s111 = sphi 0, %s109
      %s112 = sphi 0, %s111
      %s126 = sphi 0, %s112
      %s130 = sphi 0, %s130
      %s132 = sphi 0, %s130
      %s133 = sphi 0, %s132
      %s147 = sphi 0, %s133
      %s151 = sphi 0, %s151
      %s153 = sphi 0, %s151
      %s154 = sphi 0, %s153
      %s168 = sphi 0, %s154
      %s172 = sphi 0, %s172
      %s174 = sphi 0, %s172
      %s175 = sphi 0, %s174
      %s189 = sphi 0, %s175
      %s193 = sphi 0, %s193
      %s195 = sphi 0, %s193
      %s196 = sphi 0, %s195
      %s210 = sphi 0, %s196
      %s218 = sphi 0, %s220
      %s221 = sphi 0, %s218
      %s222 = sphi 0, %s221
      %s238 = sphi 0, %s222
      %s246 = sphi 0, %s248
      %s249 = sphi 0, %s246
      %s250 = sphi 0, %s249
      %s266 = sphi 0, %s250
      %s274 = sphi 0, %s276
      %s277 = sphi 0, %s274
      %s278 = sphi 0, %s277
      %s294 = sphi 0, %s278
    $region4: #{transformer_layer.6} parent=1 // loop_header_branch
      %22 = sbr.rel (%p20) target = $region8
    $region5: #{transformer_layer.6} parent=1 // loop_body
      %s24 = ssub.s32 %s19, 1
      %s25 = ssub.s32 %s19, 2
      %s32 = sadd.s32 1, %s27
      %p33 = scmp.ge.s32.totalorder %s32, 1
      %s34 = scalar_select %p33, 0, %s32
      %s35 = sadd.s32 1, %s26
      %s36 = scalar_select %p33, %s35, %s26
      %p37 = scmp.ge.s32.totalorder %s36, 2
      %s38 = scalar_select %p37, 0, %s36
      %s39 = ssub.s32 %s26, %s38
      %s40 = ssub.s32 %s27, %s34
      %s41 = sor.u32 %s39, %s40
      %p42 = scmp.eq.s32.totalorder %s41, 0
      %s44 = sadd.s32 %s43, 1
      %s45 = scalar_select %p42, %s43, %s44
      %p48 = pneg %p42
      %p49 = scmp.eq.s32.totalorder %s19, 1
      %p50 = por %p48, %p49
      %p51 = scmp.ne.s32.totalorder %s43, %s46
      %p52 = scmp.eq.s32.totalorder %s19, 0
      %p53 = por %p51, %p52
      %p54 = scmp.ne.s32.totalorder %s43, %s46
      %p55 = scmp.eq.s32.totalorder %s24, 1
      %p56 = por %p54, %p55
      %p57 = scmp.ne.s32.totalorder %s46, %s47
      %p58 = scmp.eq.s32.totalorder %s24, 0
      %p59 = por %p57, %p58
      %p60 = scmp.ne.s32.totalorder %s46, %s47
      %p61 = scmp.eq.s32.totalorder %s25, 1
      %p62 = por %p60, %p61
      %p64 = scmp.ne.s32.totalorder %s47, %s63
      %p65 = scmp.eq.s32.totalorder %s25, 0
      %p66 = por %p64, %p65
      %s68 = sadd.s32 %s67, 1
      %p71 = scmp.eq.s32.totalorder %s19, 1
      %p72 = scmp.ne.s32.totalorder %s67, %s69
      %p73 = scmp.eq.s32.totalorder %s19, 0
      %p74 = por %p72, %p73
      %p75 = scmp.ne.s32.totalorder %s67, %s69
      %p76 = scmp.eq.s32.totalorder %s24, 1
      %p77 = por %p75, %p76
      %p78 = scmp.ne.s32.totalorder %s69, %s70
      %p79 = scmp.eq.s32.totalorder %s24, 0
      %p80 = por %p78, %p79
      %p81 = scmp.ne.s32.totalorder %s69, %s70
      %p82 = scmp.eq.s32.totalorder %s25, 1
      %p83 = por %p81, %p82
      %p85 = scmp.ne.s32.totalorder %s70, %s84
      %p86 = scmp.eq.s32.totalorder %s25, 0
      %p87 = por %p85, %p86
      %s89 = sadd.s32 %s88, 1
      %p92 = scmp.eq.s32.totalorder %s19, 1
      %p93 = scmp.ne.s32.totalorder %s88, %s90
      %p94 = scmp.eq.s32.totalorder %s19, 0
      %p95 = por %p93, %p94
      %p96 = scmp.ne.s32.totalorder %s88, %s90
      %p97 = scmp.eq.s32.totalorder %s24, 1
      %p98 = por %p96, %p97
      %p99 = scmp.ne.s32.totalorder %s90, %s91
      %p100 = scmp.eq.s32.totalorder %s24, 0
      %p101 = por %p99, %p100
      %p102 = scmp.ne.s32.totalorder %s90, %s91
      %p103 = scmp.eq.s32.totalorder %s25, 1
      %p104 = por %p102, %p103
      %p106 = scmp.ne.s32.totalorder %s91, %s105
      %p107 = scmp.eq.s32.totalorder %s25, 0
      %p108 = por %p106, %p107
      %s110 = sadd.s32 %s109, 1
      %p113 = scmp.eq.s32.totalorder %s19, 1
      %p114 = scmp.ne.s32.totalorder %s109, %s111
      %p115 = scmp.eq.s32.totalorder %s19, 0
      %p116 = por %p114, %p115
      %p117 = scmp.ne.s32.totalorder %s109, %s111
      %p118 = scmp.eq.s32.totalorder %s24, 1
      %p119 = por %p117, %p118
      %p120 = scmp.ne.s32.totalorder %s111, %s112
      %p121 = scmp.eq.s32.totalorder %s24, 0
      %p122 = por %p120, %p121
      %p123 = scmp.ne.s32.totalorder %s111, %s112
      %p124 = scmp.eq.s32.totalorder %s25, 1
      %p125 = por %p123, %p124
      %p127 = scmp.ne.s32.totalorder %s112, %s126
      %p128 = scmp.eq.s32.totalorder %s25, 0
      %p129 = por %p127, %p128
      %s131 = sadd.s32 %s130, 1
      %p134 = scmp.eq.s32.totalorder %s19, 1
      %p135 = scmp.ne.s32.totalorder %s130, %s132
      %p136 = scmp.eq.s32.totalorder %s19, 0
      %p137 = por %p135, %p136
      %p138 = scmp.ne.s32.totalorder %s130, %s132
      %p139 = scmp.eq.s32.totalorder %s24, 1
      %p140 = por %p138, %p139
      %p141 = scmp.ne.s32.totalorder %s132, %s133
      %p142 = scmp.eq.s32.totalorder %s24, 0
      %p143 = por %p141, %p142
      %p144 = scmp.ne.s32.totalorder %s132, %s133
      %p145 = scmp.eq.s32.totalorder %s25, 1
      %p146 = por %p144, %p145
      %p148 = scmp.ne.s32.totalorder %s133, %s147
      %p149 = scmp.eq.s32.totalorder %s25, 0
      %p150 = por %p148, %p149
      %s152 = sadd.s32 %s151, 1
      %p155 = scmp.eq.s32.totalorder %s19, 1
      %p156 = scmp.ne.s32.totalorder %s151, %s153
      %p157 = scmp.eq.s32.totalorder %s19, 0
      %p158 = por %p156, %p157
      %p159 = scmp.ne.s32.totalorder %s151, %s153
      %p160 = scmp.eq.s32.totalorder %s24, 1
      %p161 = por %p159, %p160
      %p162 = scmp.ne.s32.totalorder %s153, %s154
      %p163 = scmp.eq.s32.totalorder %s24, 0
      %p164 = por %p162, %p163
      %p165 = scmp.ne.s32.totalorder %s153, %s154
      %p166 = scmp.eq.s32.totalorder %s25, 1
      %p167 = por %p165, %p166
      %p169 = scmp.ne.s32.totalorder %s154, %s168
      %p170 = scmp.eq.s32.totalorder %s25, 0
      %p171 = por %p169, %p170
      %s173 = sadd.s32 %s172, 1
      %p176 = scmp.eq.s32.totalorder %s19, 1
      %p177 = scmp.ne.s32.totalorder %s172, %s174
      %p178 = scmp.eq.s32.totalorder %s19, 0
      %p179 = por %p177, %p178
      %p180 = scmp.ne.s32.totalorder %s172, %s174
      %p181 = scmp.eq.s32.totalorder %s24, 1
      %p182 = por %p180, %p181
      %p183 = scmp.ne.s32.totalorder %s174, %s175
      %p184 = scmp.eq.s32.totalorder %s24, 0
      %p185 = por %p183, %p184
      %p186 = scmp.ne.s32.totalorder %s174, %s175
      %p187 = scmp.eq.s32.totalorder %s25, 1
      %p188 = por %p186, %p187
      %p190 = scmp.ne.s32.totalorder %s175, %s189
      %p191 = scmp.eq.s32.totalorder %s25, 0
      %p192 = por %p190, %p191
      %s194 = sadd.s32 %s193, 1
      %p197 = scmp.eq.s32.totalorder %s19, 1
      %p198 = scmp.ne.s32.totalorder %s193, %s195
      %p199 = scmp.eq.s32.totalorder %s19, 0
      %p200 = por %p198, %p199
      %p201 = scmp.ne.s32.totalorder %s193, %s195
      %p202 = scmp.eq.s32.totalorder %s24, 1
      %p203 = por %p201, %p202
      %p204 = scmp.ne.s32.totalorder %s195, %s196
      %p205 = scmp.eq.s32.totalorder %s24, 0
      %p206 = por %p204, %p205
      %p207 = scmp.ne.s32.totalorder %s195, %s196
      %p208 = scmp.eq.s32.totalorder %s25, 1
      %p209 = por %p207, %p208
      %p211 = scmp.ne.s32.totalorder %s196, %s210
      %p212 = scmp.eq.s32.totalorder %s25, 0
      %p213 = por %p211, %p212
      %s214 = ssub.s32 %s26, %s38
      %s215 = ssub.s32 %s27, %s34
      %s216 = sor.u32 %s214, %s215
      %p217 = scmp.eq.s32.totalorder %s216, 0
      %s219 = sadd.s32 %s218, 1
      %s220 = scalar_select %p217, %s218, %s219
      %p223 = pneg %p217
      %p224 = scmp.eq.s32.totalorder %s19, 1
      %p225 = por %p223, %p224
      %p226 = scmp.ne.s32.totalorder %s218, %s221
      %p227 = scmp.eq.s32.totalorder %s19, 0
      %p228 = por %p226, %p227
      %p229 = scmp.ne.s32.totalorder %s218, %s221
      %p230 = scmp.eq.s32.totalorder %s24, 1
      %p231 = por %p229, %p230
      %p232 = scmp.ne.s32.totalorder %s221, %s222
      %p233 = scmp.eq.s32.totalorder %s24, 0
      %p234 = por %p232, %p233
      %p235 = scmp.ne.s32.totalorder %s221, %s222
      %p236 = scmp.eq.s32.totalorder %s25, 1
      %p237 = por %p235, %p236
      %p239 = scmp.ne.s32.totalorder %s222, %s238
      %p240 = scmp.eq.s32.totalorder %s25, 0
      %p241 = por %p239, %p240
      %s242 = ssub.s32 %s26, %s38
      %s243 = ssub.s32 %s27, %s34
      %s244 = sor.u32 %s242, %s243
      %p245 = scmp.eq.s32.totalorder %s244, 0
      %s247 = sadd.s32 %s246, 1
      %s248 = scalar_select %p245, %s246, %s247
      %p251 = pneg %p245
      %p252 = scmp.eq.s32.totalorder %s19, 1
      %p253 = por %p251, %p252
      %p254 = scmp.ne.s32.totalorder %s246, %s249
      %p255 = scmp.eq.s32.totalorder %s19, 0
      %p256 = por %p254, %p255
      %p257 = scmp.ne.s32.totalorder %s246, %s249
      %p258 = scmp.eq.s32.totalorder %s24, 1
      %p259 = por %p257, %p258
      %p260 = scmp.ne.s32.totalorder %s249, %s250
      %p261 = scmp.eq.s32.totalorder %s24, 0
      %p262 = por %p260, %p261
      %p263 = scmp.ne.s32.totalorder %s249, %s250
      %p264 = scmp.eq.s32.totalorder %s25, 1
      %p265 = por %p263, %p264
      %p267 = scmp.ne.s32.totalorder %s250, %s266
      %p268 = scmp.eq.s32.totalorder %s25, 0
      %p269 = por %p267, %p268
      %s270 = ssub.s32 %s26, %s38
      %s271 = ssub.s32 %s27, %s34
      %s272 = sor.u32 %s270, %s271
      %p273 = scmp.eq.s32.totalorder %s272, 0
      %s275 = sadd.s32 %s274, 1
      %s276 = scalar_select %p273, %s274, %s275
      %p279 = pneg %p273
      %p280 = scmp.eq.s32.totalorder %s19, 1
      %p281 = por %p279, %p280
      %p282 = scmp.ne.s32.totalorder %s274, %s277
      %p283 = scmp.eq.s32.totalorder %s19, 0
      %p284 = por %p282, %p283
      %p285 = scmp.ne.s32.totalorder %s274, %s277
      %p286 = scmp.eq.s32.totalorder %s24, 1
      %p287 = por %p285, %p286
      %p288 = scmp.ne.s32.totalorder %s277, %s278
      %p289 = scmp.eq.s32.totalorder %s24, 0
      %p290 = por %p288, %p289
      %p291 = scmp.ne.s32.totalorder %s277, %s278
      %p292 = scmp.eq.s32.totalorder %s25, 1
      %p293 = por %p291, %p292
      %p295 = scmp.ne.s32.totalorder %s278, %s294
      %p296 = scmp.eq.s32.totalorder %s25, 0
      %p297 = por %p295, %p296
      %p298 = scmp.le.s32.totalorder 1, %s19
      %p299 = scmp.lt.s32.totalorder %s19, 3
      %p300 = pnand %p298, %p299
      %p301 = pneg %p300
      // Predicated region
      $region9: #{transformer_layer.6} parent=5 // pred_check
        _
      $region10: #{transformer_layer.6} parent=5 // pred_check_branch
        %303 = sbr.rel (%p300) target = $region12
      $region11: #{transformer_layer.6} parent=5 // pred_region
        %s304 = ssub.s32 %s19, 1
        // Predicated region
        $region13: #{transformer_layer.6} parent=11 // pred_check
          %p305 = pneg %p80
        $region14: #{transformer_layer.6} parent=11 // pred_check_branch
          %307 = sbr.rel (%p305) target = $region16
        $region15: #{transformer_layer.6} parent=11 // pred_region
          _
        $region16: #{transformer_layer.6} parent=11 // pred_fallthru
          _
        // Predicated region
        $region17: #{transformer_layer.6} parent=11 // pred_check
          %p308 = pneg %p101
        $region18: #{transformer_layer.6} parent=11 // pred_check_branch
          %310 = sbr.rel (%p308) target = $region20
        $region19: #{transformer_layer.6} parent=11 // pred_region
          _
        $region20: #{transformer_layer.6} parent=11 // pred_fallthru
          _
        // Predicated region
        $region21: #{transformer_layer.6} parent=11 // pred_check
          %p311 = pneg %p122
        $region22: #{transformer_layer.6} parent=11 // pred_check_branch
          %313 = sbr.rel (%p311) target = $region24
        $region23: #{transformer_layer.6} parent=11 // pred_region
          _
        $region24: #{transformer_layer.6} parent=11 // pred_fallthru
          _
        // Predicated region
        $region25: #{transformer_layer.6} parent=11 // pred_check
          %p314 = pneg %p143
        $region26: #{transformer_layer.6} parent=11 // pred_check_branch
          %316 = sbr.rel (%p314) target = $region28
        $region27: #{transformer_layer.6} parent=11 // pred_region
          _
        $region28: #{transformer_layer.6} parent=11 // pred_fallthru
          _
        // Predicated region
        $region29: #{transformer_layer.6} parent=11 // pred_check
          %p317 = pneg %p164
        $region30: #{transformer_layer.6} parent=11 // pred_check_branch
          %319 = sbr.rel (%p317) target = $region32
        $region31: #{transformer_layer.6} parent=11 // pred_region
          %s321 = ssub.s32 16, 16
          %322 = vsyncadd [#allocation3], %s321
          %s324 = sshll.u32 [#allocation2], 4
          %s325 = int_to_ptr.vmem [resolvable:$true] %s324
          %327 = dma.hbm_to_vmem [thread:$0]  %s5, 16, %s325, [#allocation3]
        $region32: #{transformer_layer.6} parent=11 // pred_fallthru
          _
        // Predicated region
        $region33: #{transformer_layer.6} parent=11 // pred_check
          %p328 = pneg %p185
        $region34: #{transformer_layer.6} parent=11 // pred_check_branch
          %330 = sbr.rel (%p328) target = $region36
        $region35: #{transformer_layer.6} parent=11 // pred_region
          _
        $region36: #{transformer_layer.6} parent=11 // pred_fallthru
          _
        // Predicated region
        $region37: #{transformer_layer.6} parent=11 // pred_check
          %p331 = pneg %p206
        $region38: #{transformer_layer.6} parent=11 // pred_check_branch
          %333 = sbr.rel (%p331) target = $region40
        $region39: #{transformer_layer.6} parent=11 // pred_region
          %s335 = ssub.s32 16, 16
          %336 = vsyncadd [#allocation5], %s335
          %s338 = sshll.u32 [#allocation4], 4
          %s339 = int_to_ptr.vmem [resolvable:$true] %s338
          %341 = dma.hbm_to_vmem [thread:$0]  %s7, 16, %s339, [#allocation5]
        $region40: #{transformer_layer.6} parent=11 // pred_fallthru
          _
      $region12: #{transformer_layer.6} parent=5 // pred_fallthru
        _
      %p342 = scmp.lt.s32.totalorder %s19, 2
      // Predicated region
      $region41: #{transformer_layer.6} parent=5 // pred_check
        %p343 = pneg %p342
      $region42: #{transformer_layer.6} parent=5 // pred_check_branch
        %345 = sbr.rel (%p343) target = $region44
      $region43: #{transformer_layer.6} parent=5 // pred_region
        // Predicated region
        $region45: #{transformer_layer.6} parent=43 // pred_check
          %p346 = pneg %p53
        $region46: #{transformer_layer.6} parent=43 // pred_check_branch
          %348 = sbr.rel (%p346) target = $region48
        $region47: #{transformer_layer.6} parent=43 // pred_region
          %p349 = scmp.lt.s32.totalorder %s26, 1
          %s350 = scalar_select %p349, %s26, 1
          %p351 = scmp.lt.s32.totalorder %s27, 0
          %s352 = scalar_select %p351, %s27, 0
          %s353 = sadd.s32 %s352, %s350
          %s354 = smul.addr %s353, 4
          %s355 = scalar_lea.vmem %s0, %s354
        $region48: #{transformer_layer.6} parent=43 // pred_fallthru
          _
      $region44: #{transformer_layer.6} parent=5 // pred_fallthru
        _
      %p356 = scmp.le.s32.totalorder 1, %s19
      %p357 = scmp.lt.s32.totalorder %s19, 3
      %p358 = pnand %p356, %p357
      %p359 = pneg %p358
      // Predicated region
      $region49: #{transformer_layer.6} parent=5 // pred_check
        _
      $region50: #{transformer_layer.6} parent=5 // pred_check_branch
        %361 = sbr.rel (%p358) target = $region52
      $region51: #{transformer_layer.6} parent=5 // pred_region
        %s362 = ssub.s32 %s19, 1
        // Predicated region
        $region53: #{transformer_layer.6} parent=51 // pred_check
          %p363 = pneg %p164
        $region54: #{transformer_layer.6} parent=51 // pred_check_branch
          %365 = sbr.rel (%p363) target = $region56
        $region55: #{transformer_layer.6} parent=51 // pred_region
          %366 = dma.done [#allocation3], 16
        $region56: #{transformer_layer.6} parent=51 // pred_fallthru
          _
        // Predicated region
        $region57: #{transformer_layer.6} parent=51 // pred_check
          %p367 = pneg %p206
        $region58: #{transformer_layer.6} parent=51 // pred_check_branch
          %369 = sbr.rel (%p367) target = $region60
        $region59: #{transformer_layer.6} parent=51 // pred_region
          %370 = dma.done [#allocation5], 16
        $region60: #{transformer_layer.6} parent=51 // pred_fallthru
          _
        %p371 = scmp.lt.s32.totalorder %s28, 1
        %s372 = scalar_select %p371, %s28, 1
        %p373 = scmp.lt.s32.totalorder %s29, 0
        %s374 = scalar_select %p373, %s29, 0
        %s375 = sadd.s32 %s374, %s372
        %s376 = smul.addr %s375, 4
        %s377 = scalar_lea.vmem %s0, %s376
        %p378 = pneg %p59
        %p379 = pneg %p56
        %p380 = pneg %p80
        %p381 = pneg %p77
        %p382 = pneg %p101
        %p383 = pneg %p98
        %p384 = pneg %p122
        %p385 = pneg %p119
        %p386 = pneg %p143
        %p387 = pneg %p140
        %p388 = pneg %p164
        %p389 = pneg %p161
        %p390 = pneg %p185
        %p391 = pneg %p182
        %p392 = pneg %p206
        %p393 = pneg %p203
        %p394 = pneg %p234
        %p395 = pneg %p231
        %p396 = scmp.lt.s32.totalorder %s28, 1
        %s397 = scalar_select %p396, %s28, 1
        %p398 = scmp.lt.s32.totalorder %s29, 0
        %s399 = scalar_select %p398, %s29, 0
        %s400 = sadd.s32 %s399, %s397
        %s401 = smul.addr %s400, 4
        %s402 = scalar_lea.vmem %s8, %s401
        %p403 = pneg %p262
        %p404 = pneg %p259
        %p405 = scmp.lt.s32.totalorder %s28, 1
        %s406 = scalar_select %p405, %s28, 1
        %p407 = scmp.lt.s32.totalorder %s29, 0
        %s408 = scalar_select %p407, %s29, 0
        %s409 = sadd.s32 %s408, %s406
        %s410 = smul.addr %s409, 4
        %s411 = scalar_lea.vmem %s9, %s410
        %p412 = pneg %p290
        %p413 = pneg %p287
        %p414 = scmp.lt.s32.totalorder %s28, 1
        %s415 = scalar_select %p414, %s28, 1
        %p416 = scmp.lt.s32.totalorder %s29, 0
        %s417 = scalar_select %p416, %s29, 0
        %s418 = sadd.s32 %s417, %s415
        %s419 = smul.addr %s418, 4
        %s420 = scalar_lea.vmem %s10, %s419
        %p421 = scmp.lt.s32.totalorder %s28, 1
        %s422 = scalar_select %p421, %s28, 1
        %p423 = scmp.lt.s32.totalorder %s29, 0
        %s424 = scalar_select %p423, %s29, 0
        %s425 = sadd.s32 %s424, %s422
        %s426 = smul.addr %s425, 4
        %s427 = scalar_lea.vmem %s0, %s426
        %p428 = scmp.lt.s32.totalorder %s28, 1
        %s429 = scalar_select %p428, %s28, 1
        %p430 = scmp.lt.s32.totalorder %s29, 0
        %s431 = scalar_select %p430, %s29, 0
        %s432 = sadd.s32 %s431, %s429
        %s433 = smul.addr %s432, 4
        %s434 = scalar_lea.vmem %s8, %s433
        %p435 = scmp.lt.s32.totalorder %s28, 1
        %s436 = scalar_select %p435, %s28, 1
        %p437 = scmp.lt.s32.totalorder %s29, 0
        %s438 = scalar_select %p437, %s29, 0
        %s439 = sadd.s32 %s438, %s436
        %s440 = smul.addr %s439, 4
        %s441 = scalar_lea.vmem %s9, %s440
        %p442 = scmp.lt.s32.totalorder %s28, 1
        %s443 = scalar_select %p442, %s28, 1
        %p444 = scmp.lt.s32.totalorder %s29, 0
        %s445 = scalar_select %p444, %s29, 0
        %s446 = sadd.s32 %s445, %s443
        %s447 = smul.addr %s446, 4
        %s448 = scalar_lea.vmem %s10, %s447
        %v450 = vld [vmem:[%s427] sm:$0xf]
        %v451 = vunpack.c.l.bf16 %v450
        %v452 = vld [vmem:[%s1] sm:$0x1]
        %v453 = vmul.f32 %v451, %v451
        %vm454 = vcmask 261120
        %v455 = vsel %vm454, %v453, 0.0
        %456 = vadd.xlane.f32.xlu0 %v455
        %v457 = vpop.xlane.xlu0 %456
        %v458 = vrcp.pop 32.0
        %v459 = vmul.f32 %v457, %v458
        %v460 = vadd.f32 %v459, 1.1920929e-07
        %v461 = vrsqrt.pop %v460
        %v462 = vmul.f32 %v451, %v461
        %v464 = vlaneseq
        %v465 = vshrl.u32 %v464, 7
        %v466 = vsub.s32 0, %v465
        %v467 = vrot.slane %v452, %v466
        %v469 = vmul.f32 %v462, %v467
        %v470 = vpack.c.bf16 %v469, %v469
        %v471 = vld [vmem:[%s2] sm:$0xf]
        %v472 = vld [vmem:[%s2 + $0x4] sm:$0xf]
        %v473 = vld [vmem:[%s2 + $0x8] sm:$0xf]
        %v474 = vld [vmem:[%s2 + $0xc] sm:$0xf]
        %v475 = vld [vmem:[%s3] sm:$0x1]
        %v477 = vlaneseq
        %v478 = vshrl.u32 %v477, 7
        %v479 = vsub.s32 0, %v478
        %v480 = vrot.slane %v475, %v479
        %v486 = vunpack.c.l.b16 %v471
        %v487 = vunpack.c.l.b16 %v472
        %v488 = vunpack.c.l.b16 %v473
        %v489 = vunpack.c.l.b16 %v474
        %v490 = vpack.c.b16 %v487, %v486
        %v491 = vpack.c.b16 %v489, %v488
        %v495 = vsel %vm454, %v470, 0
        %497 = vmatprep.subr.bf16.mxu0 0
        %498 = vmatpush1.bf16.msra.mxu0 %v490
        %499 = vmatprep.subr.bf16.mxu0 0
        %500 = vmatpush1.bf16.msra.mxu0 %v491
        %501 = vmatprep.subr.bf16.mxu0 0
        %502 = vmatpush1.bf16.msra.mxu0 0
        %503 = vmatprep.subr.bf16.mxu0 0
        %504 = vmatpush1.bf16.msra.mxu0 0
        %505 = vmatprep.subr.bf16.mxu0 0
        %506 = vmatpush1.bf16.msra.mxu0 0
        %507 = vmatprep.subr.bf16.mxu0 0
        %508 = vmatpush1.bf16.msra.mxu0 0
        %509 = vmatprep.subr.bf16.mxu0 0
        %510 = vmatpush1.bf16.msra.mxu0 0
        %511 = vmatprep.subr.bf16.mxu0 0
        %512 = vmatpush1.bf16.msra.mxu0 0
        %513 = vmatprep.subr.bf16.mxu0 0
        %514 = vmatpush1.bf16.msra.mxu0 0
        %515 = vmatprep.subr.bf16.mxu0 0
        %516 = vmatpush1.bf16.msra.mxu0 0
        %517 = vmatprep.subr.bf16.mxu0 0
        %518 = vmatpush1.bf16.msra.mxu0 0
        %519 = vmatprep.subr.bf16.mxu0 0
        %520 = vmatpush1.bf16.msra.mxu0 0
        %521 = vmatprep.subr.bf16.mxu0 0
        %522 = vmatpush1.bf16.msra.mxu0 0
        %523 = vmatprep.subr.bf16.mxu0 0
        %524 = vmatpush1.bf16.msra.mxu0 0
        %525 = vmatprep.subr.bf16.mxu0 0
        %526 = vmatpush1.bf16.msra.mxu0 0
        %527 = vmatprep.subr.bf16.mxu0 0
        %528 = vmatpush1.bf16.msra.mxu0 0
        %529 = vmatprep.mubr.bf16.mxu0 0
        %530 = vmatmul.mubr.bf16.gmra.mrb[0].mxu0 %v495
        %v531 = vpop.f32.mrb[0].mxu0
        %v532 = vadd.f32 %v480, %v531
        %v533 = vpop.f32.mrb[0].mxu0
        %v534 = vpop.f32.mrb[0].mxu0
        %v535 = vpop.f32.mrb[0].mxu0
        %536 = vdwg.mxu0
        %v537 = vld [vmem:[%s4] sm:$0xf]
        %v538 = vld [vmem:[%s4 + $0x4] sm:$0xf]
        %v539 = vld [vmem:[%s4 + $0x8] sm:$0xf]
        %v540 = vld [vmem:[%s4 + $0xc] sm:$0xf]
        %v541 = vld [vmem:[#allocation2] sm:$0x1]
        %v543 = vlaneseq
        %v544 = vshrl.u32 %v543, 7
        %v545 = vsub.s32 0, %v544
        %v546 = vrot.slane %v541, %v545
        %v552 = vunpack.c.l.b16 %v537
        %v553 = vunpack.c.l.b16 %v538
        %v554 = vunpack.c.l.b16 %v539
        %v555 = vunpack.c.l.b16 %v540
        %v556 = vpack.c.b16 %v553, %v552
        %v557 = vpack.c.b16 %v555, %v554
        %560 = vmatprep.subr.bf16.mxu0 0
        %561 = vmatpush1.bf16.msra.mxu0 %v556
        %562 = vmatprep.subr.bf16.mxu0 0
        %563 = vmatpush1.bf16.msra.mxu0 %v557
        %564 = vmatprep.subr.bf16.mxu0 0
        %565 = vmatpush1.bf16.msra.mxu0 0
        %566 = vmatprep.subr.bf16.mxu0 0
        %567 = vmatpush1.bf16.msra.mxu0 0
        %568 = vmatprep.subr.bf16.mxu0 0
        %569 = vmatpush1.bf16.msra.mxu0 0
        %570 = vmatprep.subr.bf16.mxu0 0
        %571 = vmatpush1.bf16.msra.mxu0 0
        %572 = vmatprep.subr.bf16.mxu0 0
        %573 = vmatpush1.bf16.msra.mxu0 0
        %574 = vmatprep.subr.bf16.mxu0 0
        %575 = vmatpush1.bf16.msra.mxu0 0
        %576 = vmatprep.subr.bf16.mxu0 0
        %577 = vmatpush1.bf16.msra.mxu0 0
        %578 = vmatprep.subr.bf16.mxu0 0
        %579 = vmatpush1.bf16.msra.mxu0 0
        %580 = vmatprep.subr.bf16.mxu0 0
        %581 = vmatpush1.bf16.msra.mxu0 0
        %582 = vmatprep.subr.bf16.mxu0 0
        %583 = vmatpush1.bf16.msra.mxu0 0
        %584 = vmatprep.subr.bf16.mxu0 0
        %585 = vmatpush1.bf16.msra.mxu0 0
        %586 = vmatprep.subr.bf16.mxu0 0
        %587 = vmatpush1.bf16.msra.mxu0 0
        %588 = vmatprep.subr.bf16.mxu0 0
        %589 = vmatpush1.bf16.msra.mxu0 0
        %590 = vmatprep.subr.bf16.mxu0 0
        %591 = vmatpush1.bf16.msra.mxu0 0
        %592 = vmatprep.mubr.bf16.mxu0 0
        %593 = vmatmul.mubr.bf16.gmra.mrb[0].mxu0 %v495
        %v594 = vpop.f32.mrb[0].mxu0
        %v595 = vadd.f32 %v546, %v594
        %v596 = vpop.f32.mrb[0].mxu0
        %v597 = vpop.f32.mrb[0].mxu0
        %v598 = vpop.f32.mrb[0].mxu0
        %599 = vdwg.mxu0
        %v600 = vld [vmem:[%s6] sm:$0xf]
        %v601 = vld [vmem:[%s6 + $0x4] sm:$0xf]
        %v602 = vld [vmem:[%s6 + $0x8] sm:$0xf]
        %v603 = vld [vmem:[%s6 + $0xc] sm:$0xf]
        %v604 = vld [vmem:[#allocation4] sm:$0x1]
        %v606 = vlaneseq
        %v607 = vshrl.u32 %v606, 7
        %v608 = vsub.s32 0, %v607
        %v609 = vrot.slane %v604, %v608
        %v615 = vunpack.c.l.b16 %v600
        %v616 = vunpack.c.l.b16 %v601
        %v617 = vunpack.c.l.b16 %v602
        %v618 = vunpack.c.l.b16 %v603
        %v619 = vpack.c.b16 %v616, %v615
        %v620 = vpack.c.b16 %v618, %v617
        %623 = vmatprep.subr.bf16.mxu0 0
        %624 = vmatpush1.bf16.msra.mxu0 %v619
        %625 = vmatprep.subr.bf16.mxu0 0
        %626 = vmatpush1.bf16.msra.mxu0 %v620
        %627 = vmatprep.subr.bf16.mxu0 0
        %628 = vmatpush1.bf16.msra.mxu0 0
        %629 = vmatprep.subr.bf16.mxu0 0
        %630 = vmatpush1.bf16.msra.mxu0 0
        %631 = vmatprep.subr.bf16.mxu0 0
        %632 = vmatpush1.bf16.msra.mxu0 0
        %633 = vmatprep.subr.bf16.mxu0 0
        %634 = vmatpush1.bf16.msra.mxu0 0
        %635 = vmatprep.subr.bf16.mxu0 0
        %636 = vmatpush1.bf16.msra.mxu0 0
        %637 = vmatprep.subr.bf16.mxu0 0
        %638 = vmatpush1.bf16.msra.mxu0 0
        %639 = vmatprep.subr.bf16.mxu0 0
        %640 = vmatpush1.bf16.msra.mxu0 0
        %641 = vmatprep.subr.bf16.mxu0 0
        %642 = vmatpush1.bf16.msra.mxu0 0
        %643 = vmatprep.subr.bf16.mxu0 0
        %644 = vmatpush1.bf16.msra.mxu0 0
        %645 = vmatprep.subr.bf16.mxu0 0
        %646 = vmatpush1.bf16.msra.mxu0 0
        %647 = vmatprep.subr.bf16.mxu0 0
        %648 = vmatpush1.bf16.msra.mxu0 0
        %649 = vmatprep.subr.bf16.mxu0 0
        %650 = vmatpush1.bf16.msra.mxu0 0
        %651 = vmatprep.subr.bf16.mxu0 0
        %652 = vmatpush1.bf16.msra.mxu0 0
        %653 = vmatprep.subr.bf16.mxu0 0
        %654 = vmatpush1.bf16.msra.mxu0 0
        %655 = vmatprep.mubr.bf16.mxu0 0
        %656 = vmatmul.mubr.bf16.gmra.mrb[0].mxu0 %v495
        %v657 = vpop.f32.mrb[0].mxu0
        %v658 = vadd.f32 %v609, %v657
        %v659 = vpop.f32.mrb[0].mxu0
        %v660 = vpop.f32.mrb[0].mxu0
        %v661 = vpop.f32.mrb[0].mxu0
        %662 = vdwg.mxu0
        %v663 = vmul.f32 %v532, 0.35355338
        %v664 = vpack.c.bf16 %v663, %v663
        %vm665 = vcmask 257024
        %666 = vst.msk [vmem:[%s434] sm:$0xf] %vm665, %v664
        %v667 = vpack.c.bf16 %v595, %v595
        %668 = vst.msk [vmem:[%s441] sm:$0xf] %vm665, %v667
        %v669 = vpack.c.bf16 %v658, %v658
        %670 = vst.msk [vmem:[%s448] sm:$0xf] %vm665, %v669
        %p671 = scmp.lt.s32.totalorder %s28, 1
        %s672 = scalar_select %p671, %s28, 1
        %p673 = scmp.lt.s32.totalorder %s29, 0
        %s674 = scalar_select %p673, %s29, 0
        %s675 = sadd.s32 %s674, %s672
        %s676 = smul.addr %s675, 4
        %s677 = scalar_lea.vmem %s8, %s676
        %p678 = scmp.lt.s32.totalorder %s28, 1
        %s679 = scalar_select %p678, %s28, 1
        %p680 = scmp.lt.s32.totalorder %s29, 0
        %s681 = scalar_select %p680, %s29, 0
        %s682 = sadd.s32 %s681, %s679
        %s683 = smul.addr %s682, 4
        %s684 = scalar_lea.vmem %s9, %s683
        %p685 = scmp.lt.s32.totalorder %s28, 1
        %s686 = scalar_select %p685, %s28, 1
        %p687 = scmp.lt.s32.totalorder %s29, 0
        %s688 = scalar_select %p687, %s29, 0
        %s689 = sadd.s32 %s688, %s686
        %s690 = smul.addr %s689, 4
        %s691 = scalar_lea.vmem %s10, %s690
        // Predicated region
        $region61: #{transformer_layer.6} parent=51 // pred_check
          %p692 = pneg %p231
        $region62: #{transformer_layer.6} parent=51 // pred_check_branch
          %694 = sbr.rel (%p692) target = $region64
        $region63: #{transformer_layer.6} parent=51 // pred_region
          _
        $region64: #{transformer_layer.6} parent=51 // pred_fallthru
          _
        // Predicated region
        $region65: #{transformer_layer.6} parent=51 // pred_check
          %p695 = pneg %p259
        $region66: #{transformer_layer.6} parent=51 // pred_check_branch
          %697 = sbr.rel (%p695) target = $region68
        $region67: #{transformer_layer.6} parent=51 // pred_region
          _
        $region68: #{transformer_layer.6} parent=51 // pred_fallthru
          _
        // Predicated region
        $region69: #{transformer_layer.6} parent=51 // pred_check
          %p698 = pneg %p287
        $region70: #{transformer_layer.6} parent=51 // pred_check_branch
          %700 = sbr.rel (%p698) target = $region72
        $region71: #{transformer_layer.6} parent=51 // pred_region
          _
        $region72: #{transformer_layer.6} parent=51 // pred_fallthru
          _
      $region52: #{transformer_layer.6} parent=5 // pred_fallthru
        _
      %p701 = scmp.le.s32.totalorder 2, %s19
      // Predicated region
      $region73: #{transformer_layer.6} parent=5 // pred_check
        %p702 = pneg %p701
      $region74: #{transformer_layer.6} parent=5 // pred_check_branch
        %704 = sbr.rel (%p702) target = $region76
      $region75: #{transformer_layer.6} parent=5 // pred_region
        %s705 = ssub.s32 %s19, 2
        // Predicated region
        $region77: #{transformer_layer.6} parent=75 // pred_check
          %p706 = pneg %p237
        $region78: #{transformer_layer.6} parent=75 // pred_check_branch
          %708 = sbr.rel (%p706) target = $region80
        $region79: #{transformer_layer.6} parent=75 // pred_region
          %p709 = scmp.lt.s32.totalorder %s30, 1
          %s710 = scalar_select %p709, %s30, 1
          %p711 = scmp.lt.s32.totalorder %s31, 0
          %s712 = scalar_select %p711, %s31, 0
          %s713 = sadd.s32 %s712, %s710
          %s714 = smul.addr %s713, 4
          %s715 = scalar_lea.vmem %s8, %s714
        $region80: #{transformer_layer.6} parent=75 // pred_fallthru
          _
        // Predicated region
        $region81: #{transformer_layer.6} parent=75 // pred_check
          %p716 = pneg %p265
        $region82: #{transformer_layer.6} parent=75 // pred_check_branch
          %718 = sbr.rel (%p716) target = $region84
        $region83: #{transformer_layer.6} parent=75 // pred_region
          %p719 = scmp.lt.s32.totalorder %s30, 1
          %s720 = scalar_select %p719, %s30, 1
          %p721 = scmp.lt.s32.totalorder %s31, 0
          %s722 = scalar_select %p721, %s31, 0
          %s723 = sadd.s32 %s722, %s720
          %s724 = smul.addr %s723, 4
          %s725 = scalar_lea.vmem %s9, %s724
        $region84: #{transformer_layer.6} parent=75 // pred_fallthru
          _
        // Predicated region
        $region85: #{transformer_layer.6} parent=75 // pred_check
          %p726 = pneg %p293
        $region86: #{transformer_layer.6} parent=75 // pred_check_branch
          %728 = sbr.rel (%p726) target = $region88
        $region87: #{transformer_layer.6} parent=75 // pred_region
          %p729 = scmp.lt.s32.totalorder %s30, 1
          %s730 = scalar_select %p729, %s30, 1
          %p731 = scmp.lt.s32.totalorder %s31, 0
          %s732 = scalar_select %p731, %s31, 0
          %s733 = sadd.s32 %s732, %s730
          %s734 = smul.addr %s733, 4
          %s735 = scalar_lea.vmem %s10, %s734
        $region88: #{transformer_layer.6} parent=75 // pred_fallthru
          _
      $region76: #{transformer_layer.6} parent=5 // pred_fallthru
        _
    $region6: #{transformer_layer.6} parent=1 // loop_footer
      %s23 = sadd.s32 1, %s19
    $region7: #{transformer_layer.6} parent=1 // loop_footer_branch
      %18 = sbr.rel target = $region3
    $region8: #{transformer_layer.6} parent=1 // loop_exit
      _
    %736 = vsyncpa [#allocation3], 1
    %s737 = scalar_lea.sflag [#allocation3], 1
    %738 = vsyncpa %s737, 1
    %739 = vsyncpa [#allocation5], 1

// kernel: transformer_layer.9
$region0: #{transformer_layer.9}
  #allocation0 [shape = 'u32[]', space=smem, size = 0x4, offset = 0x4, fixed_abs, tag = 'smem constant byte address 0x4 - core index']
  #allocation1 [shape = 'u32[144,128]{1,0:T(1,128)}', space=vmem, size = 0x12000, scoped, tag = 'internal scratch']
  %s0 = inlined_call_operand.vmem [shape: bf16[2,8,32], index: 0, kind: input, shape index: {}]
  %s1 = inlined_call_operand.vmem [shape: f32[1,32], index: 1, kind: input, shape index: {}]
  %s2 = inlined_call_operand.vmem [shape: bf16[32,32], index: 2, kind: input, shape index: {}]
  %s3 = inlined_call_operand.vmem [shape: f32[1,32], index: 3, kind: input, shape index: {}]
  %s4 = inlined_call_operand.vmem [shape: bf16[32,32], index: 4, kind: input, shape index: {}]
  %s5 = inlined_call_operand.vmem [shape: f32[1,32], index: 5, kind: input, shape index: {}]
  %s6 = inlined_call_operand.vmem [shape: bf16[32,32], index: 6, kind: input, shape index: {}]
  %s7 = inlined_call_operand.vmem [shape: f32[1,32], index: 7, kind: input, shape index: {}]
  %s8 = inlined_call_operand.vmem [shape: bf16[2,8,32], index: 8, kind: output, shape index: {0}]
  %s9 = inlined_call_operand.vmem [shape: bf16[2,8,32], index: 9, kind: output, shape index: {1}]
  %s10 = inlined_call_operand.vmem [shape: bf16[2,8,32], index: 10, kind: output, shape index: {2}]
  %11 = xla_tuple %s8, %s9, %s10
  %s12 = sld [smem:[#allocation0]]
  $region81: #{transformer_layer.9} parent=0
    _
  %s14 = ssub.s32 1, %s12
  %s15 = scalar_select 0, %s14, %s12
  loop: start=0, step=1, limit=4
  $region2: #{transformer_layer.9} parent=0 // loop_pre_header
    _
  $region3: #{transformer_layer.9} parent=0 // loop_header
    %s17 = sphi 0, %s21
    %p18 = scmp.ge.s32.totalorder %s17, 4
    %s24 = sphi 0, %s36
    %s25 = sphi 0, %s32
    %s26 = sphi 0, %s24
    %s27 = sphi 0, %s25
    %s28 = sphi 0, %s26
    %s29 = sphi 0, %s27
    %s41 = sphi 0, %s43
    %s44 = sphi 0, %s41
    %s45 = sphi 0, %s44
    %s61 = sphi 0, %s45
    %s65 = sphi 0, %s65
    %s67 = sphi 0, %s65
    %s68 = sphi 0, %s67
    %s82 = sphi 0, %s68
    %s86 = sphi 0, %s86
    %s88 = sphi 0, %s86
    %s89 = sphi 0, %s88
    %s103 = sphi 0, %s89
    %s107 = sphi 0, %s107
    %s109 = sphi 0, %s107
    %s110 = sphi 0, %s109
    %s124 = sphi 0, %s110
    %s128 = sphi 0, %s128
    %s130 = sphi 0, %s128
    %s131 = sphi 0, %s130
    %s145 = sphi 0, %s131
    %s149 = sphi 0, %s149
    %s151 = sphi 0, %s149
    %s152 = sphi 0, %s151
    %s166 = sphi 0, %s152
    %s170 = sphi 0, %s170
    %s172 = sphi 0, %s170
    %s173 = sphi 0, %s172
    %s187 = sphi 0, %s173
    %s191 = sphi 0, %s191
    %s193 = sphi 0, %s191
    %s194 = sphi 0, %s193
    %s208 = sphi 0, %s194
    %s216 = sphi 0, %s218
    %s219 = sphi 0, %s216
    %s220 = sphi 0, %s219
    %s236 = sphi 0, %s220
    %s244 = sphi 0, %s246
    %s247 = sphi 0, %s244
    %s248 = sphi 0, %s247
    %s264 = sphi 0, %s248
    %s272 = sphi 0, %s274
    %s275 = sphi 0, %s272
    %s276 = sphi 0, %s275
    %s292 = sphi 0, %s276
  $region4: #{transformer_layer.9} parent=0 // loop_header_branch
    %20 = sbr.rel (%p18) target = $region8
  $region5: #{transformer_layer.9} parent=0 // loop_body
    %s22 = ssub.s32 %s17, 1
    %s23 = ssub.s32 %s17, 2
    %s30 = sadd.s32 1, %s25
    %p31 = scmp.ge.s32.totalorder %s30, 1
    %s32 = scalar_select %p31, 0, %s30
    %s33 = sadd.s32 1, %s24
    %s34 = scalar_select %p31, %s33, %s24
    %p35 = scmp.ge.s32.totalorder %s34, 2
    %s36 = scalar_select %p35, 0, %s34
    %s37 = ssub.s32 %s24, %s36
    %s38 = ssub.s32 %s25, %s32
    %s39 = sor.u32 %s37, %s38
    %p40 = scmp.eq.s32.totalorder %s39, 0
    %s42 = sadd.s32 %s41, 1
    %s43 = scalar_select %p40, %s41, %s42
    %p46 = pneg %p40
    %p47 = scmp.eq.s32.totalorder %s17, 1
    %p48 = por %p46, %p47
    %p49 = scmp.ne.s32.totalorder %s41, %s44
    %p50 = scmp.eq.s32.totalorder %s17, 0
    %p51 = por %p49, %p50
    %p52 = scmp.ne.s32.totalorder %s41, %s44
    %p53 = scmp.eq.s32.totalorder %s22, 1
    %p54 = por %p52, %p53
    %p55 = scmp.ne.s32.totalorder %s44, %s45
    %p56 = scmp.eq.s32.totalorder %s22, 0
    %p57 = por %p55, %p56
    %p58 = scmp.ne.s32.totalorder %s44, %s45
    %p59 = scmp.eq.s32.totalorder %s23, 1
    %p60 = por %p58, %p59
    %p62 = scmp.ne.s32.totalorder %s45, %s61
    %p63 = scmp.eq.s32.totalorder %s23, 0
    %p64 = por %p62, %p63
    %s66 = sadd.s32 %s65, 1
    %p69 = scmp.eq.s32.totalorder %s17, 1
    %p70 = scmp.ne.s32.totalorder %s65, %s67
    %p71 = scmp.eq.s32.totalorder %s17, 0
    %p72 = por %p70, %p71
    %p73 = scmp.ne.s32.totalorder %s65, %s67
    %p74 = scmp.eq.s32.totalorder %s22, 1
    %p75 = por %p73, %p74
    %p76 = scmp.ne.s32.totalorder %s67, %s68
    %p77 = scmp.eq.s32.totalorder %s22, 0
    %p78 = por %p76, %p77
    %p79 = scmp.ne.s32.totalorder %s67, %s68
    %p80 = scmp.eq.s32.totalorder %s23, 1
    %p81 = por %p79, %p80
    %p83 = scmp.ne.s32.totalorder %s68, %s82
    %p84 = scmp.eq.s32.totalorder %s23, 0
    %p85 = por %p83, %p84
    %s87 = sadd.s32 %s86, 1
    %p90 = scmp.eq.s32.totalorder %s17, 1
    %p91 = scmp.ne.s32.totalorder %s86, %s88
    %p92 = scmp.eq.s32.totalorder %s17, 0
    %p93 = por %p91, %p92
    %p94 = scmp.ne.s32.totalorder %s86, %s88
    %p95 = scmp.eq.s32.totalorder %s22, 1
    %p96 = por %p94, %p95
    %p97 = scmp.ne.s32.totalorder %s88, %s89
    %p98 = scmp.eq.s32.totalorder %s22, 0
    %p99 = por %p97, %p98
    %p100 = scmp.ne.s32.totalorder %s88, %s89
    %p101 = scmp.eq.s32.totalorder %s23, 1
    %p102 = por %p100, %p101
    %p104 = scmp.ne.s32.totalorder %s89, %s103
    %p105 = scmp.eq.s32.totalorder %s23, 0
    %p106 = por %p104, %p105
    %s108 = sadd.s32 %s107, 1
    %p111 = scmp.eq.s32.totalorder %s17, 1
    %p112 = scmp.ne.s32.totalorder %s107, %s109
    %p113 = scmp.eq.s32.totalorder %s17, 0
    %p114 = por %p112, %p113
    %p115 = scmp.ne.s32.totalorder %s107, %s109
    %p116 = scmp.eq.s32.totalorder %s22, 1
    %p117 = por %p115, %p116
    %p118 = scmp.ne.s32.totalorder %s109, %s110
    %p119 = scmp.eq.s32.totalorder %s22, 0
    %p120 = por %p118, %p119
    %p121 = scmp.ne.s32.totalorder %s109, %s110
    %p122 = scmp.eq.s32.totalorder %s23, 1
    %p123 = por %p121, %p122
    %p125 = scmp.ne.s32.totalorder %s110, %s124
    %p126 = scmp.eq.s32.totalorder %s23, 0
    %p127 = por %p125, %p126
    %s129 = sadd.s32 %s128, 1
    %p132 = scmp.eq.s32.totalorder %s17, 1
    %p133 = scmp.ne.s32.totalorder %s128, %s130
    %p134 = scmp.eq.s32.totalorder %s17, 0
    %p135 = por %p133, %p134
    %p136 = scmp.ne.s32.totalorder %s128, %s130
    %p137 = scmp.eq.s32.totalorder %s22, 1
    %p138 = por %p136, %p137
    %p139 = scmp.ne.s32.totalorder %s130, %s131
    %p140 = scmp.eq.s32.totalorder %s22, 0
    %p141 = por %p139, %p140
    %p142 = scmp.ne.s32.totalorder %s130, %s131
    %p143 = scmp.eq.s32.totalorder %s23, 1
    %p144 = por %p142, %p143
    %p146 = scmp.ne.s32.totalorder %s131, %s145
    %p147 = scmp.eq.s32.totalorder %s23, 0
    %p148 = por %p146, %p147
    %s150 = sadd.s32 %s149, 1
    %p153 = scmp.eq.s32.totalorder %s17, 1
    %p154 = scmp.ne.s32.totalorder %s149, %s151
    %p155 = scmp.eq.s32.totalorder %s17, 0
    %p156 = por %p154, %p155
    %p157 = scmp.ne.s32.totalorder %s149, %s151
    %p158 = scmp.eq.s32.totalorder %s22, 1
    %p159 = por %p157, %p158
    %p160 = scmp.ne.s32.totalorder %s151, %s152
    %p161 = scmp.eq.s32.totalorder %s22, 0
    %p162 = por %p160, %p161
    %p163 = scmp.ne.s32.totalorder %s151, %s152
    %p164 = scmp.eq.s32.totalorder %s23, 1
    %p165 = por %p163, %p164
    %p167 = scmp.ne.s32.totalorder %s152, %s166
    %p168 = scmp.eq.s32.totalorder %s23, 0
    %p169 = por %p167, %p168
    %s171 = sadd.s32 %s170, 1
    %p174 = scmp.eq.s32.totalorder %s17, 1
    %p175 = scmp.ne.s32.totalorder %s170, %s172
    %p176 = scmp.eq.s32.totalorder %s17, 0
    %p177 = por %p175, %p176
    %p178 = scmp.ne.s32.totalorder %s170, %s172
    %p179 = scmp.eq.s32.totalorder %s22, 1
    %p180 = por %p178, %p179
    %p181 = scmp.ne.s32.totalorder %s172, %s173
    %p182 = scmp.eq.s32.totalorder %s22, 0
    %p183 = por %p181, %p182
    %p184 = scmp.ne.s32.totalorder %s172, %s173
    %p185 = scmp.eq.s32.totalorder %s23, 1
    %p186 = por %p184, %p185
    %p188 = scmp.ne.s32.totalorder %s173, %s187
    %p189 = scmp.eq.s32.totalorder %s23, 0
    %p190 = por %p188, %p189
    %s192 = sadd.s32 %s191, 1
    %p195 = scmp.eq.s32.totalorder %s17, 1
    %p196 = scmp.ne.s32.totalorder %s191, %s193
    %p197 = scmp.eq.s32.totalorder %s17, 0
    %p198 = por %p196, %p197
    %p199 = scmp.ne.s32.totalorder %s191, %s193
    %p200 = scmp.eq.s32.totalorder %s22, 1
    %p201 = por %p199, %p200
    %p202 = scmp.ne.s32.totalorder %s193, %s194
    %p203 = scmp.eq.s32.totalorder %s22, 0
    %p204 = por %p202, %p203
    %p205 = scmp.ne.s32.totalorder %s193, %s194
    %p206 = scmp.eq.s32.totalorder %s23, 1
    %p207 = por %p205, %p206
    %p209 = scmp.ne.s32.totalorder %s194, %s208
    %p210 = scmp.eq.s32.totalorder %s23, 0
    %p211 = por %p209, %p210
    %s212 = ssub.s32 %s24, %s36
    %s213 = ssub.s32 %s25, %s32
    %s214 = sor.u32 %s212, %s213
    %p215 = scmp.eq.s32.totalorder %s214, 0
    %s217 = sadd.s32 %s216, 1
    %s218 = scalar_select %p215, %s216, %s217
    %p221 = pneg %p215
    %p222 = scmp.eq.s32.totalorder %s17, 1
    %p223 = por %p221, %p222
    %p224 = scmp.ne.s32.totalorder %s216, %s219
    %p225 = scmp.eq.s32.totalorder %s17, 0
    %p226 = por %p224, %p225
    %p227 = scmp.ne.s32.totalorder %s216, %s219
    %p228 = scmp.eq.s32.totalorder %s22, 1
    %p229 = por %p227, %p228
    %p230 = scmp.ne.s32.totalorder %s219, %s220
    %p231 = scmp.eq.s32.totalorder %s22, 0
    %p232 = por %p230, %p231
    %p233 = scmp.ne.s32.totalorder %s219, %s220
    %p234 = scmp.eq.s32.totalorder %s23, 1
    %p235 = por %p233, %p234
    %p237 = scmp.ne.s32.totalorder %s220, %s236
    %p238 = scmp.eq.s32.totalorder %s23, 0
    %p239 = por %p237, %p238
    %s240 = ssub.s32 %s24, %s36
    %s241 = ssub.s32 %s25, %s32
    %s242 = sor.u32 %s240, %s241
    %p243 = scmp.eq.s32.totalorder %s242, 0
    %s245 = sadd.s32 %s244, 1
    %s246 = scalar_select %p243, %s244, %s245
    %p249 = pneg %p243
    %p250 = scmp.eq.s32.totalorder %s17, 1
    %p251 = por %p249, %p250
    %p252 = scmp.ne.s32.totalorder %s244, %s247
    %p253 = scmp.eq.s32.totalorder %s17, 0
    %p254 = por %p252, %p253
    %p255 = scmp.ne.s32.totalorder %s244, %s247
    %p256 = scmp.eq.s32.totalorder %s22, 1
    %p257 = por %p255, %p256
    %p258 = scmp.ne.s32.totalorder %s247, %s248
    %p259 = scmp.eq.s32.totalorder %s22, 0
    %p260 = por %p258, %p259
    %p261 = scmp.ne.s32.totalorder %s247, %s248
    %p262 = scmp.eq.s32.totalorder %s23, 1
    %p263 = por %p261, %p262
    %p265 = scmp.ne.s32.totalorder %s248, %s264
    %p266 = scmp.eq.s32.totalorder %s23, 0
    %p267 = por %p265, %p266
    %s268 = ssub.s32 %s24, %s36
    %s269 = ssub.s32 %s25, %s32
    %s270 = sor.u32 %s268, %s269
    %p271 = scmp.eq.s32.totalorder %s270, 0
    %s273 = sadd.s32 %s272, 1
    %s274 = scalar_select %p271, %s272, %s273
    %p277 = pneg %p271
    %p278 = scmp.eq.s32.totalorder %s17, 1
    %p279 = por %p277, %p278
    %p280 = scmp.ne.s32.totalorder %s272, %s275
    %p281 = scmp.eq.s32.totalorder %s17, 0
    %p282 = por %p280, %p281
    %p283 = scmp.ne.s32.totalorder %s272, %s275
    %p284 = scmp.eq.s32.totalorder %s22, 1
    %p285 = por %p283, %p284
    %p286 = scmp.ne.s32.totalorder %s275, %s276
    %p287 = scmp.eq.s32.totalorder %s22, 0
    %p288 = por %p286, %p287
    %p289 = scmp.ne.s32.totalorder %s275, %s276
    %p290 = scmp.eq.s32.totalorder %s23, 1
    %p291 = por %p289, %p290
    %p293 = scmp.ne.s32.totalorder %s276, %s292
    %p294 = scmp.eq.s32.totalorder %s23, 0
    %p295 = por %p293, %p294
    %p296 = scmp.le.s32.totalorder 1, %s17
    %p297 = scmp.lt.s32.totalorder %s17, 3
    %p298 = pnand %p296, %p297
    %p299 = pneg %p298
    // Predicated region
    $region9: #{transformer_layer.9} parent=5 // pred_check
      _
    $region10: #{transformer_layer.9} parent=5 // pred_check_branch
      %301 = sbr.rel (%p298) target = $region12
    $region11: #{transformer_layer.9} parent=5 // pred_region
      %s302 = ssub.s32 %s17, 1
      // Predicated region
      $region13: #{transformer_layer.9} parent=11 // pred_check
        %p303 = pneg %p78
      $region14: #{transformer_layer.9} parent=11 // pred_check_branch
        %305 = sbr.rel (%p303) target = $region16
      $region15: #{transformer_layer.9} parent=11 // pred_region
        _
      $region16: #{transformer_layer.9} parent=11 // pred_fallthru
        _
      // Predicated region
      $region17: #{transformer_layer.9} parent=11 // pred_check
        %p306 = pneg %p99
      $region18: #{transformer_layer.9} parent=11 // pred_check_branch
        %308 = sbr.rel (%p306) target = $region20
      $region19: #{transformer_layer.9} parent=11 // pred_region
        _
      $region20: #{transformer_layer.9} parent=11 // pred_fallthru
        _
      // Predicated region
      $region21: #{transformer_layer.9} parent=11 // pred_check
        %p309 = pneg %p120
      $region22: #{transformer_layer.9} parent=11 // pred_check_branch
        %311 = sbr.rel (%p309) target = $region24
      $region23: #{transformer_layer.9} parent=11 // pred_region
        _
      $region24: #{transformer_layer.9} parent=11 // pred_fallthru
        _
      // Predicated region
      $region25: #{transformer_layer.9} parent=11 // pred_check
        %p312 = pneg %p141
      $region26: #{transformer_layer.9} parent=11 // pred_check_branch
        %314 = sbr.rel (%p312) target = $region28
      $region27: #{transformer_layer.9} parent=11 // pred_region
        _
      $region28: #{transformer_layer.9} parent=11 // pred_fallthru
        _
      // Predicated region
      $region29: #{transformer_layer.9} parent=11 // pred_check
        %p315 = pneg %p162
      $region30: #{transformer_layer.9} parent=11 // pred_check_branch
        %317 = sbr.rel (%p315) target = $region32
      $region31: #{transformer_layer.9} parent=11 // pred_region
        _
      $region32: #{transformer_layer.9} parent=11 // pred_fallthru
        _
      // Predicated region
      $region33: #{transformer_layer.9} parent=11 // pred_check
        %p318 = pneg %p183
      $region34: #{transformer_layer.9} parent=11 // pred_check_branch
        %320 = sbr.rel (%p318) target = $region36
      $region35: #{transformer_layer.9} parent=11 // pred_region
        _
      $region36: #{transformer_layer.9} parent=11 // pred_fallthru
        _
      // Predicated region
      $region37: #{transformer_layer.9} parent=11 // pred_check
        %p321 = pneg %p204
      $region38: #{transformer_layer.9} parent=11 // pred_check_branch
        %323 = sbr.rel (%p321) target = $region40
      $region39: #{transformer_layer.9} parent=11 // pred_region
        _
      $region40: #{transformer_layer.9} parent=11 // pred_fallthru
        _
    $region12: #{transformer_layer.9} parent=5 // pred_fallthru
      _
    %p324 = scmp.lt.s32.totalorder %s17, 2
    // Predicated region
    $region41: #{transformer_layer.9} parent=5 // pred_check
      %p325 = pneg %p324
    $region42: #{transformer_layer.9} parent=5 // pred_check_branch
      %327 = sbr.rel (%p325) target = $region44
    $region43: #{transformer_layer.9} parent=5 // pred_region
      // Predicated region
      $region45: #{transformer_layer.9} parent=43 // pred_check
        %p328 = pneg %p51
      $region46: #{transformer_layer.9} parent=43 // pred_check_branch
        %330 = sbr.rel (%p328) target = $region48
      $region47: #{transformer_layer.9} parent=43 // pred_region
        %p331 = scmp.lt.s32.totalorder %s24, 1
        %s332 = scalar_select %p331, %s24, 1
        %p333 = scmp.lt.s32.totalorder %s25, 0
        %s334 = scalar_select %p333, %s25, 0
        %s335 = sadd.s32 %s334, %s332
        %s336 = smul.addr %s335, 4
        %s337 = scalar_lea.vmem %s0, %s336
      $region48: #{transformer_layer.9} parent=43 // pred_fallthru
        _
    $region44: #{transformer_layer.9} parent=5 // pred_fallthru
      _
    %p338 = scmp.le.s32.totalorder 1, %s17
    %p339 = scmp.lt.s32.totalorder %s17, 3
    %p340 = pnand %p338, %p339
    %p341 = pneg %p340
    // Predicated region
    $region49: #{transformer_layer.9} parent=5 // pred_check
      _
    $region50: #{transformer_layer.9} parent=5 // pred_check_branch
      %343 = sbr.rel (%p340) target = $region52
    $region51: #{transformer_layer.9} parent=5 // pred_region
      %s344 = ssub.s32 %s17, 1
      %p345 = scmp.lt.s32.totalorder %s26, 1
      %s346 = scalar_select %p345, %s26, 1
      %p347 = scmp.lt.s32.totalorder %s27, 0
      %s348 = scalar_select %p347, %s27, 0
      %s349 = sadd.s32 %s348, %s346
      %s350 = smul.addr %s349, 4
      %s351 = scalar_lea.vmem %s0, %s350
      %p352 = pneg %p57
      %p353 = pneg %p54
      %p354 = pneg %p78
      %p355 = pneg %p75
      %p356 = pneg %p99
      %p357 = pneg %p96
      %p358 = pneg %p120
      %p359 = pneg %p117
      %p360 = pneg %p141
      %p361 = pneg %p138
      %p362 = pneg %p162
      %p363 = pneg %p159
      %p364 = pneg %p183
      %p365 = pneg %p180
      %p366 = pneg %p204
      %p367 = pneg %p201
      %p368 = pneg %p232
      %p369 = pneg %p229
      %p370 = scmp.lt.s32.totalorder %s26, 1
      %s371 = scalar_select %p370, %s26, 1
      %p372 = scmp.lt.s32.totalorder %s27, 0
      %s373 = scalar_select %p372, %s27, 0
      %s374 = sadd.s32 %s373, %s371
      %s375 = smul.addr %s374, 4
      %s376 = scalar_lea.vmem %s8, %s375
      %p377 = pneg %p260
      %p378 = pneg %p257
      %p379 = scmp.lt.s32.totalorder %s26, 1
      %s380 = scalar_select %p379, %s26, 1
      %p381 = scmp.lt.s32.totalorder %s27, 0
      %s382 = scalar_select %p381, %s27, 0
      %s383 = sadd.s32 %s382, %s380
      %s384 = smul.addr %s383, 4
      %s385 = scalar_lea.vmem %s9, %s384
      %p386 = pneg %p288
      %p387 = pneg %p285
      %p388 = scmp.lt.s32.totalorder %s26, 1
      %s389 = scalar_select %p388, %s26, 1
      %p390 = scmp.lt.s32.totalorder %s27, 0
      %s391 = scalar_select %p390, %s27, 0
      %s392 = sadd.s32 %s391, %s389
      %s393 = smul.addr %s392, 4
      %s394 = scalar_lea.vmem %s10, %s393
      %p395 = scmp.lt.s32.totalorder %s26, 1
      %s396 = scalar_select %p395, %s26, 1
      %p397 = scmp.lt.s32.totalorder %s27, 0
      %s398 = scalar_select %p397, %s27, 0
      %s399 = sadd.s32 %s398, %s396
      %s400 = smul.addr %s399, 4
      %s401 = scalar_lea.vmem %s0, %s400
      %p402 = scmp.lt.s32.totalorder %s26, 1
      %s403 = scalar_select %p402, %s26, 1
      %p404 = scmp.lt.s32.totalorder %s27, 0
      %s405 = scalar_select %p404, %s27, 0
      %s406 = sadd.s32 %s405, %s403
      %s407 = smul.addr %s406, 4
      %s408 = scalar_lea.vmem %s8, %s407
      %p409 = scmp.lt.s32.totalorder %s26, 1
      %s410 = scalar_select %p409, %s26, 1
      %p411 = scmp.lt.s32.totalorder %s27, 0
      %s412 = scalar_select %p411, %s27, 0
      %s413 = sadd.s32 %s412, %s410
      %s414 = smul.addr %s413, 4
      %s415 = scalar_lea.vmem %s9, %s414
      %p416 = scmp.lt.s32.totalorder %s26, 1
      %s417 = scalar_select %p416, %s26, 1
      %p418 = scmp.lt.s32.totalorder %s27, 0
      %s419 = scalar_select %p418, %s27, 0
      %s420 = sadd.s32 %s419, %s417
      %s421 = smul.addr %s420, 4
      %s422 = scalar_lea.vmem %s10, %s421
      %v424 = vld [vmem:[%s401] sm:$0xf]
      %v425 = vunpack.c.l.bf16 %v424
      %v426 = vld [vmem:[%s1] sm:$0x1]
      %v427 = vmul.f32 %v425, %v425
      %vm428 = vcmask 261120
      %v429 = vsel %vm428, %v427, 0.0
      %430 = vadd.xlane.f32.xlu0 %v429
      %v431 = vpop.xlane.xlu0 %430
      %v432 = vrcp.pop 32.0
      %v433 = vmul.f32 %v431, %v432
      %v434 = vadd.f32 %v433, 1.1920929e-07
      %v435 = vrsqrt.pop %v434
      %v436 = vmul.f32 %v425, %v435
      %v438 = vlaneseq
      %v439 = vshrl.u32 %v438, 7
      %v440 = vsub.s32 0, %v439
      %v441 = vrot.slane %v426, %v440
      %v443 = vmul.f32 %v436, %v441
      %v444 = vpack.c.bf16 %v443, %v443
      %v445 = vld [vmem:[%s2] sm:$0xf]
      %v446 = vld [vmem:[%s2 + $0x4] sm:$0xf]
      %v447 = vld [vmem:[%s2 + $0x8] sm:$0xf]
      %v448 = vld [vmem:[%s2 + $0xc] sm:$0xf]
      %v449 = vld [vmem:[%s3] sm:$0x1]
      %v451 = vlaneseq
      %v452 = vshrl.u32 %v451, 7
      %v453 = vsub.s32 0, %v452
      %v454 = vrot.slane %v449, %v453
      %v460 = vunpack.c.l.b16 %v445
      %v461 = vunpack.c.l.b16 %v446
      %v462 = vunpack.c.l.b16 %v447
      %v463 = vunpack.c.l.b16 %v448
      %v464 = vpack.c.b16 %v461, %v460
      %v465 = vpack.c.b16 %v463, %v462
      %v469 = vsel %vm428, %v444, 0
      %471 = vmatprep.subr.bf16.mxu0 0
      %472 = vmatpush1.bf16.msra.mxu0 %v464
      %473 = vmatprep.subr.bf16.mxu0 0
      %474 = vmatpush1.bf16.msra.mxu0 %v465
      %475 = vmatprep.subr.bf16.mxu0 0
      %476 = vmatpush1.bf16.msra.mxu0 0
      %477 = vmatprep.subr.bf16.mxu0 0
      %478 = vmatpush1.bf16.msra.mxu0 0
      %479 = vmatprep.subr.bf16.mxu0 0
      %480 = vmatpush1.bf16.msra.mxu0 0
      %481 = vmatprep.subr.bf16.mxu0 0
      %482 = vmatpush1.bf16.msra.mxu0 0
      %483 = vmatprep.subr.bf16.mxu0 0
      %484 = vmatpush1.bf16.msra.mxu0 0
      %485 = vmatprep.subr.bf16.mxu0 0
      %486 = vmatpush1.bf16.msra.mxu0 0
      %487 = vmatprep.subr.bf16.mxu0 0
      %488 = vmatpush1.bf16.msra.mxu0 0
      %489 = vmatprep.subr.bf16.mxu0 0
      %490 = vmatpush1.bf16.msra.mxu0 0
      %491 = vmatprep.subr.bf16.mxu0 0
      %492 = vmatpush1.bf16.msra.mxu0 0
      %493 = vmatprep.subr.bf16.mxu0 0
      %494 = vmatpush1.bf16.msra.mxu0 0
      %495 = vmatprep.subr.bf16.mxu0 0
      %496 = vmatpush1.bf16.msra.mxu0 0
      %497 = vmatprep.subr.bf16.mxu0 0
      %498 = vmatpush1.bf16.msra.mxu0 0
      %499 = vmatprep.subr.bf16.mxu0 0
      %500 = vmatpush1.bf16.msra.mxu0 0
      %501 = vmatprep.subr.bf16.mxu0 0
      %502 = vmatpush1.bf16.msra.mxu0 0
      %503 = vmatprep.mubr.bf16.mxu0 0
      %504 = vmatmul.mubr.bf16.gmra.mrb[0].mxu0 %v469
      %v505 = vpop.f32.mrb[0].mxu0
      %v506 = vadd.f32 %v454, %v505
      %v507 = vpop.f32.mrb[0].mxu0
      %v508 = vpop.f32.mrb[0].mxu0
      %v509 = vpop.f32.mrb[0].mxu0
      %510 = vdwg.mxu0
      %v511 = vld [vmem:[%s4] sm:$0xf]
      %v512 = vld [vmem:[%s4 + $0x4] sm:$0xf]
      %v513 = vld [vmem:[%s4 + $0x8] sm:$0xf]
      %v514 = vld [vmem:[%s4 + $0xc] sm:$0xf]
      %v515 = vld [vmem:[%s5] sm:$0x1]
      %v517 = vlaneseq
      %v518 = vshrl.u32 %v517, 7
      %v519 = vsub.s32 0, %v518
      %v520 = vrot.slane %v515, %v519
      %v526 = vunpack.c.l.b16 %v511
      %v527 = vunpack.c.l.b16 %v512
      %v528 = vunpack.c.l.b16 %v513
      %v529 = vunpack.c.l.b16 %v514
      %v530 = vpack.c.b16 %v527, %v526
      %v531 = vpack.c.b16 %v529, %v528
      %534 = vmatprep.subr.bf16.mxu0 0
      %535 = vmatpush1.bf16.msra.mxu0 %v530
      %536 = vmatprep.subr.bf16.mxu0 0
      %537 = vmatpush1.bf16.msra.mxu0 %v531
      %538 = vmatprep.subr.bf16.mxu0 0
      %539 = vmatpush1.bf16.msra.mxu0 0
      %540 = vmatprep.subr.bf16.mxu0 0
      %541 = vmatpush1.bf16.msra.mxu0 0
      %542 = vmatprep.subr.bf16.mxu0 0
      %543 = vmatpush1.bf16.msra.mxu0 0
      %544 = vmatprep.subr.bf16.mxu0 0
      %545 = vmatpush1.bf16.msra.mxu0 0
      %546 = vmatprep.subr.bf16.mxu0 0
      %547 = vmatpush1.bf16.msra.mxu0 0
      %548 = vmatprep.subr.bf16.mxu0 0
      %549 = vmatpush1.bf16.msra.mxu0 0
      %550 = vmatprep.subr.bf16.mxu0 0
      %551 = vmatpush1.bf16.msra.mxu0 0
      %552 = vmatprep.subr.bf16.mxu0 0
      %553 = vmatpush1.bf16.msra.mxu0 0
      %554 = vmatprep.subr.bf16.mxu0 0
      %555 = vmatpush1.bf16.msra.mxu0 0
      %556 = vmatprep.subr.bf16.mxu0 0
      %557 = vmatpush1.bf16.msra.mxu0 0
      %558 = vmatprep.subr.bf16.mxu0 0
      %559 = vmatpush1.bf16.msra.mxu0 0
      %560 = vmatprep.subr.bf16.mxu0 0
      %561 = vmatpush1.bf16.msra.mxu0 0
      %562 = vmatprep.subr.bf16.mxu0 0
      %563 = vmatpush1.bf16.msra.mxu0 0
      %564 = vmatprep.subr.bf16.mxu0 0
      %565 = vmatpush1.bf16.msra.mxu0 0
      %566 = vmatprep.mubr.bf16.mxu0 0
      %567 = vmatmul.mubr.bf16.gmra.mrb[0].mxu0 %v469
      %v568 = vpop.f32.mrb[0].mxu0
      %v569 = vadd.f32 %v520, %v568
      %v570 = vpop.f32.mrb[0].mxu0
      %v571 = vpop.f32.mrb[0].mxu0
      %v572 = vpop.f32.mrb[0].mxu0
      %573 = vdwg.mxu0
      %v574 = vld [vmem:[%s6] sm:$0xf]
      %v575 = vld [vmem:[%s6 + $0x4] sm:$0xf]
      %v576 = vld [vmem:[%s6 + $0x8] sm:$0xf]
      %v577 = vld [vmem:[%s6 + $0xc] sm:$0xf]
      %v578 = vld [vmem:[%s7] sm:$0x1]
      %v580 = vlaneseq
      %v581 = vshrl.u32 %v580, 7
      %v582 = vsub.s32 0, %v581
      %v583 = vrot.slane %v578, %v582
      %v589 = vunpack.c.l.b16 %v574
      %v590 = vunpack.c.l.b16 %v575
      %v591 = vunpack.c.l.b16 %v576
      %v592 = vunpack.c.l.b16 %v577
      %v593 = vpack.c.b16 %v590, %v589
      %v594 = vpack.c.b16 %v592, %v591
      %597 = vmatprep.subr.bf16.mxu0 0
      %598 = vmatpush1.bf16.msra.mxu0 %v593
      %599 = vmatprep.subr.bf16.mxu0 0
      %600 = vmatpush1.bf16.msra.mxu0 %v594
      %601 = vmatprep.subr.bf16.mxu0 0
      %602 = vmatpush1.bf16.msra.mxu0 0
      %603 = vmatprep.subr.bf16.mxu0 0
      %604 = vmatpush1.bf16.msra.mxu0 0
      %605 = vmatprep.subr.bf16.mxu0 0
      %606 = vmatpush1.bf16.msra.mxu0 0
      %607 = vmatprep.subr.bf16.mxu0 0
      %608 = vmatpush1.bf16.msra.mxu0 0
      %609 = vmatprep.subr.bf16.mxu0 0
      %610 = vmatpush1.bf16.msra.mxu0 0
      %611 = vmatprep.subr.bf16.mxu0 0
      %612 = vmatpush1.bf16.msra.mxu0 0
      %613 = vmatprep.subr.bf16.mxu0 0
      %614 = vmatpush1.bf16.msra.mxu0 0
      %615 = vmatprep.subr.bf16.mxu0 0
      %616 = vmatpush1.bf16.msra.mxu0 0
      %617 = vmatprep.subr.bf16.mxu0 0
      %618 = vmatpush1.bf16.msra.mxu0 0
      %619 = vmatprep.subr.bf16.mxu0 0
      %620 = vmatpush1.bf16.msra.mxu0 0
      %621 = vmatprep.subr.bf16.mxu0 0
      %622 = vmatpush1.bf16.msra.mxu0 0
      %623 = vmatprep.subr.bf16.mxu0 0
      %624 = vmatpush1.bf16.msra.mxu0 0
      %625 = vmatprep.subr.bf16.mxu0 0
      %626 = vmatpush1.bf16.msra.mxu0 0
      %627 = vmatprep.subr.bf16.mxu0 0
      %628 = vmatpush1.bf16.msra.mxu0 0
      %629 = vmatprep.mubr.bf16.mxu0 0
      %630 = vmatmul.mubr.bf16.gmra.mrb[0].mxu0 %v469
      %v631 = vpop.f32.mrb[0].mxu0
      %v632 = vadd.f32 %v583, %v631
      %v633 = vpop.f32.mrb[0].mxu0
      %v634 = vpop.f32.mrb[0].mxu0
      %v635 = vpop.f32.mrb[0].mxu0
      %636 = vdwg.mxu0
      %v637 = vmul.f32 %v506, 0.35355338
      %v638 = vpack.c.bf16 %v637, %v637
      %vm639 = vcmask 257024
      %640 = vst.msk [vmem:[%s408] sm:$0xf] %vm639, %v638
      %v641 = vpack.c.bf16 %v569, %v569
      %642 = vst.msk [vmem:[%s415] sm:$0xf] %vm639, %v641
      %v643 = vpack.c.bf16 %v632, %v632
      %644 = vst.msk [vmem:[%s422] sm:$0xf] %vm639, %v643
      %p645 = scmp.lt.s32.totalorder %s26, 1
      %s646 = scalar_select %p645, %s26, 1
      %p647 = scmp.lt.s32.totalorder %s27, 0
      %s648 = scalar_select %p647, %s27, 0
      %s649 = sadd.s32 %s648, %s646
      %s650 = smul.addr %s649, 4
      %s651 = scalar_lea.vmem %s8, %s650
      %p652 = scmp.lt.s32.totalorder %s26, 1
      %s653 = scalar_select %p652, %s26, 1
      %p654 = scmp.lt.s32.totalorder %s27, 0
      %s655 = scalar_select %p654, %s27, 0
      %s656 = sadd.s32 %s655, %s653
      %s657 = smul.addr %s656, 4
      %s658 = scalar_lea.vmem %s9, %s657
      %p659 = scmp.lt.s32.totalorder %s26, 1
      %s660 = scalar_select %p659, %s26, 1
      %p661 = scmp.lt.s32.totalorder %s27, 0
      %s662 = scalar_select %p661, %s27, 0
      %s663 = sadd.s32 %s662, %s660
      %s664 = smul.addr %s663, 4
      %s665 = scalar_lea.vmem %s10, %s664
      // Predicated region
      $region53: #{transformer_layer.9} parent=51 // pred_check
        %p666 = pneg %p229
      $region54: #{transformer_layer.9} parent=51 // pred_check_branch
        %668 = sbr.rel (%p666) target = $region56
      $region55: #{transformer_layer.9} parent=51 // pred_region
        _
      $region56: #{transformer_layer.9} parent=51 // pred_fallthru
        _
      // Predicated region
      $region57: #{transformer_layer.9} parent=51 // pred_check
        %p669 = pneg %p257
      $region58: #{transformer_layer.9} parent=51 // pred_check_branch
        %671 = sbr.rel (%p669) target = $region60
      $region59: #{transformer_layer.9} parent=51 // pred_region
        _
      $region60: #{transformer_layer.9} parent=51 // pred_fallthru
        _
      // Predicated region
      $region61: #{transformer_layer.9} parent=51 // pred_check
        %p672 = pneg %p285
      $region62: #{transformer_layer.9} parent=51 // pred_check_branch
        %674 = sbr.rel (%p672) target = $region64
      $region63: #{transformer_layer.9} parent=51 // pred_region
        _
      $region64: #{transformer_layer.9} parent=51 // pred_fallthru
        _
    $region52: #{transformer_layer.9} parent=5 // pred_fallthru
      _
    %p675 = scmp.le.s32.totalorder 2, %s17
    // Predicated region
    $region65: #{transformer_layer.9} parent=5 // pred_check
      %p676 = pneg %p675
    $region66: #{transformer_layer.9} parent=5 // pred_check_branch
      %678 = sbr.rel (%p676) target = $region68
    $region67: #{transformer_layer.9} parent=5 // pred_region
      %s679 = ssub.s32 %s17, 2
      // Predicated region
      $region69: #{transformer_layer.9} parent=67 // pred_check
        %p680 = pneg %p235
      $region70: #{transformer_layer.9} parent=67 // pred_check_branch
        %682 = sbr.rel (%p680) target = $region72
      $region71: #{transformer_layer.9} parent=67 // pred_region
        %p683 = scmp.lt.s32.totalorder %s28, 1
        %s684 = scalar_select %p683, %s28, 1
        %p685 = scmp.lt.s32.totalorder %s29, 0
        %s686 = scalar_select %p685, %s29, 0
        %s687 = sadd.s32 %s686, %s684
        %s688 = smul.addr %s687, 4
        %s689 = scalar_lea.vmem %s8, %s688
      $region72: #{transformer_layer.9} parent=67 // pred_fallthru
        _
      // Predicated region
      $region73: #{transformer_layer.9} parent=67 // pred_check
        %p690 = pneg %p263
      $region74: #{transformer_layer.9} parent=67 // pred_check_branch
        %692 = sbr.rel (%p690) target = $region76
      $region75: #{transformer_layer.9} parent=67 // pred_region
        %p693 = scmp.lt.s32.totalorder %s28, 1
        %s694 = scalar_select %p693, %s28, 1
        %p695 = scmp.lt.s32.totalorder %s29, 0
        %s696 = scalar_select %p695, %s29, 0
        %s697 = sadd.s32 %s696, %s694
        %s698 = smul.addr %s697, 4
        %s699 = scalar_lea.vmem %s9, %s698
      $region76: #{transformer_layer.9} parent=67 // pred_fallthru
        _
      // Predicated region
      $region77: #{transformer_layer.9} parent=67 // pred_check
        %p700 = pneg %p291
      $region78: #{transformer_layer.9} parent=67 // pred_check_branch
        %702 = sbr.rel (%p700) target = $region80
      $region79: #{transformer_layer.9} parent=67 // pred_region
        %p703 = scmp.lt.s32.totalorder %s28, 1
        %s704 = scalar_select %p703, %s28, 1
        %p705 = scmp.lt.s32.totalorder %s29, 0
        %s706 = scalar_select %p705, %s29, 0
        %s707 = sadd.s32 %s706, %s704
        %s708 = smul.addr %s707, 4
        %s709 = scalar_lea.vmem %s10, %s708
      $region80: #{transformer_layer.9} parent=67 // pred_fallthru
        _
    $region68: #{transformer_layer.9} parent=5 // pred_fallthru
      _
  $region6: #{transformer_layer.9} parent=0 // loop_footer
    %s21 = sadd.s32 1, %s17
  $region7: #{transformer_layer.9} parent=0 // loop_footer_branch
    %16 = sbr.rel target = $region3
  $region8: #{transformer_layer.9} parent=0 // loop_exit
    _

// kernel: transformer_layer.7
$region0: #{transformer_layer.7}
  #allocation0 [shape = 'u32[]', space=smem, size = 0x4, offset = 0x4, fixed_abs, tag = 'smem constant byte address 0x4 - core index']
  #allocation1 [shape = 'u32[144,128]{1,0:T(1,128)}', space=vmem, size = 0x12000, scoped, tag = 'internal scratch']
  #allocation2 [shape = 'f32[4,8,1]{2,1,0:T(8,128)}', space=vmem, size = 0x4000, scoped, tag = 'scratch operand']
  #allocation3 [shape = 'f32[4,8,1]{2,1,0:T(8,128)}', space=vmem, size = 0x4000, scoped, tag = 'scratch operand']
  #allocation4 [shape = 'f32[4,8,8]{2,1,0:T(8,128)}', space=vmem, size = 0x4000, scoped, tag = 'scratch operand']
  %s0 = inlined_call_operand.vmem [shape: bf16[2,8,32], index: 0, kind: input, shape index: {}]
  %s1 = inlined_call_operand.vmem [shape: bf16[2,8,32], index: 1, kind: input, shape index: {}]
  %s2 = inlined_call_operand.vmem [shape: bf16[2,8,32], index: 2, kind: input, shape index: {}]
  %s3 = inlined_call_operand.vmem [shape: bf16[2,8,32], index: 3, kind: input, shape index: {}]
  %s4 = inlined_call_operand.vmem [shape: bf16[4,8,32], index: 4, kind: input, shape index: {}]
  %s5 = inlined_call_operand.vmem [shape: f32[1,32], index: 5, kind: input, shape index: {}]
  %s6 = inlined_call_operand.vmem [shape: bf16[2,8,32], index: 6, kind: output, shape index: {}]
  %s7 = sld [smem:[#allocation0]]
  $region65: #{transformer_layer.7} parent=0
    _
  %s9 = ssub.s32 1, %s7
  %s10 = scalar_select 0, %s9, %s7
  loop: start=0, step=1, limit=4
  $region2: #{transformer_layer.7} parent=0 // loop_pre_header
    _
  $region3: #{transformer_layer.7} parent=0 // loop_header
    %s12 = sphi 0, %s16
    %p13 = scmp.ge.s32.totalorder %s12, 4
    %s19 = sphi 0, %s38
    %s20 = sphi 0, %s34
    %s21 = sphi 0, %s30
    %s22 = sphi 0, %s19
    %s23 = sphi 0, %s20
    %s24 = sphi 0, %s21
    %s25 = sphi 0, %s22
    %s26 = sphi 0, %s23
    %s27 = sphi 0, %s24
    %s43 = sphi 0, %s45
    %s46 = sphi 0, %s43
    %s47 = sphi 0, %s46
    %s63 = sphi 0, %s47
    %s71 = sphi 0, %s73
    %s74 = sphi 0, %s71
    %s75 = sphi 0, %s74
    %s91 = sphi 0, %s75
    %s99 = sphi 0, %s101
    %s102 = sphi 0, %s99
    %s103 = sphi 0, %s102
    %s119 = sphi 0, %s103
    %s127 = sphi 0, %s129
    %s130 = sphi 0, %s127
    %s131 = sphi 0, %s130
    %s147 = sphi 0, %s131
    %s151 = sphi 0, %s151
    %s153 = sphi 0, %s151
    %s154 = sphi 0, %s153
    %s168 = sphi 0, %s154
    %s172 = sphi 0, %s172
    %s174 = sphi 0, %s172
    %s175 = sphi 0, %s174
    %s189 = sphi 0, %s175
    %s197 = sphi 0, %s199
    %s200 = sphi 0, %s197
    %s201 = sphi 0, %s200
    %s217 = sphi 0, %s201
  $region4: #{transformer_layer.7} parent=0 // loop_header_branch
    %15 = sbr.rel (%p13) target = $region8
  $region5: #{transformer_layer.7} parent=0 // loop_body
    %s17 = ssub.s32 %s12, 1
    %s18 = ssub.s32 %s12, 2
    %s28 = sadd.s32 1, %s21
    %p29 = scmp.ge.s32.totalorder %s28, 1
    %s30 = scalar_select %p29, 0, %s28
    %s31 = sadd.s32 1, %s20
    %s32 = scalar_select %p29, %s31, %s20
    %p33 = scmp.ge.s32.totalorder %s32, 1
    %s34 = scalar_select %p33, 0, %s32
    %s35 = sadd.s32 1, %s19
    %s36 = scalar_select %p33, %s35, %s19
    %p37 = scmp.ge.s32.totalorder %s36, 2
    %s38 = scalar_select %p37, 0, %s36
    %s39 = ssub.s32 %s19, %s38
    %s40 = ssub.s32 %s20, %s34
    %s41 = sor.u32 %s39, %s40
    %p42 = scmp.eq.s32.totalorder %s41, 0
    %s44 = sadd.s32 %s43, 1
    %s45 = scalar_select %p42, %s43, %s44
    %p48 = pneg %p42
    %p49 = scmp.eq.s32.totalorder %s12, 1
    %p50 = por %p48, %p49
    %p51 = scmp.ne.s32.totalorder %s43, %s46
    %p52 = scmp.eq.s32.totalorder %s12, 0
    %p53 = por %p51, %p52
    %p54 = scmp.ne.s32.totalorder %s43, %s46
    %p55 = scmp.eq.s32.totalorder %s17, 1
    %p56 = por %p54, %p55
    %p57 = scmp.ne.s32.totalorder %s46, %s47
    %p58 = scmp.eq.s32.totalorder %s17, 0
    %p59 = por %p57, %p58
    %p60 = scmp.ne.s32.totalorder %s46, %s47
    %p61 = scmp.eq.s32.totalorder %s18, 1
    %p62 = por %p60, %p61
    %p64 = scmp.ne.s32.totalorder %s47, %s63
    %p65 = scmp.eq.s32.totalorder %s18, 0
    %p66 = por %p64, %p65
    %s67 = ssub.s32 %s19, %s38
    %s68 = ssub.s32 %s20, %s34
    %s69 = sor.u32 %s67, %s68
    %p70 = scmp.eq.s32.totalorder %s69, 0
    %s72 = sadd.s32 %s71, 1
    %s73 = scalar_select %p70, %s71, %s72
    %p76 = pneg %p70
    %p77 = scmp.eq.s32.totalorder %s12, 1
    %p78 = por %p76, %p77
    %p79 = scmp.ne.s32.totalorder %s71, %s74
    %p80 = scmp.eq.s32.totalorder %s12, 0
    %p81 = por %p79, %p80
    %p82 = scmp.ne.s32.totalorder %s71, %s74
    %p83 = scmp.eq.s32.totalorder %s17, 1
    %p84 = por %p82, %p83
    %p85 = scmp.ne.s32.totalorder %s74, %s75
    %p86 = scmp.eq.s32.totalorder %s17, 0
    %p87 = por %p85, %p86
    %p88 = scmp.ne.s32.totalorder %s74, %s75
    %p89 = scmp.eq.s32.totalorder %s18, 1
    %p90 = por %p88, %p89
    %p92 = scmp.ne.s32.totalorder %s75, %s91
    %p93 = scmp.eq.s32.totalorder %s18, 0
    %p94 = por %p92, %p93
    %s95 = ssub.s32 %s19, %s38
    %s96 = ssub.s32 %s21, %s30
    %s97 = sor.u32 %s95, %s96
    %p98 = scmp.eq.s32.totalorder %s97, 0
    %s100 = sadd.s32 %s99, 1
    %s101 = scalar_select %p98, %s99, %s100
    %p104 = pneg %p98
    %p105 = scmp.eq.s32.totalorder %s12, 1
    %p106 = por %p104, %p105
    %p107 = scmp.ne.s32.totalorder %s99, %s102
    %p108 = scmp.eq.s32.totalorder %s12, 0
    %p109 = por %p107, %p108
    %p110 = scmp.ne.s32.totalorder %s99, %s102
    %p111 = scmp.eq.s32.totalorder %s17, 1
    %p112 = por %p110, %p111
    %p113 = scmp.ne.s32.totalorder %s102, %s103
    %p114 = scmp.eq.s32.totalorder %s17, 0
    %p115 = por %p113, %p114
    %p116 = scmp.ne.s32.totalorder %s102, %s103
    %p117 = scmp.eq.s32.totalorder %s18, 1
    %p118 = por %p116, %p117
    %p120 = scmp.ne.s32.totalorder %s103, %s119
    %p121 = scmp.eq.s32.totalorder %s18, 0
    %p122 = por %p120, %p121
    %s123 = ssub.s32 %s19, %s38
    %s124 = ssub.s32 %s21, %s30
    %s125 = sor.u32 %s123, %s124
    %p126 = scmp.eq.s32.totalorder %s125, 0
    %s128 = sadd.s32 %s127, 1
    %s129 = scalar_select %p126, %s127, %s128
    %p132 = pneg %p126
    %p133 = scmp.eq.s32.totalorder %s12, 1
    %p134 = por %p132, %p133
    %p135 = scmp.ne.s32.totalorder %s127, %s130
    %p136 = scmp.eq.s32.totalorder %s12, 0
    %p137 = por %p135, %p136
    %p138 = scmp.ne.s32.totalorder %s127, %s130
    %p139 = scmp.eq.s32.totalorder %s17, 1
    %p140 = por %p138, %p139
    %p141 = scmp.ne.s32.totalorder %s130, %s131
    %p142 = scmp.eq.s32.totalorder %s17, 0
    %p143 = por %p141, %p142
    %p144 = scmp.ne.s32.totalorder %s130, %s131
    %p145 = scmp.eq.s32.totalorder %s18, 1
    %p146 = por %p144, %p145
    %p148 = scmp.ne.s32.totalorder %s131, %s147
    %p149 = scmp.eq.s32.totalorder %s18, 0
    %p150 = por %p148, %p149
    %s152 = sadd.s32 %s151, 1
    %p155 = scmp.eq.s32.totalorder %s12, 1
    %p156 = scmp.ne.s32.totalorder %s151, %s153
    %p157 = scmp.eq.s32.totalorder %s12, 0
    %p158 = por %p156, %p157
    %p159 = scmp.ne.s32.totalorder %s151, %s153
    %p160 = scmp.eq.s32.totalorder %s17, 1
    %p161 = por %p159, %p160
    %p162 = scmp.ne.s32.totalorder %s153, %s154
    %p163 = scmp.eq.s32.totalorder %s17, 0
    %p164 = por %p162, %p163
    %p165 = scmp.ne.s32.totalorder %s153, %s154
    %p166 = scmp.eq.s32.totalorder %s18, 1
    %p167 = por %p165, %p166
    %p169 = scmp.ne.s32.totalorder %s154, %s168
    %p170 = scmp.eq.s32.totalorder %s18, 0
    %p171 = por %p169, %p170
    %s173 = sadd.s32 %s172, 1
    %p176 = scmp.eq.s32.totalorder %s12, 1
    %p177 = scmp.ne.s32.totalorder %s172, %s174
    %p178 = scmp.eq.s32.totalorder %s12, 0
    %p179 = por %p177, %p178
    %p180 = scmp.ne.s32.totalorder %s172, %s174
    %p181 = scmp.eq.s32.totalorder %s17, 1
    %p182 = por %p180, %p181
    %p183 = scmp.ne.s32.totalorder %s174, %s175
    %p184 = scmp.eq.s32.totalorder %s17, 0
    %p185 = por %p183, %p184
    %p186 = scmp.ne.s32.totalorder %s174, %s175
    %p187 = scmp.eq.s32.totalorder %s18, 1
    %p188 = por %p186, %p187
    %p190 = scmp.ne.s32.totalorder %s175, %s189
    %p191 = scmp.eq.s32.totalorder %s18, 0
    %p192 = por %p190, %p191
    %s193 = ssub.s32 %s19, %s38
    %s194 = ssub.s32 %s20, %s34
    %s195 = sor.u32 %s193, %s194
    %p196 = scmp.eq.s32.totalorder %s195, 0
    %s198 = sadd.s32 %s197, 1
    %s199 = scalar_select %p196, %s197, %s198
    %p202 = pneg %p196
    %p203 = scmp.eq.s32.totalorder %s12, 1
    %p204 = por %p202, %p203
    %p205 = scmp.ne.s32.totalorder %s197, %s200
    %p206 = scmp.eq.s32.totalorder %s12, 0
    %p207 = por %p205, %p206
    %p208 = scmp.ne.s32.totalorder %s197, %s200
    %p209 = scmp.eq.s32.totalorder %s17, 1
    %p210 = por %p208, %p209
    %p211 = scmp.ne.s32.totalorder %s200, %s201
    %p212 = scmp.eq.s32.totalorder %s17, 0
    %p213 = por %p211, %p212
    %p214 = scmp.ne.s32.totalorder %s200, %s201
    %p215 = scmp.eq.s32.totalorder %s18, 1
    %p216 = por %p214, %p215
    %p218 = scmp.ne.s32.totalorder %s201, %s217
    %p219 = scmp.eq.s32.totalorder %s18, 0
    %p220 = por %p218, %p219
    %p221 = scmp.le.s32.totalorder 1, %s12
    %p222 = scmp.lt.s32.totalorder %s12, 3
    %p223 = pnand %p221, %p222
    %p224 = pneg %p223
    // Predicated region
    $region9: #{transformer_layer.7} parent=5 // pred_check
      _
    $region10: #{transformer_layer.7} parent=5 // pred_check_branch
      %226 = sbr.rel (%p223) target = $region12
    $region11: #{transformer_layer.7} parent=5 // pred_region
      %s227 = ssub.s32 %s12, 1
      // Predicated region
      $region13: #{transformer_layer.7} parent=11 // pred_check
        %p228 = pneg %p164
      $region14: #{transformer_layer.7} parent=11 // pred_check_branch
        %230 = sbr.rel (%p228) target = $region16
      $region15: #{transformer_layer.7} parent=11 // pred_region
        _
      $region16: #{transformer_layer.7} parent=11 // pred_fallthru
        _
      // Predicated region
      $region17: #{transformer_layer.7} parent=11 // pred_check
        %p231 = pneg %p185
      $region18: #{transformer_layer.7} parent=11 // pred_check_branch
        %233 = sbr.rel (%p231) target = $region20
      $region19: #{transformer_layer.7} parent=11 // pred_region
        _
      $region20: #{transformer_layer.7} parent=11 // pred_fallthru
        _
    $region12: #{transformer_layer.7} parent=5 // pred_fallthru
      _
    %p234 = scmp.lt.s32.totalorder %s12, 2
    // Predicated region
    $region21: #{transformer_layer.7} parent=5 // pred_check
      %p235 = pneg %p234
    $region22: #{transformer_layer.7} parent=5 // pred_check_branch
      %237 = sbr.rel (%p235) target = $region24
    $region23: #{transformer_layer.7} parent=5 // pred_region
      // Predicated region
      $region25: #{transformer_layer.7} parent=23 // pred_check
        %p238 = pneg %p53
      $region26: #{transformer_layer.7} parent=23 // pred_check_branch
        %240 = sbr.rel (%p238) target = $region28
      $region27: #{transformer_layer.7} parent=23 // pred_region
        %p241 = scmp.lt.s32.totalorder %s19, 1
        %s242 = scalar_select %p241, %s19, 1
        %p243 = scmp.lt.s32.totalorder %s20, 0
        %s244 = scalar_select %p243, %s20, 0
        %s245 = sadd.s32 %s244, %s242
        %s246 = smul.addr %s245, 4
        %s247 = scalar_lea.vmem %s0, %s246
      $region28: #{transformer_layer.7} parent=23 // pred_fallthru
        _
      // Predicated region
      $region29: #{transformer_layer.7} parent=23 // pred_check
        %p248 = pneg %p81
      $region30: #{transformer_layer.7} parent=23 // pred_check_branch
        %250 = sbr.rel (%p248) target = $region32
      $region31: #{transformer_layer.7} parent=23 // pred_region
        %p251 = scmp.lt.s32.totalorder %s19, 1
        %s252 = scalar_select %p251, %s19, 1
        %p253 = scmp.lt.s32.totalorder %s20, 0
        %s254 = scalar_select %p253, %s20, 0
        %s255 = sadd.s32 %s254, %s252
        %s256 = smul.addr %s255, 4
        %s257 = scalar_lea.vmem %s1, %s256
      $region32: #{transformer_layer.7} parent=23 // pred_fallthru
        _
      // Predicated region
      $region33: #{transformer_layer.7} parent=23 // pred_check
        %p258 = pneg %p109
      $region34: #{transformer_layer.7} parent=23 // pred_check_branch
        %260 = sbr.rel (%p258) target = $region36
      $region35: #{transformer_layer.7} parent=23 // pred_region
        %p261 = scmp.lt.s32.totalorder %s19, 1
        %s262 = scalar_select %p261, %s19, 1
        %p263 = scmp.lt.s32.totalorder %s21, 0
        %s264 = scalar_select %p263, %s21, 0
        %s265 = sadd.s32 %s264, %s262
        %s266 = smul.addr %s265, 4
        %s267 = scalar_lea.vmem %s2, %s266
      $region36: #{transformer_layer.7} parent=23 // pred_fallthru
        _
      // Predicated region
      $region37: #{transformer_layer.7} parent=23 // pred_check
        %p268 = pneg %p137
      $region38: #{transformer_layer.7} parent=23 // pred_check_branch
        %270 = sbr.rel (%p268) target = $region40
      $region39: #{transformer_layer.7} parent=23 // pred_region
        %p271 = scmp.lt.s32.totalorder %s19, 1
        %s272 = scalar_select %p271, %s19, 1
        %p273 = scmp.lt.s32.totalorder %s21, 0
        %s274 = scalar_select %p273, %s21, 0
        %s275 = sadd.s32 %s274, %s272
        %s276 = smul.addr %s275, 4
        %s277 = scalar_lea.vmem %s3, %s276
      $region40: #{transformer_layer.7} parent=23 // pred_fallthru
        _
    $region24: #{transformer_layer.7} parent=5 // pred_fallthru
      _
    %p278 = scmp.le.s32.totalorder 1, %s12
    %p279 = scmp.lt.s32.totalorder %s12, 3
    %p280 = pnand %p278, %p279
    %p281 = pneg %p280
    // Predicated region
    $region41: #{transformer_layer.7} parent=5 // pred_check
      _
    $region42: #{transformer_layer.7} parent=5 // pred_check_branch
      %283 = sbr.rel (%p280) target = $region44
    $region43: #{transformer_layer.7} parent=5 // pred_region
      %s284 = ssub.s32 %s12, 1
      %p285 = scmp.lt.s32.totalorder %s22, 1
      %s286 = scalar_select %p285, %s22, 1
      %p287 = scmp.lt.s32.totalorder %s23, 0
      %s288 = scalar_select %p287, %s23, 0
      %s289 = sadd.s32 %s288, %s286
      %s290 = smul.addr %s289, 4
      %s291 = scalar_lea.vmem %s0, %s290
      %p292 = pneg %p59
      %p293 = pneg %p56
      %p294 = scmp.lt.s32.totalorder %s22, 1
      %s295 = scalar_select %p294, %s22, 1
      %p296 = scmp.lt.s32.totalorder %s23, 0
      %s297 = scalar_select %p296, %s23, 0
      %s298 = sadd.s32 %s297, %s295
      %s299 = smul.addr %s298, 4
      %s300 = scalar_lea.vmem %s1, %s299
      %p301 = pneg %p87
      %p302 = pneg %p84
      %p303 = scmp.lt.s32.totalorder %s22, 1
      %s304 = scalar_select %p303, %s22, 1
      %p305 = scmp.lt.s32.totalorder %s24, 0
      %s306 = scalar_select %p305, %s24, 0
      %s307 = sadd.s32 %s306, %s304
      %s308 = smul.addr %s307, 4
      %s309 = scalar_lea.vmem %s2, %s308
      %p310 = pneg %p115
      %p311 = pneg %p112
      %p312 = scmp.lt.s32.totalorder %s22, 1
      %s313 = scalar_select %p312, %s22, 1
      %p314 = scmp.lt.s32.totalorder %s24, 0
      %s315 = scalar_select %p314, %s24, 0
      %s316 = sadd.s32 %s315, %s313
      %s317 = smul.addr %s316, 4
      %s318 = scalar_lea.vmem %s3, %s317
      %p319 = pneg %p143
      %p320 = pneg %p140
      %p321 = pneg %p164
      %p322 = pneg %p161
      %p323 = pneg %p185
      %p324 = pneg %p182
      %p325 = pneg %p213
      %p326 = pneg %p210
      %p327 = scmp.lt.s32.totalorder %s22, 1
      %s328 = scalar_select %p327, %s22, 1
      %p329 = scmp.lt.s32.totalorder %s23, 0
      %s330 = scalar_select %p329, %s23, 0
      %s331 = sadd.s32 %s330, %s328
      %s332 = smul.addr %s331, 4
      %s333 = scalar_lea.vmem %s6, %s332
      %p334 = scmp.lt.s32.totalorder %s22, 1
      %s335 = scalar_select %p334, %s22, 1
      %p336 = scmp.lt.s32.totalorder %s23, 0
      %s337 = scalar_select %p336, %s23, 0
      %s338 = sadd.s32 %s337, %s335
      %s339 = smul.addr %s338, 4
      %s340 = scalar_lea.vmem %s0, %s339
      %p341 = scmp.lt.s32.totalorder %s22, 1
      %s342 = scalar_select %p341, %s22, 1
      %p343 = scmp.lt.s32.totalorder %s23, 0
      %s344 = scalar_select %p343, %s23, 0
      %s345 = sadd.s32 %s344, %s342
      %s346 = smul.addr %s345, 4
      %s347 = scalar_lea.vmem %s1, %s346
      %p348 = scmp.lt.s32.totalorder %s22, 1
      %s349 = scalar_select %p348, %s22, 1
      %p350 = scmp.lt.s32.totalorder %s24, 0
      %s351 = scalar_select %p350, %s24, 0
      %s352 = sadd.s32 %s351, %s349
      %s353 = smul.addr %s352, 4
      %s354 = scalar_lea.vmem %s2, %s353
      %p355 = scmp.lt.s32.totalorder %s22, 1
      %s356 = scalar_select %p355, %s22, 1
      %p357 = scmp.lt.s32.totalorder %s24, 0
      %s358 = scalar_select %p357, %s24, 0
      %s359 = sadd.s32 %s358, %s356
      %s360 = smul.addr %s359, 4
      %s361 = scalar_lea.vmem %s3, %s360
      %p362 = scmp.lt.s32.totalorder %s22, 1
      %s363 = scalar_select %p362, %s22, 1
      %p364 = scmp.lt.s32.totalorder %s23, 0
      %s365 = scalar_select %p364, %s23, 0
      %s366 = sadd.s32 %s365, %s363
      %s367 = smul.addr %s366, 4
      %s368 = scalar_lea.vmem %s6, %s367
      %p370 = scmp.eq.s32.totalorder %s24, 0
      // Predicated region
      $region45: #{transformer_layer.7} parent=43 // pred_check
        %p371 = pneg %p370
      $region46: #{transformer_layer.7} parent=43 // pred_check_branch
        %373 = sbr.rel (%p371) target = $region48
      $region47: #{transformer_layer.7} parent=43 // pred_region
        %vm374 = vcmask 7168
        %375 = vst.msk [vmem:[#allocation2] sm:$0xff] %vm374, -inf
        %376 = vst.msk [vmem:[#allocation2 + $0x8] sm:$0xff] %vm374, -inf
        %377 = vst.msk [vmem:[#allocation2 + $0x10] sm:$0xff] %vm374, -inf
        %378 = vst.msk [vmem:[#allocation2 + $0x18] sm:$0xff] %vm374, -inf
        %379 = vst.msk [vmem:[#allocation3] sm:$0xff] %vm374, 0.0
        %380 = vst.msk [vmem:[#allocation3 + $0x8] sm:$0xff] %vm374, 0.0
        %381 = vst.msk [vmem:[#allocation3 + $0x10] sm:$0xff] %vm374, 0.0
        %382 = vst.msk [vmem:[#allocation3 + $0x18] sm:$0xff] %vm374, 0.0
        %vm383 = vcmask 64512
        %384 = vst.msk [vmem:[#allocation4] sm:$0xff] %vm383, 0.0
        %385 = vst.msk [vmem:[#allocation4 + $0x8] sm:$0xff] %vm383, 0.0
        %386 = vst.msk [vmem:[#allocation4 + $0x10] sm:$0xff] %vm383, 0.0
        %387 = vst.msk [vmem:[#allocation4 + $0x18] sm:$0xff] %vm383, 0.0
      $region48: #{transformer_layer.7} parent=43 // pred_fallthru
        _
      %v388 = vld [vmem:[%s347] sm:$0xf]
      %v389 = vld [vmem:[%s354] sm:$0xf]
      %v390 = vld [vmem:[%s361] sm:$0xf]
      %v391 = vld [vmem:[#allocation2] sm:$0xff]
      %v392 = vld [vmem:[#allocation3] sm:$0xff]
      %v393 = vld [vmem:[#allocation4] sm:$0xff]
      %vm394 = vcmask 64512
      %v396 = vsel %vm394, %v388, 0
      %v399 = vsel %vm394, %v389, 0
      %401 = vmatprep.subr.bf16.mxu0 0
      %402 = vmatpush1.bf16.xpose.msra.mxu0 %v399
      %403 = vmatprep.subr.bf16.mxu0 0
      %404 = vmatpush1.bf16.xpose.msra.mxu0 0
      %405 = vmatprep.subr.bf16.mxu0 0
      %406 = vmatpush1.bf16.xpose.msra.mxu0 0
      %407 = vmatprep.subr.bf16.mxu0 0
      %408 = vmatpush1.bf16.xpose.msra.mxu0 0
      %409 = vmatprep.subr.bf16.mxu0 0
      %410 = vmatpush1.bf16.xpose.msra.mxu0 0
      %411 = vmatprep.subr.bf16.mxu0 0
      %412 = vmatpush1.bf16.xpose.msra.mxu0 0
      %413 = vmatprep.subr.bf16.mxu0 0
      %414 = vmatpush1.bf16.xpose.msra.mxu0 0
      %415 = vmatprep.subr.bf16.mxu0 0
      %416 = vmatpush1.bf16.xpose.msra.mxu0 0
      %417 = vmatprep.subr.bf16.mxu0 0
      %418 = vmatpush1.bf16.xpose.msra.mxu0 0
      %419 = vmatprep.subr.bf16.mxu0 0
      %420 = vmatpush1.bf16.xpose.msra.mxu0 0
      %421 = vmatprep.subr.bf16.mxu0 0
      %422 = vmatpush1.bf16.xpose.msra.mxu0 0
      %423 = vmatprep.subr.bf16.mxu0 0
      %424 = vmatpush1.bf16.xpose.msra.mxu0 0
      %425 = vmatprep.subr.bf16.mxu0 0
      %426 = vmatpush1.bf16.xpose.msra.mxu0 0
      %427 = vmatprep.subr.bf16.mxu0 0
      %428 = vmatpush1.bf16.xpose.msra.mxu0 0
      %429 = vmatprep.subr.bf16.mxu0 0
      %430 = vmatpush1.bf16.xpose.msra.mxu0 0
      %431 = vmatprep.subr.bf16.mxu0 0
      %432 = vmatpush1.bf16.xpose.msra.mxu0 0
      %433 = vmatprep.mubr.bf16.mxu0 0
      %434 = vmatmul.mubr.bf16.gmra.mrb[0].mxu0 %v396
      %v435 = vpop.f32.mrb[0].mxu0
      %v436 = vadd.f32 0.0, %v435
      %v437 = vpop.f32.mrb[0].mxu0
      %v438 = vpop.f32.mrb[0].mxu0
      %v439 = vpop.f32.mrb[0].mxu0
      %440 = vdwg.mxu0
      %v441 = vsel %vm394, %v436, -inf
      %442 = vmax.xlane.f32.xlu0 %v441
      %v443 = vpop.xlane.xlu0 %442
      %v444 = vmax.f32 %v391, %v443
      %v445 = vsub.f32 %v391, %v444
      %v446 = vmul.f32 %v445, 1.442695
      %v447 = vpow.pop %v446
      %449 = vset.pattern.permute.xlu0 0
      %450 = vperm.xlu0 %449, %v444
      %v451 = vpop.permute.xlu0 %450
      %v453 = vsub.f32 %v436, %v451
      %v454 = vmul.f32 %v453, 1.442695
      %v455 = vpow.pop %v454
      %v456 = vmul.f32 %v447, %v392
      %v457 = vsel %vm394, %v455, 0.0
      %458 = vadd.xlane.f32.xlu0 %v457
      %v459 = vpop.xlane.xlu0 %458
      %v460 = vadd.f32 %v456, %v459
      %462 = vset.pattern.permute.xlu0 0
      %463 = vperm.xlu0 %462, %v447
      %v464 = vpop.permute.xlu0 %463
      %v466 = vmul.f32 %v464, %v393
      %v467 = vpack.c.bf16 %v455, %v455
      %v469 = vsel %vm394, %v467, 0
      %vm471 = vcmask 1043456
      %v473 = vsel %vm471, %v390, 0
      %475 = vmatprep.subr.bf16.mxu0 0
      %476 = vmatpush1.bf16.msra.mxu0 %v473
      %477 = vmatprep.subr.bf16.mxu0 0
      %478 = vmatpush1.bf16.msra.mxu0 0
      %479 = vmatprep.subr.bf16.mxu0 0
      %480 = vmatpush1.bf16.msra.mxu0 0
      %481 = vmatprep.subr.bf16.mxu0 0
      %482 = vmatpush1.bf16.msra.mxu0 0
      %483 = vmatprep.subr.bf16.mxu0 0
      %484 = vmatpush1.bf16.msra.mxu0 0
      %485 = vmatprep.subr.bf16.mxu0 0
      %486 = vmatpush1.bf16.msra.mxu0 0
      %487 = vmatprep.subr.bf16.mxu0 0
      %488 = vmatpush1.bf16.msra.mxu0 0
      %489 = vmatprep.subr.bf16.mxu0 0
      %490 = vmatpush1.bf16.msra.mxu0 0
      %491 = vmatprep.subr.bf16.mxu0 0
      %492 = vmatpush1.bf16.msra.mxu0 0
      %493 = vmatprep.subr.bf16.mxu0 0
      %494 = vmatpush1.bf16.msra.mxu0 0
      %495 = vmatprep.subr.bf16.mxu0 0
      %496 = vmatpush1.bf16.msra.mxu0 0
      %497 = vmatprep.subr.bf16.mxu0 0
      %498 = vmatpush1.bf16.msra.mxu0 0
      %499 = vmatprep.subr.bf16.mxu0 0
      %500 = vmatpush1.bf16.msra.mxu0 0
      %501 = vmatprep.subr.bf16.mxu0 0
      %502 = vmatpush1.bf16.msra.mxu0 0
      %503 = vmatprep.subr.bf16.mxu0 0
      %504 = vmatpush1.bf16.msra.mxu0 0
      %505 = vmatprep.subr.bf16.mxu0 0
      %506 = vmatpush1.bf16.msra.mxu0 0
      %507 = vmatprep.mubr.bf16.mxu0 0
      %508 = vmatmul.mubr.bf16.gmra.mrb[0].mxu0 %v469
      %v509 = vpop.f32.mrb[0].mxu0
      %v510 = vadd.f32 0.0, %v509
      %v511 = vpop.f32.mrb[0].mxu0
      %v512 = vpop.f32.mrb[0].mxu0
      %v513 = vpop.f32.mrb[0].mxu0
      %514 = vdwg.mxu0
      %v515 = vadd.f32 %v466, %v510
      %vm516 = vcmask 7168
      %517 = vst.msk [vmem:[#allocation2] sm:$0xff] %vm516, %v444
      %518 = vst.msk [vmem:[#allocation3] sm:$0xff] %vm516, %v460
      %519 = vst.msk [vmem:[#allocation4] sm:$0xff] %vm394, %v515
      %v520 = vld [vmem:[%s347] sm:$0xf]
      %v521 = vld [vmem:[%s354] sm:$0xf]
      %v522 = vld [vmem:[%s361] sm:$0xf]
      %s523 = scalar_lea.vmem [#allocation2], 8
      %v524 = vld [vmem:[%s523] sm:$0xff]
      %s525 = scalar_lea.vmem [#allocation3], 8
      %v526 = vld [vmem:[%s525] sm:$0xff]
      %s527 = scalar_lea.vmem [#allocation4], 8
      %v528 = vld [vmem:[%s527] sm:$0xff]
      %v530 = vunpack.c.l.b16 %v520
      %v531 = vpack.c.b16 %v530, %v530
      %532 = vrot.lane.b32.xlu0 %v531, 120
      %v533 = vpop.permute.xlu0 %532
      %v535 = vunpack.c.l.b16 %v521
      %v536 = vpack.c.b16 %v535, %v535
      %537 = vrot.lane.b32.xlu0 %v536, 120
      %v538 = vpop.permute.xlu0 %537
      %v540 = vsel %vm394, %v533, 0
      %v543 = vsel %vm394, %v538, 0
      %545 = vmatprep.subr.bf16.mxu0 0
      %546 = vmatpush1.bf16.xpose.msra.mxu0 %v543
      %547 = vmatprep.subr.bf16.mxu0 0
      %548 = vmatpush1.bf16.xpose.msra.mxu0 0
      %549 = vmatprep.subr.bf16.mxu0 0
      %550 = vmatpush1.bf16.xpose.msra.mxu0 0
      %551 = vmatprep.subr.bf16.mxu0 0
      %552 = vmatpush1.bf16.xpose.msra.mxu0 0
      %553 = vmatprep.subr.bf16.mxu0 0
      %554 = vmatpush1.bf16.xpose.msra.mxu0 0
      %555 = vmatprep.subr.bf16.mxu0 0
      %556 = vmatpush1.bf16.xpose.msra.mxu0 0
      %557 = vmatprep.subr.bf16.mxu0 0
      %558 = vmatpush1.bf16.xpose.msra.mxu0 0
      %559 = vmatprep.subr.bf16.mxu0 0
      %560 = vmatpush1.bf16.xpose.msra.mxu0 0
      %561 = vmatprep.subr.bf16.mxu0 0
      %562 = vmatpush1.bf16.xpose.msra.mxu0 0
      %563 = vmatprep.subr.bf16.mxu0 0
      %564 = vmatpush1.bf16.xpose.msra.mxu0 0
      %565 = vmatprep.subr.bf16.mxu0 0
      %566 = vmatpush1.bf16.xpose.msra.mxu0 0
      %567 = vmatprep.subr.bf16.mxu0 0
      %568 = vmatpush1.bf16.xpose.msra.mxu0 0
      %569 = vmatprep.subr.bf16.mxu0 0
      %570 = vmatpush1.bf16.xpose.msra.mxu0 0
      %571 = vmatprep.subr.bf16.mxu0 0
      %572 = vmatpush1.bf16.xpose.msra.mxu0 0
      %573 = vmatprep.subr.bf16.mxu0 0
      %574 = vmatpush1.bf16.xpose.msra.mxu0 0
      %575 = vmatprep.subr.bf16.mxu0 0
      %576 = vmatpush1.bf16.xpose.msra.mxu0 0
      %577 = vmatprep.mubr.bf16.mxu0 0
      %578 = vmatmul.mubr.bf16.gmra.mrb[0].mxu0 %v540
      %v579 = vpop.f32.mrb[0].mxu0
      %v580 = vadd.f32 0.0, %v579
      %v581 = vpop.f32.mrb[0].mxu0
      %v582 = vpop.f32.mrb[0].mxu0
      %v583 = vpop.f32.mrb[0].mxu0
      %584 = vdwg.mxu0
      %v585 = vsel %vm394, %v580, -inf
      %586 = vmax.xlane.f32.xlu0 %v585
      %v587 = vpop.xlane.xlu0 %586
      %v588 = vmax.f32 %v524, %v587
      %v589 = vsub.f32 %v524, %v588
      %v590 = vmul.f32 %v589, 1.442695
      %v591 = vpow.pop %v590
      %593 = vset.pattern.permute.xlu0 0
      %594 = vperm.xlu0 %593, %v588
      %v595 = vpop.permute.xlu0 %594
      %v597 = vsub.f32 %v580, %v595
      %v598 = vmul.f32 %v597, 1.442695
      %v599 = vpow.pop %v598
      %v600 = vmul.f32 %v591, %v526
      %v601 = vsel %vm394, %v599, 0.0
      %602 = vadd.xlane.f32.xlu0 %v601
      %v603 = vpop.xlane.xlu0 %602
      %v604 = vadd.f32 %v600, %v603
      %606 = vset.pattern.permute.xlu0 0
      %607 = vperm.xlu0 %606, %v591
      %v608 = vpop.permute.xlu0 %607
      %v610 = vmul.f32 %v608, %v528
      %v611 = vpack.c.bf16 %v599, %v599
      %v613 = vunpack.c.l.b16 %v522
      %v614 = vpack.c.b16 %v613, %v613
      %615 = vrot.lane.b32.xlu0 %v614, 120
      %v616 = vpop.permute.xlu0 %615
      %v618 = vsel %vm394, %v611, 0
      %v621 = vsel %vm471, %v616, 0
      %623 = vmatprep.subr.bf16.mxu0 0
      %624 = vmatpush1.bf16.msra.mxu0 %v621
      %625 = vmatprep.subr.bf16.mxu0 0
      %626 = vmatpush1.bf16.msra.mxu0 0
      %627 = vmatprep.subr.bf16.mxu0 0
      %628 = vmatpush1.bf16.msra.mxu0 0
      %629 = vmatprep.subr.bf16.mxu0 0
      %630 = vmatpush1.bf16.msra.mxu0 0
      %631 = vmatprep.subr.bf16.mxu0 0
      %632 = vmatpush1.bf16.msra.mxu0 0
      %633 = vmatprep.subr.bf16.mxu0 0
      %634 = vmatpush1.bf16.msra.mxu0 0
      %635 = vmatprep.subr.bf16.mxu0 0
      %636 = vmatpush1.bf16.msra.mxu0 0
      %637 = vmatprep.subr.bf16.mxu0 0
      %638 = vmatpush1.bf16.msra.mxu0 0
      %639 = vmatprep.subr.bf16.mxu0 0
      %640 = vmatpush1.bf16.msra.mxu0 0
      %641 = vmatprep.subr.bf16.mxu0 0
      %642 = vmatpush1.bf16.msra.mxu0 0
      %643 = vmatprep.subr.bf16.mxu0 0
      %644 = vmatpush1.bf16.msra.mxu0 0
      %645 = vmatprep.subr.bf16.mxu0 0
      %646 = vmatpush1.bf16.msra.mxu0 0
      %647 = vmatprep.subr.bf16.mxu0 0
      %648 = vmatpush1.bf16.msra.mxu0 0
      %649 = vmatprep.subr.bf16.mxu0 0
      %650 = vmatpush1.bf16.msra.mxu0 0
      %651 = vmatprep.subr.bf16.mxu0 0
      %652 = vmatpush1.bf16.msra.mxu0 0
      %653 = vmatprep.subr.bf16.mxu0 0
      %654 = vmatpush1.bf16.msra.mxu0 0
      %655 = vmatprep.mubr.bf16.mxu0 0
      %656 = vmatmul.mubr.bf16.gmra.mrb[0].mxu0 %v618
      %v657 = vpop.f32.mrb[0].mxu0
      %v658 = vadd.f32 0.0, %v657
      %v659 = vpop.f32.mrb[0].mxu0
      %v660 = vpop.f32.mrb[0].mxu0
      %v661 = vpop.f32.mrb[0].mxu0
      %662 = vdwg.mxu0
      %v663 = vadd.f32 %v610, %v658
      %664 = vst.msk [vmem:[%s523] sm:$0xff] %vm516, %v588
      %665 = vst.msk [vmem:[%s525] sm:$0xff] %vm516, %v604
      %666 = vst.msk [vmem:[%s527] sm:$0xff] %vm394, %v663
      %v667 = vld [vmem:[%s347] sm:$0xf]
      %v668 = vld [vmem:[%s354] sm:$0xf]
      %v669 = vld [vmem:[%s361] sm:$0xf]
      %s670 = scalar_lea.vmem [#allocation2], 16
      %v671 = vld [vmem:[%s670] sm:$0xff]
      %s672 = scalar_lea.vmem [#allocation3], 16
      %v673 = vld [vmem:[%s672] sm:$0xff]
      %s674 = scalar_lea.vmem [#allocation4], 16
      %v675 = vld [vmem:[%s674] sm:$0xff]
      %v677 = vunpack.c.l.b16 %v667
      %v678 = vpack.c.b16 %v677, %v677
      %679 = vrot.lane.b32.xlu0 %v678, 112
      %v680 = vpop.permute.xlu0 %679
      %v682 = vunpack.c.l.b16 %v668
      %v683 = vpack.c.b16 %v682, %v682
      %684 = vrot.lane.b32.xlu0 %v683, 112
      %v685 = vpop.permute.xlu0 %684
      %v687 = vsel %vm394, %v680, 0
      %v690 = vsel %vm394, %v685, 0
      %692 = vmatprep.subr.bf16.mxu0 0
      %693 = vmatpush1.bf16.xpose.msra.mxu0 %v690
      %694 = vmatprep.subr.bf16.mxu0 0
      %695 = vmatpush1.bf16.xpose.msra.mxu0 0
      %696 = vmatprep.subr.bf16.mxu0 0
      %697 = vmatpush1.bf16.xpose.msra.mxu0 0
      %698 = vmatprep.subr.bf16.mxu0 0
      %699 = vmatpush1.bf16.xpose.msra.mxu0 0
      %700 = vmatprep.subr.bf16.mxu0 0
      %701 = vmatpush1.bf16.xpose.msra.mxu0 0
      %702 = vmatprep.subr.bf16.mxu0 0
      %703 = vmatpush1.bf16.xpose.msra.mxu0 0
      %704 = vmatprep.subr.bf16.mxu0 0
      %705 = vmatpush1.bf16.xpose.msra.mxu0 0
      %706 = vmatprep.subr.bf16.mxu0 0
      %707 = vmatpush1.bf16.xpose.msra.mxu0 0
      %708 = vmatprep.subr.bf16.mxu0 0
      %709 = vmatpush1.bf16.xpose.msra.mxu0 0
      %710 = vmatprep.subr.bf16.mxu0 0
      %711 = vmatpush1.bf16.xpose.msra.mxu0 0
      %712 = vmatprep.subr.bf16.mxu0 0
      %713 = vmatpush1.bf16.xpose.msra.mxu0 0
      %714 = vmatprep.subr.bf16.mxu0 0
      %715 = vmatpush1.bf16.xpose.msra.mxu0 0
      %716 = vmatprep.subr.bf16.mxu0 0
      %717 = vmatpush1.bf16.xpose.msra.mxu0 0
      %718 = vmatprep.subr.bf16.mxu0 0
      %719 = vmatpush1.bf16.xpose.msra.mxu0 0
      %720 = vmatprep.subr.bf16.mxu0 0
      %721 = vmatpush1.bf16.xpose.msra.mxu0 0
      %722 = vmatprep.subr.bf16.mxu0 0
      %723 = vmatpush1.bf16.xpose.msra.mxu0 0
      %724 = vmatprep.mubr.bf16.mxu0 0
      %725 = vmatmul.mubr.bf16.gmra.mrb[0].mxu0 %v687
      %v726 = vpop.f32.mrb[0].mxu0
      %v727 = vadd.f32 0.0, %v726
      %v728 = vpop.f32.mrb[0].mxu0
      %v729 = vpop.f32.mrb[0].mxu0
      %v730 = vpop.f32.mrb[0].mxu0
      %731 = vdwg.mxu0
      %v732 = vsel %vm394, %v727, -inf
      %733 = vmax.xlane.f32.xlu0 %v732
      %v734 = vpop.xlane.xlu0 %733
      %v735 = vmax.f32 %v671, %v734
      %v736 = vsub.f32 %v671, %v735
      %v737 = vmul.f32 %v736, 1.442695
      %v738 = vpow.pop %v737
      %740 = vset.pattern.permute.xlu0 0
      %741 = vperm.xlu0 %740, %v735
      %v742 = vpop.permute.xlu0 %741
      %v744 = vsub.f32 %v727, %v742
      %v745 = vmul.f32 %v744, 1.442695
      %v746 = vpow.pop %v745
      %v747 = vmul.f32 %v738, %v673
      %v748 = vsel %vm394, %v746, 0.0
      %749 = vadd.xlane.f32.xlu0 %v748
      %v750 = vpop.xlane.xlu0 %749
      %v751 = vadd.f32 %v747, %v750
      %753 = vset.pattern.permute.xlu0 0
      %754 = vperm.xlu0 %753, %v738
      %v755 = vpop.permute.xlu0 %754
      %v757 = vmul.f32 %v755, %v675
      %v758 = vpack.c.bf16 %v746, %v746
      %v760 = vunpack.c.l.b16 %v669
      %v761 = vpack.c.b16 %v760, %v760
      %762 = vrot.lane.b32.xlu0 %v761, 112
      %v763 = vpop.permute.xlu0 %762
      %v765 = vsel %vm394, %v758, 0
      %v768 = vsel %vm471, %v763, 0
      %770 = vmatprep.subr.bf16.mxu0 0
      %771 = vmatpush1.bf16.msra.mxu0 %v768
      %772 = vmatprep.subr.bf16.mxu0 0
      %773 = vmatpush1.bf16.msra.mxu0 0
      %774 = vmatprep.subr.bf16.mxu0 0
      %775 = vmatpush1.bf16.msra.mxu0 0
      %776 = vmatprep.subr.bf16.mxu0 0
      %777 = vmatpush1.bf16.msra.mxu0 0
      %778 = vmatprep.subr.bf16.mxu0 0
      %779 = vmatpush1.bf16.msra.mxu0 0
      %780 = vmatprep.subr.bf16.mxu0 0
      %781 = vmatpush1.bf16.msra.mxu0 0
      %782 = vmatprep.subr.bf16.mxu0 0
      %783 = vmatpush1.bf16.msra.mxu0 0
      %784 = vmatprep.subr.bf16.mxu0 0
      %785 = vmatpush1.bf16.msra.mxu0 0
      %786 = vmatprep.subr.bf16.mxu0 0
      %787 = vmatpush1.bf16.msra.mxu0 0
      %788 = vmatprep.subr.bf16.mxu0 0
      %789 = vmatpush1.bf16.msra.mxu0 0
      %790 = vmatprep.subr.bf16.mxu0 0
      %791 = vmatpush1.bf16.msra.mxu0 0
      %792 = vmatprep.subr.bf16.mxu0 0
      %793 = vmatpush1.bf16.msra.mxu0 0
      %794 = vmatprep.subr.bf16.mxu0 0
      %795 = vmatpush1.bf16.msra.mxu0 0
      %796 = vmatprep.subr.bf16.mxu0 0
      %797 = vmatpush1.bf16.msra.mxu0 0
      %798 = vmatprep.subr.bf16.mxu0 0
      %799 = vmatpush1.bf16.msra.mxu0 0
      %800 = vmatprep.subr.bf16.mxu0 0
      %801 = vmatpush1.bf16.msra.mxu0 0
      %802 = vmatprep.mubr.bf16.mxu0 0
      %803 = vmatmul.mubr.bf16.gmra.mrb[0].mxu0 %v765
      %v804 = vpop.f32.mrb[0].mxu0
      %v805 = vadd.f32 0.0, %v804
      %v806 = vpop.f32.mrb[0].mxu0
      %v807 = vpop.f32.mrb[0].mxu0
      %v808 = vpop.f32.mrb[0].mxu0
      %809 = vdwg.mxu0
      %v810 = vadd.f32 %v757, %v805
      %811 = vst.msk [vmem:[%s670] sm:$0xff] %vm516, %v735
      %812 = vst.msk [vmem:[%s672] sm:$0xff] %vm516, %v751
      %813 = vst.msk [vmem:[%s674] sm:$0xff] %vm394, %v810
      %v814 = vld [vmem:[%s347] sm:$0xf]
      %v815 = vld [vmem:[%s354] sm:$0xf]
      %v816 = vld [vmem:[%s361] sm:$0xf]
      %s817 = scalar_lea.vmem [#allocation2], 24
      %v818 = vld [vmem:[%s817] sm:$0xff]
      %s819 = scalar_lea.vmem [#allocation3], 24
      %v820 = vld [vmem:[%s819] sm:$0xff]
      %s821 = scalar_lea.vmem [#allocation4], 24
      %v822 = vld [vmem:[%s821] sm:$0xff]
      %v824 = vunpack.c.l.b16 %v814
      %v825 = vpack.c.b16 %v824, %v824
      %826 = vrot.lane.b32.xlu0 %v825, 104
      %v827 = vpop.permute.xlu0 %826
      %v829 = vunpack.c.l.b16 %v815
      %v830 = vpack.c.b16 %v829, %v829
      %831 = vrot.lane.b32.xlu0 %v830, 104
      %v832 = vpop.permute.xlu0 %831
      %v834 = vsel %vm394, %v827, 0
      %v837 = vsel %vm394, %v832, 0
      %839 = vmatprep.subr.bf16.mxu0 0
      %840 = vmatpush1.bf16.xpose.msra.mxu0 %v837
      %841 = vmatprep.subr.bf16.mxu0 0
      %842 = vmatpush1.bf16.xpose.msra.mxu0 0
      %843 = vmatprep.subr.bf16.mxu0 0
      %844 = vmatpush1.bf16.xpose.msra.mxu0 0
      %845 = vmatprep.subr.bf16.mxu0 0
      %846 = vmatpush1.bf16.xpose.msra.mxu0 0
      %847 = vmatprep.subr.bf16.mxu0 0
      %848 = vmatpush1.bf16.xpose.msra.mxu0 0
      %849 = vmatprep.subr.bf16.mxu0 0
      %850 = vmatpush1.bf16.xpose.msra.mxu0 0
      %851 = vmatprep.subr.bf16.mxu0 0
      %852 = vmatpush1.bf16.xpose.msra.mxu0 0
      %853 = vmatprep.subr.bf16.mxu0 0
      %854 = vmatpush1.bf16.xpose.msra.mxu0 0
      %855 = vmatprep.subr.bf16.mxu0 0
      %856 = vmatpush1.bf16.xpose.msra.mxu0 0
      %857 = vmatprep.subr.bf16.mxu0 0
      %858 = vmatpush1.bf16.xpose.msra.mxu0 0
      %859 = vmatprep.subr.bf16.mxu0 0
      %860 = vmatpush1.bf16.xpose.msra.mxu0 0
      %861 = vmatprep.subr.bf16.mxu0 0
      %862 = vmatpush1.bf16.xpose.msra.mxu0 0
      %863 = vmatprep.subr.bf16.mxu0 0
      %864 = vmatpush1.bf16.xpose.msra.mxu0 0
      %865 = vmatprep.subr.bf16.mxu0 0
      %866 = vmatpush1.bf16.xpose.msra.mxu0 0
      %867 = vmatprep.subr.bf16.mxu0 0
      %868 = vmatpush1.bf16.xpose.msra.mxu0 0
      %869 = vmatprep.subr.bf16.mxu0 0
      %870 = vmatpush1.bf16.xpose.msra.mxu0 0
      %871 = vmatprep.mubr.bf16.mxu0 0
      %872 = vmatmul.mubr.bf16.gmra.mrb[0].mxu0 %v834
      %v873 = vpop.f32.mrb[0].mxu0
      %v874 = vadd.f32 0.0, %v873
      %v875 = vpop.f32.mrb[0].mxu0
      %v876 = vpop.f32.mrb[0].mxu0
      %v877 = vpop.f32.mrb[0].mxu0
      %878 = vdwg.mxu0
      %v879 = vsel %vm394, %v874, -inf
      %880 = vmax.xlane.f32.xlu0 %v879
      %v881 = vpop.xlane.xlu0 %880
      %v882 = vmax.f32 %v818, %v881
      %v883 = vsub.f32 %v818, %v882
      %v884 = vmul.f32 %v883, 1.442695
      %v885 = vpow.pop %v884
      %887 = vset.pattern.permute.xlu0 0
      %888 = vperm.xlu0 %887, %v882
      %v889 = vpop.permute.xlu0 %888
      %v891 = vsub.f32 %v874, %v889
      %v892 = vmul.f32 %v891, 1.442695
      %v893 = vpow.pop %v892
      %v894 = vmul.f32 %v885, %v820
      %v895 = vsel %vm394, %v893, 0.0
      %896 = vadd.xlane.f32.xlu0 %v895
      %v897 = vpop.xlane.xlu0 %896
      %v898 = vadd.f32 %v894, %v897
      %900 = vset.pattern.permute.xlu0 0
      %901 = vperm.xlu0 %900, %v885
      %v902 = vpop.permute.xlu0 %901
      %v904 = vmul.f32 %v902, %v822
      %v905 = vpack.c.bf16 %v893, %v893
      %v907 = vunpack.c.l.b16 %v816
      %v908 = vpack.c.b16 %v907, %v907
      %909 = vrot.lane.b32.xlu0 %v908, 104
      %v910 = vpop.permute.xlu0 %909
      %v912 = vsel %vm394, %v905, 0
      %v915 = vsel %vm471, %v910, 0
      %917 = vmatprep.subr.bf16.mxu0 0
      %918 = vmatpush1.bf16.msra.mxu0 %v915
      %919 = vmatprep.subr.bf16.mxu0 0
      %920 = vmatpush1.bf16.msra.mxu0 0
      %921 = vmatprep.subr.bf16.mxu0 0
      %922 = vmatpush1.bf16.msra.mxu0 0
      %923 = vmatprep.subr.bf16.mxu0 0
      %924 = vmatpush1.bf16.msra.mxu0 0
      %925 = vmatprep.subr.bf16.mxu0 0
      %926 = vmatpush1.bf16.msra.mxu0 0
      %927 = vmatprep.subr.bf16.mxu0 0
      %928 = vmatpush1.bf16.msra.mxu0 0
      %929 = vmatprep.subr.bf16.mxu0 0
      %930 = vmatpush1.bf16.msra.mxu0 0
      %931 = vmatprep.subr.bf16.mxu0 0
      %932 = vmatpush1.bf16.msra.mxu0 0
      %933 = vmatprep.subr.bf16.mxu0 0
      %934 = vmatpush1.bf16.msra.mxu0 0
      %935 = vmatprep.subr.bf16.mxu0 0
      %936 = vmatpush1.bf16.msra.mxu0 0
      %937 = vmatprep.subr.bf16.mxu0 0
      %938 = vmatpush1.bf16.msra.mxu0 0
      %939 = vmatprep.subr.bf16.mxu0 0
      %940 = vmatpush1.bf16.msra.mxu0 0
      %941 = vmatprep.subr.bf16.mxu0 0
      %942 = vmatpush1.bf16.msra.mxu0 0
      %943 = vmatprep.subr.bf16.mxu0 0
      %944 = vmatpush1.bf16.msra.mxu0 0
      %945 = vmatprep.subr.bf16.mxu0 0
      %946 = vmatpush1.bf16.msra.mxu0 0
      %947 = vmatprep.subr.bf16.mxu0 0
      %948 = vmatpush1.bf16.msra.mxu0 0
      %949 = vmatprep.mubr.bf16.mxu0 0
      %950 = vmatmul.mubr.bf16.gmra.mrb[0].mxu0 %v912
      %v951 = vpop.f32.mrb[0].mxu0
      %v952 = vadd.f32 0.0, %v951
      %v953 = vpop.f32.mrb[0].mxu0
      %v954 = vpop.f32.mrb[0].mxu0
      %v955 = vpop.f32.mrb[0].mxu0
      %956 = vdwg.mxu0
      %v957 = vadd.f32 %v904, %v952
      %958 = vst.msk [vmem:[%s817] sm:$0xff] %vm516, %v882
      %959 = vst.msk [vmem:[%s819] sm:$0xff] %vm516, %v898
      %960 = vst.msk [vmem:[%s821] sm:$0xff] %vm394, %v957
      // Predicated region
      $region49: #{transformer_layer.7} parent=43 // pred_check
        %p961 = pneg %p370
      $region50: #{transformer_layer.7} parent=43 // pred_check_branch
        %963 = sbr.rel (%p961) target = $region52
      $region51: #{transformer_layer.7} parent=43 // pred_region
        %v964 = vld [vmem:[#allocation4] sm:$0xff]
        %v965 = vld [vmem:[#allocation3] sm:$0xff]
        %v966 = vrcp.pop %v965
        %968 = vset.pattern.permute.xlu0 0
        %969 = vperm.xlu0 %968, %v966
        %v970 = vpop.permute.xlu0 %969
        %v972 = vmul.f32 %v964, %v970
        %v973 = vpack.c.bf16 %v972, %v972
        %v974 = vld [vmem:[%s4] sm:$0xf]
        %v975 = vld [vmem:[%s527] sm:$0xff]
        %v976 = vld [vmem:[%s525] sm:$0xff]
        %v977 = vrcp.pop %v976
        %979 = vset.pattern.permute.xlu0 0
        %980 = vperm.xlu0 %979, %v977
        %v981 = vpop.permute.xlu0 %980
        %v983 = vmul.f32 %v975, %v981
        %v984 = vpack.c.bf16 %v983, %v983
        %s985 = scalar_lea.vmem %s4, 4
        %v986 = vld [vmem:[%s985] sm:$0xf]
        %v988 = vsel %vm394, %v984, 0
        %v991 = vsel %vm471, %v986, 0
        %993 = vmatprep.subr.bf16.mxu0 0
        %994 = vmatpush1.bf16.msra.mxu0 %v991
        %995 = vmatprep.subr.bf16.mxu0 0
        %996 = vmatpush1.bf16.msra.mxu0 0
        %997 = vmatprep.subr.bf16.mxu0 0
        %998 = vmatpush1.bf16.msra.mxu0 0
        %999 = vmatprep.subr.bf16.mxu0 0
        %1000 = vmatpush1.bf16.msra.mxu0 0
        %1001 = vmatprep.subr.bf16.mxu0 0
        %1002 = vmatpush1.bf16.msra.mxu0 0
        %1003 = vmatprep.subr.bf16.mxu0 0
        %1004 = vmatpush1.bf16.msra.mxu0 0
        %1005 = vmatprep.subr.bf16.mxu0 0
        %1006 = vmatpush1.bf16.msra.mxu0 0
        %1007 = vmatprep.subr.bf16.mxu0 0
        %1008 = vmatpush1.bf16.msra.mxu0 0
        %1009 = vmatprep.subr.bf16.mxu0 0
        %1010 = vmatpush1.bf16.msra.mxu0 0
        %1011 = vmatprep.subr.bf16.mxu0 0
        %1012 = vmatpush1.bf16.msra.mxu0 0
        %1013 = vmatprep.subr.bf16.mxu0 0
        %1014 = vmatpush1.bf16.msra.mxu0 0
        %1015 = vmatprep.subr.bf16.mxu0 0
        %1016 = vmatpush1.bf16.msra.mxu0 0
        %1017 = vmatprep.subr.bf16.mxu0 0
        %1018 = vmatpush1.bf16.msra.mxu0 0
        %1019 = vmatprep.subr.bf16.mxu0 0
        %1020 = vmatpush1.bf16.msra.mxu0 0
        %1021 = vmatprep.subr.bf16.mxu0 0
        %1022 = vmatpush1.bf16.msra.mxu0 0
        %1023 = vmatprep.subr.bf16.mxu0 0
        %1024 = vmatpush1.bf16.msra.mxu0 0
        %1025 = vmatprep.mubr.bf16.mxu0 0
        %1026 = vmatmul.mubr.bf16.gmra.mrb[0].mxu0 %v988
        %v1027 = vpop.f32.mrb[0].mxu0
        %v1028 = vadd.f32 0.0, %v1027
        %v1029 = vpop.f32.mrb[0].mxu0
        %v1030 = vpop.f32.mrb[0].mxu0
        %v1031 = vpop.f32.mrb[0].mxu0
        %1032 = vdwg.mxu0
        %v1034 = vsel %vm394, %v973, 0
        %v1037 = vsel %vm471, %v974, 0
        %1039 = vmatprep.subr.bf16.mxu0 0
        %1040 = vmatpush1.bf16.msra.mxu0 %v1037
        %1041 = vmatprep.subr.bf16.mxu0 0
        %1042 = vmatpush1.bf16.msra.mxu0 0
        %1043 = vmatprep.subr.bf16.mxu0 0
        %1044 = vmatpush1.bf16.msra.mxu0 0
        %1045 = vmatprep.subr.bf16.mxu0 0
        %1046 = vmatpush1.bf16.msra.mxu0 0
        %1047 = vmatprep.subr.bf16.mxu0 0
        %1048 = vmatpush1.bf16.msra.mxu0 0
        %1049 = vmatprep.subr.bf16.mxu0 0
        %1050 = vmatpush1.bf16.msra.mxu0 0
        %1051 = vmatprep.subr.bf16.mxu0 0
        %1052 = vmatpush1.bf16.msra.mxu0 0
        %1053 = vmatprep.subr.bf16.mxu0 0
        %1054 = vmatpush1.bf16.msra.mxu0 0
        %1055 = vmatprep.subr.bf16.mxu0 0
        %1056 = vmatpush1.bf16.msra.mxu0 0
        %1057 = vmatprep.subr.bf16.mxu0 0
        %1058 = vmatpush1.bf16.msra.mxu0 0
        %1059 = vmatprep.subr.bf16.mxu0 0
        %1060 = vmatpush1.bf16.msra.mxu0 0
        %1061 = vmatprep.subr.bf16.mxu0 0
        %1062 = vmatpush1.bf16.msra.mxu0 0
        %1063 = vmatprep.subr.bf16.mxu0 0
        %1064 = vmatpush1.bf16.msra.mxu0 0
        %1065 = vmatprep.subr.bf16.mxu0 0
        %1066 = vmatpush1.bf16.msra.mxu0 0
        %1067 = vmatprep.subr.bf16.mxu0 0
        %1068 = vmatpush1.bf16.msra.mxu0 0
        %1069 = vmatprep.subr.bf16.mxu0 0
        %1070 = vmatpush1.bf16.msra.mxu0 0
        %1071 = vmatprep.mubr.bf16.mxu0 0
        %1072 = vmatmul.mubr.bf16.gmra.mrb[0].mxu0 %v1034
        %v1073 = vpop.f32.mrb[0].mxu0
        %v1074 = vadd.f32 %v1028, %v1073
        %v1075 = vpop.f32.mrb[0].mxu0
        %v1076 = vpop.f32.mrb[0].mxu0
        %v1077 = vpop.f32.mrb[0].mxu0
        %1078 = vdwg.mxu0
        %v1079 = vld [vmem:[%s674] sm:$0xff]
        %v1080 = vld [vmem:[%s672] sm:$0xff]
        %v1081 = vrcp.pop %v1080
        %1083 = vset.pattern.permute.xlu0 0
        %1084 = vperm.xlu0 %1083, %v1081
        %v1085 = vpop.permute.xlu0 %1084
        %v1087 = vmul.f32 %v1079, %v1085
        %v1088 = vpack.c.bf16 %v1087, %v1087
        %s1089 = scalar_lea.vmem %s4, 8
        %v1090 = vld [vmem:[%s1089] sm:$0xf]
        %v1092 = vsel %vm394, %v1088, 0
        %v1095 = vsel %vm471, %v1090, 0
        %1097 = vmatprep.subr.bf16.mxu0 0
        %1098 = vmatpush1.bf16.msra.mxu0 %v1095
        %1099 = vmatprep.subr.bf16.mxu0 0
        %1100 = vmatpush1.bf16.msra.mxu0 0
        %1101 = vmatprep.subr.bf16.mxu0 0
        %1102 = vmatpush1.bf16.msra.mxu0 0
        %1103 = vmatprep.subr.bf16.mxu0 0
        %1104 = vmatpush1.bf16.msra.mxu0 0
        %1105 = vmatprep.subr.bf16.mxu0 0
        %1106 = vmatpush1.bf16.msra.mxu0 0
        %1107 = vmatprep.subr.bf16.mxu0 0
        %1108 = vmatpush1.bf16.msra.mxu0 0
        %1109 = vmatprep.subr.bf16.mxu0 0
        %1110 = vmatpush1.bf16.msra.mxu0 0
        %1111 = vmatprep.subr.bf16.mxu0 0
        %1112 = vmatpush1.bf16.msra.mxu0 0
        %1113 = vmatprep.subr.bf16.mxu0 0
        %1114 = vmatpush1.bf16.msra.mxu0 0
        %1115 = vmatprep.subr.bf16.mxu0 0
        %1116 = vmatpush1.bf16.msra.mxu0 0
        %1117 = vmatprep.subr.bf16.mxu0 0
        %1118 = vmatpush1.bf16.msra.mxu0 0
        %1119 = vmatprep.subr.bf16.mxu0 0
        %1120 = vmatpush1.bf16.msra.mxu0 0
        %1121 = vmatprep.subr.bf16.mxu0 0
        %1122 = vmatpush1.bf16.msra.mxu0 0
        %1123 = vmatprep.subr.bf16.mxu0 0
        %1124 = vmatpush1.bf16.msra.mxu0 0
        %1125 = vmatprep.subr.bf16.mxu0 0
        %1126 = vmatpush1.bf16.msra.mxu0 0
        %1127 = vmatprep.subr.bf16.mxu0 0
        %1128 = vmatpush1.bf16.msra.mxu0 0
        %1129 = vmatprep.mubr.bf16.mxu0 0
        %1130 = vmatmul.mubr.bf16.gmra.mrb[0].mxu0 %v1092
        %v1131 = vpop.f32.mrb[0].mxu0
        %v1132 = vadd.f32 0.0, %v1131
        %v1133 = vpop.f32.mrb[0].mxu0
        %v1134 = vpop.f32.mrb[0].mxu0
        %v1135 = vpop.f32.mrb[0].mxu0
        %1136 = vdwg.mxu0
        %v1137 = vadd.f32 %v1074, %v1132
        %v1138 = vld [vmem:[%s821] sm:$0xff]
        %v1139 = vld [vmem:[%s819] sm:$0xff]
        %v1140 = vrcp.pop %v1139
        %1142 = vset.pattern.permute.xlu0 0
        %1143 = vperm.xlu0 %1142, %v1140
        %v1144 = vpop.permute.xlu0 %1143
        %v1146 = vmul.f32 %v1138, %v1144
        %v1147 = vpack.c.bf16 %v1146, %v1146
        %s1148 = scalar_lea.vmem %s4, 12
        %v1149 = vld [vmem:[%s1148] sm:$0xf]
        %v1151 = vsel %vm394, %v1147, 0
        %v1154 = vsel %vm471, %v1149, 0
        %1156 = vmatprep.subr.bf16.mxu0 0
        %1157 = vmatpush1.bf16.msra.mxu0 %v1154
        %1158 = vmatprep.subr.bf16.mxu0 0
        %1159 = vmatpush1.bf16.msra.mxu0 0
        %1160 = vmatprep.subr.bf16.mxu0 0
        %1161 = vmatpush1.bf16.msra.mxu0 0
        %1162 = vmatprep.subr.bf16.mxu0 0
        %1163 = vmatpush1.bf16.msra.mxu0 0
        %1164 = vmatprep.subr.bf16.mxu0 0
        %1165 = vmatpush1.bf16.msra.mxu0 0
        %1166 = vmatprep.subr.bf16.mxu0 0
        %1167 = vmatpush1.bf16.msra.mxu0 0
        %1168 = vmatprep.subr.bf16.mxu0 0
        %1169 = vmatpush1.bf16.msra.mxu0 0
        %1170 = vmatprep.subr.bf16.mxu0 0
        %1171 = vmatpush1.bf16.msra.mxu0 0
        %1172 = vmatprep.subr.bf16.mxu0 0
        %1173 = vmatpush1.bf16.msra.mxu0 0
        %1174 = vmatprep.subr.bf16.mxu0 0
        %1175 = vmatpush1.bf16.msra.mxu0 0
        %1176 = vmatprep.subr.bf16.mxu0 0
        %1177 = vmatpush1.bf16.msra.mxu0 0
        %1178 = vmatprep.subr.bf16.mxu0 0
        %1179 = vmatpush1.bf16.msra.mxu0 0
        %1180 = vmatprep.subr.bf16.mxu0 0
        %1181 = vmatpush1.bf16.msra.mxu0 0
        %1182 = vmatprep.subr.bf16.mxu0 0
        %1183 = vmatpush1.bf16.msra.mxu0 0
        %1184 = vmatprep.subr.bf16.mxu0 0
        %1185 = vmatpush1.bf16.msra.mxu0 0
        %1186 = vmatprep.subr.bf16.mxu0 0
        %1187 = vmatpush1.bf16.msra.mxu0 0
        %1188 = vmatprep.mubr.bf16.mxu0 0
        %1189 = vmatmul.mubr.bf16.gmra.mrb[0].mxu0 %v1151
        %v1190 = vpop.f32.mrb[0].mxu0
        %v1191 = vadd.f32 0.0, %v1190
        %v1192 = vpop.f32.mrb[0].mxu0
        %v1193 = vpop.f32.mrb[0].mxu0
        %v1194 = vpop.f32.mrb[0].mxu0
        %1195 = vdwg.mxu0
        %v1196 = vadd.f32 %v1137, %v1191
        %v1197 = vld [vmem:[%s340] sm:$0xf]
        %v1198 = vunpack.c.l.bf16 %v1197
        %v1199 = vadd.f32 %v1198, %v1196
        %v1200 = vld [vmem:[%s5] sm:$0x1]
        %v1202 = vlaneseq
        %v1203 = vshrl.u32 %v1202, 7
        %v1204 = vsub.s32 0, %v1203
        %v1205 = vrot.slane %v1200, %v1204
        %v1207 = vadd.f32 %v1199, %v1205
        %v1208 = vpack.c.bf16 %v1207, %v1207
        %vm1209 = vcmask 257024
        %1210 = vst.msk [vmem:[%s368] sm:$0xf] %vm1209, %v1208
      $region52: #{transformer_layer.7} parent=43 // pred_fallthru
        _
      %p1211 = scmp.lt.s32.totalorder %s22, 1
      %s1212 = scalar_select %p1211, %s22, 1
      %p1213 = scmp.lt.s32.totalorder %s23, 0
      %s1214 = scalar_select %p1213, %s23, 0
      %s1215 = sadd.s32 %s1214, %s1212
      %s1216 = smul.addr %s1215, 4
      %s1217 = scalar_lea.vmem %s6, %s1216
      // Predicated region
      $region53: #{transformer_layer.7} parent=43 // pred_check
        %p1218 = pneg %p210
      $region54: #{transformer_layer.7} parent=43 // pred_check_branch
        %1220 = sbr.rel (%p1218) target = $region56
      $region55: #{transformer_layer.7} parent=43 // pred_region
        _
      $region56: #{transformer_layer.7} parent=43 // pred_fallthru
        _
    $region44: #{transformer_layer.7} parent=5 // pred_fallthru
      _
    %p1221 = scmp.le.s32.totalorder 2, %s12
    // Predicated region
    $region57: #{transformer_layer.7} parent=5 // pred_check
      %p1222 = pneg %p1221
    $region58: #{transformer_layer.7} parent=5 // pred_check_branch
      %1224 = sbr.rel (%p1222) target = $region60
    $region59: #{transformer_layer.7} parent=5 // pred_region
      %s1225 = ssub.s32 %s12, 2
      // Predicated region
      $region61: #{transformer_layer.7} parent=59 // pred_check
        %p1226 = pneg %p216
      $region62: #{transformer_layer.7} parent=59 // pred_check_branch
        %1228 = sbr.rel (%p1226) target = $region64
      $region63: #{transformer_layer.7} parent=59 // pred_region
        %p1229 = scmp.lt.s32.totalorder %s25, 1
        %s1230 = scalar_select %p1229, %s25, 1
        %p1231 = scmp.lt.s32.totalorder %s26, 0
        %s1232 = scalar_select %p1231, %s26, 0
        %s1233 = sadd.s32 %s1232, %s1230
        %s1234 = smul.addr %s1233, 4
        %s1235 = scalar_lea.vmem %s6, %s1234
      $region64: #{transformer_layer.7} parent=59 // pred_fallthru
        _
    $region60: #{transformer_layer.7} parent=5 // pred_fallthru
      _
  $region6: #{transformer_layer.7} parent=0 // loop_footer
    %s16 = sadd.s32 1, %s12
  $region7: #{transformer_layer.7} parent=0 // loop_footer_branch
    %11 = sbr.rel target = $region3
  $region8: #{transformer_layer.7} parent=0 // loop_exit
    _

// kernel: transformer_layer.8
$region0: #{transformer_layer.8}
  #allocation0 [shape = 'u32[]', space=smem, size = 0x4, offset = 0x4, fixed_abs, tag = 'smem constant byte address 0x4 - core index']
  #allocation1 [shape = 'u32[144,128]{1,0:T(1,128)}', space=vmem, size = 0x12000, scoped, tag = 'internal scratch']
  %s0 = inlined_call_operand.vmem [shape: bf16[2,8,32], index: 0, kind: input, shape index: {}]
  %s1 = inlined_call_operand.vmem [shape: f32[1,32], index: 1, kind: input, shape index: {}]
  %s2 = inlined_call_operand.vmem [shape: bf16[32,64], index: 2, kind: input, shape index: {}]
  %s3 = inlined_call_operand.vmem [shape: f32[1,64], index: 3, kind: input, shape index: {}]
  %s4 = inlined_call_operand.vmem [shape: bf16[32,64], index: 4, kind: input, shape index: {}]
  %s5 = inlined_call_operand.vmem [shape: f32[1,64], index: 5, kind: input, shape index: {}]
  %s6 = inlined_call_operand.vmem [shape: bf16[64,32], index: 6, kind: input, shape index: {}]
  %s7 = inlined_call_operand.vmem [shape: f32[1,32], index: 7, kind: input, shape index: {}]
  %s8 = inlined_call_operand.vmem [shape: bf16[2,8,32], index: 8, kind: output, shape index: {}]
  %s9 = sld [smem:[#allocation0]]
  $region65: #{transformer_layer.8} parent=0
    _
  %s11 = ssub.s32 1, %s9
  %s12 = scalar_select 0, %s11, %s9
  loop: start=0, step=1, limit=4
  $region2: #{transformer_layer.8} parent=0 // loop_pre_header
    _
  $region3: #{transformer_layer.8} parent=0 // loop_header
    %s14 = sphi 0, %s18
    %p15 = scmp.ge.s32.totalorder %s14, 4
    %s21 = sphi 0, %s33
    %s22 = sphi 0, %s29
    %s23 = sphi 0, %s21
    %s24 = sphi 0, %s22
    %s25 = sphi 0, %s23
    %s26 = sphi 0, %s24
    %s38 = sphi 0, %s40
    %s41 = sphi 0, %s38
    %s42 = sphi 0, %s41
    %s58 = sphi 0, %s42
    %s62 = sphi 0, %s62
    %s64 = sphi 0, %s62
    %s65 = sphi 0, %s64
    %s79 = sphi 0, %s65
    %s83 = sphi 0, %s83
    %s85 = sphi 0, %s83
    %s86 = sphi 0, %s85
    %s100 = sphi 0, %s86
    %s104 = sphi 0, %s104
    %s106 = sphi 0, %s104
    %s107 = sphi 0, %s106
    %s121 = sphi 0, %s107
    %s125 = sphi 0, %s125
    %s127 = sphi 0, %s125
    %s128 = sphi 0, %s127
    %s142 = sphi 0, %s128
    %s146 = sphi 0, %s146
    %s148 = sphi 0, %s146
    %s149 = sphi 0, %s148
    %s163 = sphi 0, %s149
    %s167 = sphi 0, %s167
    %s169 = sphi 0, %s167
    %s170 = sphi 0, %s169
    %s184 = sphi 0, %s170
    %s188 = sphi 0, %s188
    %s190 = sphi 0, %s188
    %s191 = sphi 0, %s190
    %s205 = sphi 0, %s191
    %s213 = sphi 0, %s215
    %s216 = sphi 0, %s213
    %s217 = sphi 0, %s216
    %s233 = sphi 0, %s217
  $region4: #{transformer_layer.8} parent=0 // loop_header_branch
    %17 = sbr.rel (%p15) target = $region8
  $region5: #{transformer_layer.8} parent=0 // loop_body
    %s19 = ssub.s32 %s14, 1
    %s20 = ssub.s32 %s14, 2
    %s27 = sadd.s32 1, %s22
    %p28 = scmp.ge.s32.totalorder %s27, 1
    %s29 = scalar_select %p28, 0, %s27
    %s30 = sadd.s32 1, %s21
    %s31 = scalar_select %p28, %s30, %s21
    %p32 = scmp.ge.s32.totalorder %s31, 2
    %s33 = scalar_select %p32, 0, %s31
    %s34 = ssub.s32 %s21, %s33
    %s35 = ssub.s32 %s22, %s29
    %s36 = sor.u32 %s34, %s35
    %p37 = scmp.eq.s32.totalorder %s36, 0
    %s39 = sadd.s32 %s38, 1
    %s40 = scalar_select %p37, %s38, %s39
    %p43 = pneg %p37
    %p44 = scmp.eq.s32.totalorder %s14, 1
    %p45 = por %p43, %p44
    %p46 = scmp.ne.s32.totalorder %s38, %s41
    %p47 = scmp.eq.s32.totalorder %s14, 0
    %p48 = por %p46, %p47
    %p49 = scmp.ne.s32.totalorder %s38, %s41
    %p50 = scmp.eq.s32.totalorder %s19, 1
    %p51 = por %p49, %p50
    %p52 = scmp.ne.s32.totalorder %s41, %s42
    %p53 = scmp.eq.s32.totalorder %s19, 0
    %p54 = por %p52, %p53
    %p55 = scmp.ne.s32.totalorder %s41, %s42
    %p56 = scmp.eq.s32.totalorder %s20, 1
    %p57 = por %p55, %p56
    %p59 = scmp.ne.s32.totalorder %s42, %s58
    %p60 = scmp.eq.s32.totalorder %s20, 0
    %p61 = por %p59, %p60
    %s63 = sadd.s32 %s62, 1
    %p66 = scmp.eq.s32.totalorder %s14, 1
    %p67 = scmp.ne.s32.totalorder %s62, %s64
    %p68 = scmp.eq.s32.totalorder %s14, 0
    %p69 = por %p67, %p68
    %p70 = scmp.ne.s32.totalorder %s62, %s64
    %p71 = scmp.eq.s32.totalorder %s19, 1
    %p72 = por %p70, %p71
    %p73 = scmp.ne.s32.totalorder %s64, %s65
    %p74 = scmp.eq.s32.totalorder %s19, 0
    %p75 = por %p73, %p74
    %p76 = scmp.ne.s32.totalorder %s64, %s65
    %p77 = scmp.eq.s32.totalorder %s20, 1
    %p78 = por %p76, %p77
    %p80 = scmp.ne.s32.totalorder %s65, %s79
    %p81 = scmp.eq.s32.totalorder %s20, 0
    %p82 = por %p80, %p81
    %s84 = sadd.s32 %s83, 1
    %p87 = scmp.eq.s32.totalorder %s14, 1
    %p88 = scmp.ne.s32.totalorder %s83, %s85
    %p89 = scmp.eq.s32.totalorder %s14, 0
    %p90 = por %p88, %p89
    %p91 = scmp.ne.s32.totalorder %s83, %s85
    %p92 = scmp.eq.s32.totalorder %s19, 1
    %p93 = por %p91, %p92
    %p94 = scmp.ne.s32.totalorder %s85, %s86
    %p95 = scmp.eq.s32.totalorder %s19, 0
    %p96 = por %p94, %p95
    %p97 = scmp.ne.s32.totalorder %s85, %s86
    %p98 = scmp.eq.s32.totalorder %s20, 1
    %p99 = por %p97, %p98
    %p101 = scmp.ne.s32.totalorder %s86, %s100
    %p102 = scmp.eq.s32.totalorder %s20, 0
    %p103 = por %p101, %p102
    %s105 = sadd.s32 %s104, 1
    %p108 = scmp.eq.s32.totalorder %s14, 1
    %p109 = scmp.ne.s32.totalorder %s104, %s106
    %p110 = scmp.eq.s32.totalorder %s14, 0
    %p111 = por %p109, %p110
    %p112 = scmp.ne.s32.totalorder %s104, %s106
    %p113 = scmp.eq.s32.totalorder %s19, 1
    %p114 = por %p112, %p113
    %p115 = scmp.ne.s32.totalorder %s106, %s107
    %p116 = scmp.eq.s32.totalorder %s19, 0
    %p117 = por %p115, %p116
    %p118 = scmp.ne.s32.totalorder %s106, %s107
    %p119 = scmp.eq.s32.totalorder %s20, 1
    %p120 = por %p118, %p119
    %p122 = scmp.ne.s32.totalorder %s107, %s121
    %p123 = scmp.eq.s32.totalorder %s20, 0
    %p124 = por %p122, %p123
    %s126 = sadd.s32 %s125, 1
    %p129 = scmp.eq.s32.totalorder %s14, 1
    %p130 = scmp.ne.s32.totalorder %s125, %s127
    %p131 = scmp.eq.s32.totalorder %s14, 0
    %p132 = por %p130, %p131
    %p133 = scmp.ne.s32.totalorder %s125, %s127
    %p134 = scmp.eq.s32.totalorder %s19, 1
    %p135 = por %p133, %p134
    %p136 = scmp.ne.s32.totalorder %s127, %s128
    %p137 = scmp.eq.s32.totalorder %s19, 0
    %p138 = por %p136, %p137
    %p139 = scmp.ne.s32.totalorder %s127, %s128
    %p140 = scmp.eq.s32.totalorder %s20, 1
    %p141 = por %p139, %p140
    %p143 = scmp.ne.s32.totalorder %s128, %s142
    %p144 = scmp.eq.s32.totalorder %s20, 0
    %p145 = por %p143, %p144
    %s147 = sadd.s32 %s146, 1
    %p150 = scmp.eq.s32.totalorder %s14, 1
    %p151 = scmp.ne.s32.totalorder %s146, %s148
    %p152 = scmp.eq.s32.totalorder %s14, 0
    %p153 = por %p151, %p152
    %p154 = scmp.ne.s32.totalorder %s146, %s148
    %p155 = scmp.eq.s32.totalorder %s19, 1
    %p156 = por %p154, %p155
    %p157 = scmp.ne.s32.totalorder %s148, %s149
    %p158 = scmp.eq.s32.totalorder %s19, 0
    %p159 = por %p157, %p158
    %p160 = scmp.ne.s32.totalorder %s148, %s149
    %p161 = scmp.eq.s32.totalorder %s20, 1
    %p162 = por %p160, %p161
    %p164 = scmp.ne.s32.totalorder %s149, %s163
    %p165 = scmp.eq.s32.totalorder %s20, 0
    %p166 = por %p164, %p165
    %s168 = sadd.s32 %s167, 1
    %p171 = scmp.eq.s32.totalorder %s14, 1
    %p172 = scmp.ne.s32.totalorder %s167, %s169
    %p173 = scmp.eq.s32.totalorder %s14, 0
    %p174 = por %p172, %p173
    %p175 = scmp.ne.s32.totalorder %s167, %s169
    %p176 = scmp.eq.s32.totalorder %s19, 1
    %p177 = por %p175, %p176
    %p178 = scmp.ne.s32.totalorder %s169, %s170
    %p179 = scmp.eq.s32.totalorder %s19, 0
    %p180 = por %p178, %p179
    %p181 = scmp.ne.s32.totalorder %s169, %s170
    %p182 = scmp.eq.s32.totalorder %s20, 1
    %p183 = por %p181, %p182
    %p185 = scmp.ne.s32.totalorder %s170, %s184
    %p186 = scmp.eq.s32.totalorder %s20, 0
    %p187 = por %p185, %p186
    %s189 = sadd.s32 %s188, 1
    %p192 = scmp.eq.s32.totalorder %s14, 1
    %p193 = scmp.ne.s32.totalorder %s188, %s190
    %p194 = scmp.eq.s32.totalorder %s14, 0
    %p195 = por %p193, %p194
    %p196 = scmp.ne.s32.totalorder %s188, %s190
    %p197 = scmp.eq.s32.totalorder %s19, 1
    %p198 = por %p196, %p197
    %p199 = scmp.ne.s32.totalorder %s190, %s191
    %p200 = scmp.eq.s32.totalorder %s19, 0
    %p201 = por %p199, %p200
    %p202 = scmp.ne.s32.totalorder %s190, %s191
    %p203 = scmp.eq.s32.totalorder %s20, 1
    %p204 = por %p202, %p203
    %p206 = scmp.ne.s32.totalorder %s191, %s205
    %p207 = scmp.eq.s32.totalorder %s20, 0
    %p208 = por %p206, %p207
    %s209 = ssub.s32 %s21, %s33
    %s210 = ssub.s32 %s22, %s29
    %s211 = sor.u32 %s209, %s210
    %p212 = scmp.eq.s32.totalorder %s211, 0
    %s214 = sadd.s32 %s213, 1
    %s215 = scalar_select %p212, %s213, %s214
    %p218 = pneg %p212
    %p219 = scmp.eq.s32.totalorder %s14, 1
    %p220 = por %p218, %p219
    %p221 = scmp.ne.s32.totalorder %s213, %s216
    %p222 = scmp.eq.s32.totalorder %s14, 0
    %p223 = por %p221, %p222
    %p224 = scmp.ne.s32.totalorder %s213, %s216
    %p225 = scmp.eq.s32.totalorder %s19, 1
    %p226 = por %p224, %p225
    %p227 = scmp.ne.s32.totalorder %s216, %s217
    %p228 = scmp.eq.s32.totalorder %s19, 0
    %p229 = por %p227, %p228
    %p230 = scmp.ne.s32.totalorder %s216, %s217
    %p231 = scmp.eq.s32.totalorder %s20, 1
    %p232 = por %p230, %p231
    %p234 = scmp.ne.s32.totalorder %s217, %s233
    %p235 = scmp.eq.s32.totalorder %s20, 0
    %p236 = por %p234, %p235
    %p237 = scmp.le.s32.totalorder 1, %s14
    %p238 = scmp.lt.s32.totalorder %s14, 3
    %p239 = pnand %p237, %p238
    %p240 = pneg %p239
    // Predicated region
    $region9: #{transformer_layer.8} parent=5 // pred_check
      _
    $region10: #{transformer_layer.8} parent=5 // pred_check_branch
      %242 = sbr.rel (%p239) target = $region12
    $region11: #{transformer_layer.8} parent=5 // pred_region
      %s243 = ssub.s32 %s14, 1
      // Predicated region
      $region13: #{transformer_layer.8} parent=11 // pred_check
        %p244 = pneg %p75
      $region14: #{transformer_layer.8} parent=11 // pred_check_branch
        %246 = sbr.rel (%p244) target = $region16
      $region15: #{transformer_layer.8} parent=11 // pred_region
        _
      $region16: #{transformer_layer.8} parent=11 // pred_fallthru
        _
      // Predicated region
      $region17: #{transformer_layer.8} parent=11 // pred_check
        %p247 = pneg %p96
      $region18: #{transformer_layer.8} parent=11 // pred_check_branch
        %249 = sbr.rel (%p247) target = $region20
      $region19: #{transformer_layer.8} parent=11 // pred_region
        _
      $region20: #{transformer_layer.8} parent=11 // pred_fallthru
        _
      // Predicated region
      $region21: #{transformer_layer.8} parent=11 // pred_check
        %p250 = pneg %p117
      $region22: #{transformer_layer.8} parent=11 // pred_check_branch
        %252 = sbr.rel (%p250) target = $region24
      $region23: #{transformer_layer.8} parent=11 // pred_region
        _
      $region24: #{transformer_layer.8} parent=11 // pred_fallthru
        _
      // Predicated region
      $region25: #{transformer_layer.8} parent=11 // pred_check
        %p253 = pneg %p138
      $region26: #{transformer_layer.8} parent=11 // pred_check_branch
        %255 = sbr.rel (%p253) target = $region28
      $region27: #{transformer_layer.8} parent=11 // pred_region
        _
      $region28: #{transformer_layer.8} parent=11 // pred_fallthru
        _
      // Predicated region
      $region29: #{transformer_layer.8} parent=11 // pred_check
        %p256 = pneg %p159
      $region30: #{transformer_layer.8} parent=11 // pred_check_branch
        %258 = sbr.rel (%p256) target = $region32
      $region31: #{transformer_layer.8} parent=11 // pred_region
        _
      $region32: #{transformer_layer.8} parent=11 // pred_fallthru
        _
      // Predicated region
      $region33: #{transformer_layer.8} parent=11 // pred_check
        %p259 = pneg %p180
      $region34: #{transformer_layer.8} parent=11 // pred_check_branch
        %261 = sbr.rel (%p259) target = $region36
      $region35: #{transformer_layer.8} parent=11 // pred_region
        _
      $region36: #{transformer_layer.8} parent=11 // pred_fallthru
        _
      // Predicated region
      $region37: #{transformer_layer.8} parent=11 // pred_check
        %p262 = pneg %p201
      $region38: #{transformer_layer.8} parent=11 // pred_check_branch
        %264 = sbr.rel (%p262) target = $region40
      $region39: #{transformer_layer.8} parent=11 // pred_region
        _
      $region40: #{transformer_layer.8} parent=11 // pred_fallthru
        _
    $region12: #{transformer_layer.8} parent=5 // pred_fallthru
      _
    %p265 = scmp.lt.s32.totalorder %s14, 2
    // Predicated region
    $region41: #{transformer_layer.8} parent=5 // pred_check
      %p266 = pneg %p265
    $region42: #{transformer_layer.8} parent=5 // pred_check_branch
      %268 = sbr.rel (%p266) target = $region44
    $region43: #{transformer_layer.8} parent=5 // pred_region
      // Predicated region
      $region45: #{transformer_layer.8} parent=43 // pred_check
        %p269 = pneg %p48
      $region46: #{transformer_layer.8} parent=43 // pred_check_branch
        %271 = sbr.rel (%p269) target = $region48
      $region47: #{transformer_layer.8} parent=43 // pred_region
        %p272 = scmp.lt.s32.totalorder %s21, 1
        %s273 = scalar_select %p272, %s21, 1
        %p274 = scmp.lt.s32.totalorder %s22, 0
        %s275 = scalar_select %p274, %s22, 0
        %s276 = sadd.s32 %s275, %s273
        %s277 = smul.addr %s276, 4
        %s278 = scalar_lea.vmem %s0, %s277
      $region48: #{transformer_layer.8} parent=43 // pred_fallthru
        _
    $region44: #{transformer_layer.8} parent=5 // pred_fallthru
      _
    %p279 = scmp.le.s32.totalorder 1, %s14
    %p280 = scmp.lt.s32.totalorder %s14, 3
    %p281 = pnand %p279, %p280
    %p282 = pneg %p281
    // Predicated region
    $region49: #{transformer_layer.8} parent=5 // pred_check
      _
    $region50: #{transformer_layer.8} parent=5 // pred_check_branch
      %284 = sbr.rel (%p281) target = $region52
    $region51: #{transformer_layer.8} parent=5 // pred_region
      %s285 = ssub.s32 %s14, 1
      %p286 = scmp.lt.s32.totalorder %s23, 1
      %s287 = scalar_select %p286, %s23, 1
      %p288 = scmp.lt.s32.totalorder %s24, 0
      %s289 = scalar_select %p288, %s24, 0
      %s290 = sadd.s32 %s289, %s287
      %s291 = smul.addr %s290, 4
      %s292 = scalar_lea.vmem %s0, %s291
      %p293 = pneg %p54
      %p294 = pneg %p51
      %p295 = pneg %p75
      %p296 = pneg %p72
      %p297 = pneg %p96
      %p298 = pneg %p93
      %p299 = pneg %p117
      %p300 = pneg %p114
      %p301 = pneg %p138
      %p302 = pneg %p135
      %p303 = pneg %p159
      %p304 = pneg %p156
      %p305 = pneg %p180
      %p306 = pneg %p177
      %p307 = pneg %p201
      %p308 = pneg %p198
      %p309 = pneg %p229
      %p310 = pneg %p226
      %p311 = scmp.lt.s32.totalorder %s23, 1
      %s312 = scalar_select %p311, %s23, 1
      %p313 = scmp.lt.s32.totalorder %s24, 0
      %s314 = scalar_select %p313, %s24, 0
      %s315 = sadd.s32 %s314, %s312
      %s316 = smul.addr %s315, 4
      %s317 = scalar_lea.vmem %s8, %s316
      %p318 = scmp.lt.s32.totalorder %s23, 1
      %s319 = scalar_select %p318, %s23, 1
      %p320 = scmp.lt.s32.totalorder %s24, 0
      %s321 = scalar_select %p320, %s24, 0
      %s322 = sadd.s32 %s321, %s319
      %s323 = smul.addr %s322, 4
      %s324 = scalar_lea.vmem %s0, %s323
      %p325 = scmp.lt.s32.totalorder %s23, 1
      %s326 = scalar_select %p325, %s23, 1
      %p327 = scmp.lt.s32.totalorder %s24, 0
      %s328 = scalar_select %p327, %s24, 0
      %s329 = sadd.s32 %s328, %s326
      %s330 = smul.addr %s329, 4
      %s331 = scalar_lea.vmem %s8, %s330
      %v333 = vld [vmem:[%s324] sm:$0xf]
      %v334 = vunpack.c.l.bf16 %v333
      %v335 = vld [vmem:[%s1] sm:$0x1]
      %v336 = vmul.f32 %v334, %v334
      %vm337 = vcmask 261120
      %v338 = vsel %vm337, %v336, 0.0
      %339 = vadd.xlane.f32.xlu0 %v338
      %v340 = vpop.xlane.xlu0 %339
      %v341 = vrcp.pop 32.0
      %v342 = vmul.f32 %v340, %v341
      %v343 = vadd.f32 %v342, 1.1920929e-07
      %v344 = vrsqrt.pop %v343
      %v345 = vmul.f32 %v334, %v344
      %v347 = vlaneseq
      %v348 = vshrl.u32 %v347, 7
      %v349 = vsub.s32 0, %v348
      %v350 = vrot.slane %v335, %v349
      %v352 = vmul.f32 %v345, %v350
      %v353 = vpack.c.bf16 %v352, %v352
      %v354 = vld [vmem:[%s2] sm:$0xf]
      %v355 = vld [vmem:[%s2 + $0x4] sm:$0xf]
      %v356 = vld [vmem:[%s2 + $0x8] sm:$0xf]
      %v357 = vld [vmem:[%s2 + $0xc] sm:$0xf]
      %v358 = vld [vmem:[%s3] sm:$0x1]
      %v360 = vlaneseq
      %v361 = vshrl.u32 %v360, 7
      %v362 = vsub.s32 0, %v361
      %v363 = vrot.slane %v358, %v362
      %v369 = vunpack.c.l.b16 %v354
      %v370 = vunpack.c.l.b16 %v355
      %v371 = vunpack.c.l.b16 %v356
      %v372 = vunpack.c.l.b16 %v357
      %v373 = vpack.c.b16 %v370, %v369
      %v374 = vpack.c.b16 %v372, %v371
      %v378 = vsel %vm337, %v353, 0
      %380 = vmatprep.subr.bf16.mxu0 0
      %381 = vmatpush1.bf16.msra.mxu0 %v373
      %382 = vmatprep.subr.bf16.mxu0 0
      %383 = vmatpush1.bf16.msra.mxu0 %v374
      %384 = vmatprep.subr.bf16.mxu0 0
      %385 = vmatpush1.bf16.msra.mxu0 0
      %386 = vmatprep.subr.bf16.mxu0 0
      %387 = vmatpush1.bf16.msra.mxu0 0
      %388 = vmatprep.subr.bf16.mxu0 0
      %389 = vmatpush1.bf16.msra.mxu0 0
      %390 = vmatprep.subr.bf16.mxu0 0
      %391 = vmatpush1.bf16.msra.mxu0 0
      %392 = vmatprep.subr.bf16.mxu0 0
      %393 = vmatpush1.bf16.msra.mxu0 0
      %394 = vmatprep.subr.bf16.mxu0 0
      %395 = vmatpush1.bf16.msra.mxu0 0
      %396 = vmatprep.subr.bf16.mxu0 0
      %397 = vmatpush1.bf16.msra.mxu0 0
      %398 = vmatprep.subr.bf16.mxu0 0
      %399 = vmatpush1.bf16.msra.mxu0 0
      %400 = vmatprep.subr.bf16.mxu0 0
      %401 = vmatpush1.bf16.msra.mxu0 0
      %402 = vmatprep.subr.bf16.mxu0 0
      %403 = vmatpush1.bf16.msra.mxu0 0
      %404 = vmatprep.subr.bf16.mxu0 0
      %405 = vmatpush1.bf16.msra.mxu0 0
      %406 = vmatprep.subr.bf16.mxu0 0
      %407 = vmatpush1.bf16.msra.mxu0 0
      %408 = vmatprep.subr.bf16.mxu0 0
      %409 = vmatpush1.bf16.msra.mxu0 0
      %410 = vmatprep.subr.bf16.mxu0 0
      %411 = vmatpush1.bf16.msra.mxu0 0
      %412 = vmatprep.mubr.bf16.mxu0 0
      %413 = vmatmul.mubr.bf16.gmra.mrb[0].mxu0 %v378
      %v414 = vpop.f32.mrb[0].mxu0
      %v415 = vadd.f32 %v363, %v414
      %v416 = vpop.f32.mrb[0].mxu0
      %v417 = vpop.f32.mrb[0].mxu0
      %v418 = vpop.f32.mrb[0].mxu0
      %419 = vdwg.mxu0
      %v420 = vld [vmem:[%s4] sm:$0xf]
      %v421 = vld [vmem:[%s4 + $0x4] sm:$0xf]
      %v422 = vld [vmem:[%s4 + $0x8] sm:$0xf]
      %v423 = vld [vmem:[%s4 + $0xc] sm:$0xf]
      %v424 = vld [vmem:[%s5] sm:$0x1]
      %v426 = vlaneseq
      %v427 = vshrl.u32 %v426, 7
      %v428 = vsub.s32 0, %v427
      %v429 = vrot.slane %v424, %v428
      %v435 = vunpack.c.l.b16 %v420
      %v436 = vunpack.c.l.b16 %v421
      %v437 = vunpack.c.l.b16 %v422
      %v438 = vunpack.c.l.b16 %v423
      %v439 = vpack.c.b16 %v436, %v435
      %v440 = vpack.c.b16 %v438, %v437
      %443 = vmatprep.subr.bf16.mxu0 0
      %444 = vmatpush1.bf16.msra.mxu0 %v439
      %445 = vmatprep.subr.bf16.mxu0 0
      %446 = vmatpush1.bf16.msra.mxu0 %v440
      %447 = vmatprep.subr.bf16.mxu0 0
      %448 = vmatpush1.bf16.msra.mxu0 0
      %449 = vmatprep.subr.bf16.mxu0 0
      %450 = vmatpush1.bf16.msra.mxu0 0
      %451 = vmatprep.subr.bf16.mxu0 0
      %452 = vmatpush1.bf16.msra.mxu0 0
      %453 = vmatprep.subr.bf16.mxu0 0
      %454 = vmatpush1.bf16.msra.mxu0 0
      %455 = vmatprep.subr.bf16.mxu0 0
      %456 = vmatpush1.bf16.msra.mxu0 0
      %457 = vmatprep.subr.bf16.mxu0 0
      %458 = vmatpush1.bf16.msra.mxu0 0
      %459 = vmatprep.subr.bf16.mxu0 0
      %460 = vmatpush1.bf16.msra.mxu0 0
      %461 = vmatprep.subr.bf16.mxu0 0
      %462 = vmatpush1.bf16.msra.mxu0 0
      %463 = vmatprep.subr.bf16.mxu0 0
      %464 = vmatpush1.bf16.msra.mxu0 0
      %465 = vmatprep.subr.bf16.mxu0 0
      %466 = vmatpush1.bf16.msra.mxu0 0
      %467 = vmatprep.subr.bf16.mxu0 0
      %468 = vmatpush1.bf16.msra.mxu0 0
      %469 = vmatprep.subr.bf16.mxu0 0
      %470 = vmatpush1.bf16.msra.mxu0 0
      %471 = vmatprep.subr.bf16.mxu0 0
      %472 = vmatpush1.bf16.msra.mxu0 0
      %473 = vmatprep.subr.bf16.mxu0 0
      %474 = vmatpush1.bf16.msra.mxu0 0
      %475 = vmatprep.mubr.bf16.mxu0 0
      %476 = vmatmul.mubr.bf16.gmra.mrb[0].mxu0 %v378
      %v477 = vpop.f32.mrb[0].mxu0
      %v478 = vadd.f32 %v429, %v477
      %v479 = vpop.f32.mrb[0].mxu0
      %v480 = vpop.f32.mrb[0].mxu0
      %v481 = vpop.f32.mrb[0].mxu0
      %482 = vdwg.mxu0
      %vm483 = vcmp.gt.f32.partialorder %v415, 20.0
      %v484 = vmin.f32 %v415, 20.0
      %v485 = vmul.f32 %v484, 1.442695
      %v486 = vpow.pop %v485
      %v487 = vadd.f32 %v486, 1.0
      %v488 = vlog2.pop %v487
      %v489 = vmul.f32 %v488, 0.6931472
      %v490 = vmul.f32 -0.5, %v486
      %v491 = vadd.f32 %v490, 1.0
      %v492 = vmul.f32 %v491, %v486
      %v493 = vand.u32 2147483647, %v486
      %vm494 = vcmp.lt.f32.partialorder %v493, 0.0004427343
      %v495 = vsel %vm494, %v492, %v489
      %v496 = vsel %vm483, %v415, %v495
      %v497 = vtanh.pop %v496
      %v498 = vmul.f32 %v415, %v497
      %v499 = vmul.f32 %v498, %v478
      %v500 = vpack.c.bf16 %v499, %v499
      %v501 = vld [vmem:[%s6] sm:$0xf]
      %v502 = vld [vmem:[%s6 + $0x4] sm:$0xf]
      %v503 = vld [vmem:[%s6 + $0x8] sm:$0xf]
      %v504 = vld [vmem:[%s6 + $0xc] sm:$0xf]
      %v505 = vld [vmem:[%s6 + $0x10] sm:$0xf]
      %v506 = vld [vmem:[%s6 + $0x14] sm:$0xf]
      %v507 = vld [vmem:[%s6 + $0x18] sm:$0xf]
      %v508 = vld [vmem:[%s6 + $0x1c] sm:$0xf]
      %v509 = vld [vmem:[%s7] sm:$0x1]
      %v511 = vlaneseq
      %v512 = vshrl.u32 %v511, 7
      %v513 = vsub.s32 0, %v512
      %v514 = vrot.slane %v509, %v513
      %v524 = vunpack.c.l.b16 %v501
      %v525 = vunpack.c.l.b16 %v502
      %v526 = vunpack.c.l.b16 %v503
      %v527 = vunpack.c.l.b16 %v504
      %v528 = vunpack.c.l.b16 %v505
      %v529 = vunpack.c.l.b16 %v506
      %v530 = vunpack.c.l.b16 %v507
      %v531 = vunpack.c.l.b16 %v508
      %v532 = vpack.c.b16 %v525, %v524
      %v533 = vpack.c.b16 %v527, %v526
      %v534 = vpack.c.b16 %v529, %v528
      %v535 = vpack.c.b16 %v531, %v530
      %vm540 = vcmask 523264
      %v542 = vsel %vm540, %v500, 0
      %544 = vmatprep.subr.bf16.mxu0 0
      %545 = vmatpush1.bf16.msra.mxu0 %v532
      %546 = vmatprep.subr.bf16.mxu0 0
      %547 = vmatpush1.bf16.msra.mxu0 %v533
      %548 = vmatprep.subr.bf16.mxu0 0
      %549 = vmatpush1.bf16.msra.mxu0 %v534
      %550 = vmatprep.subr.bf16.mxu0 0
      %551 = vmatpush1.bf16.msra.mxu0 %v535
      %552 = vmatprep.subr.bf16.mxu0 0
      %553 = vmatpush1.bf16.msra.mxu0 0
      %554 = vmatprep.subr.bf16.mxu0 0
      %555 = vmatpush1.bf16.msra.mxu0 0
      %556 = vmatprep.subr.bf16.mxu0 0
      %557 = vmatpush1.bf16.msra.mxu0 0
      %558 = vmatprep.subr.bf16.mxu0 0
      %559 = vmatpush1.bf16.msra.mxu0 0
      %560 = vmatprep.subr.bf16.mxu0 0
      %561 = vmatpush1.bf16.msra.mxu0 0
      %562 = vmatprep.subr.bf16.mxu0 0
      %563 = vmatpush1.bf16.msra.mxu0 0
      %564 = vmatprep.subr.bf16.mxu0 0
      %565 = vmatpush1.bf16.msra.mxu0 0
      %566 = vmatprep.subr.bf16.mxu0 0
      %567 = vmatpush1.bf16.msra.mxu0 0
      %568 = vmatprep.subr.bf16.mxu0 0
      %569 = vmatpush1.bf16.msra.mxu0 0
      %570 = vmatprep.subr.bf16.mxu0 0
      %571 = vmatpush1.bf16.msra.mxu0 0
      %572 = vmatprep.subr.bf16.mxu0 0
      %573 = vmatpush1.bf16.msra.mxu0 0
      %574 = vmatprep.subr.bf16.mxu0 0
      %575 = vmatpush1.bf16.msra.mxu0 0
      %576 = vmatprep.mubr.bf16.mxu0 0
      %577 = vmatmul.mubr.bf16.gmra.mrb[0].mxu0 %v542
      %v578 = vpop.f32.mrb[0].mxu0
      %v579 = vadd.f32 %v514, %v578
      %v580 = vpop.f32.mrb[0].mxu0
      %v581 = vpop.f32.mrb[0].mxu0
      %v582 = vpop.f32.mrb[0].mxu0
      %583 = vdwg.mxu0
      %v584 = vadd.f32 %v334, %v579
      %v585 = vpack.c.bf16 %v584, %v584
      %vm586 = vcmask 257024
      %587 = vst.msk [vmem:[%s331] sm:$0xf] %vm586, %v585
      %p588 = scmp.lt.s32.totalorder %s23, 1
      %s589 = scalar_select %p588, %s23, 1
      %p590 = scmp.lt.s32.totalorder %s24, 0
      %s591 = scalar_select %p590, %s24, 0
      %s592 = sadd.s32 %s591, %s589
      %s593 = smul.addr %s592, 4
      %s594 = scalar_lea.vmem %s8, %s593
      // Predicated region
      $region53: #{transformer_layer.8} parent=51 // pred_check
        %p595 = pneg %p226
      $region54: #{transformer_layer.8} parent=51 // pred_check_branch
        %597 = sbr.rel (%p595) target = $region56
      $region55: #{transformer_layer.8} parent=51 // pred_region
        _
      $region56: #{transformer_layer.8} parent=51 // pred_fallthru
        _
    $region52: #{transformer_layer.8} parent=5 // pred_fallthru
      _
    %p598 = scmp.le.s32.totalorder 2, %s14
    // Predicated region
    $region57: #{transformer_layer.8} parent=5 // pred_check
      %p599 = pneg %p598
    $region58: #{transformer_layer.8} parent=5 // pred_check_branch
      %601 = sbr.rel (%p599) target = $region60
    $region59: #{transformer_layer.8} parent=5 // pred_region
      %s602 = ssub.s32 %s14, 2
      // Predicated region
      $region61: #{transformer_layer.8} parent=59 // pred_check
        %p603 = pneg %p232
      $region62: #{transformer_layer.8} parent=59 // pred_check_branch
        %605 = sbr.rel (%p603) target = $region64
      $region63: #{transformer_layer.8} parent=59 // pred_region
        %p606 = scmp.lt.s32.totalorder %s25, 1
        %s607 = scalar_select %p606, %s25, 1
        %p608 = scmp.lt.s32.totalorder %s26, 0
        %s609 = scalar_select %p608, %s26, 0
        %s610 = sadd.s32 %s609, %s607
        %s611 = smul.addr %s610, 4
        %s612 = scalar_lea.vmem %s8, %s611
      $region64: #{transformer_layer.8} parent=59 // pred_fallthru
        _
    $region60: #{transformer_layer.8} parent=5 // pred_fallthru
      _
  $region6: #{transformer_layer.8} parent=0 // loop_footer
    %s18 = sadd.s32 1, %s14
  $region7: #{transformer_layer.8} parent=0 // loop_footer_branch
    %13 = sbr.rel target = $region3
  $region8: #{transformer_layer.8} parent=0 // loop_exit
    _

</llo_original>
